<compile_context>
chip_gen: v7x
topology: tpu7x:2x2x1
jax: 0.10.0
libtpu: 0.0.40
codegen_flags: <defaults>
</compile_context>

<pallas_src>
import functools
import math

import jax
import jax.numpy as jnp
from jax import lax
from jax.experimental import pallas as pl
from jax.experimental.pallas import tpu as pltpu

LN_EPS = 1e-5


def fused_block_kernel(x_ref, p_ref, o_ref, *, N, D, H, M, T):
    hd = D // H

    # ---- static slices of the packed, lane-dense parameter buffer ----------
    r = 0
    w_qkv = p_ref[r:r + D, 0:3 * D]          # (D, 3D); q-scale already folded
    r += D
    w_o = p_ref[r:r + D, 0:D]                # (D, D)
    r += D
    w_1 = p_ref[r:r + D, 0:M]                # (D, M)
    r += D
    w_2 = p_ref[r:r + M, 0:D]                # (M, D)
    r += M
    ln1_g = p_ref[r:r + 1, 0:D]; r += 1      # (1, D) -- implicit broadcast
    ln1_b = p_ref[r:r + 1, 0:D]; r += 1
    b_qkv = p_ref[r:r + 1, 0:3 * D]; r += 1  # (1, 3D)
    b_o = p_ref[r:r + 1, 0:D]; r += 1
    ln2_g = p_ref[r:r + 1, 0:D]; r += 1
    ln2_b = p_ref[r:r + 1, 0:D]; r += 1
    b_1 = p_ref[r:r + 1, 0:M]; r += 1        # (1, M)
    b_2 = p_ref[r:r + 1, 0:D]; r += 1

    def layernorm(x, g, b):
        mu = jnp.mean(x, axis=-1, keepdims=True)
        var = jnp.mean((x - mu) ** 2, axis=-1, keepdims=True)
        return (x - mu) * lax.rsqrt(var + LN_EPS) * g + b

    def attn_step(_, src):                   # src: (N, D), one batch element
        xn = layernorm(src, ln1_g, ln1_b)
        # single fused QKV matmul; 1/sqrt(hd) already folded into q columns
        qkv = jnp.dot(xn, w_qkv, preferred_element_type=jnp.float32) + b_qkv
        heads = []
        for h in range(H):                   # static loop; hd-lane value slices
            q = qkv[:, h * hd:(h + 1) * hd]                   # (N, hd)
            k = qkv[:, D + h * hd:D + (h + 1) * hd]
            v = qkv[:, 2 * D + h * hd:2 * D + (h + 1) * hd]
            s = jnp.einsum('nd,md->nm', q, k,
                           preferred_element_type=jnp.float32)  # (N, N)
            s = s - jnp.max(s, axis=-1, keepdims=True)
            p = jnp.exp(s)
            # exact reciprocal (approx=False) to match torch.softmax closely
            p = p * pl.reciprocal(jnp.sum(p, axis=-1, keepdims=True),
                                  approx=False)
            heads.append(jnp.dot(p, v, preferred_element_type=jnp.float32))
        attn = jnp.concatenate(heads, axis=-1)                  # (N, H*hd)
        proj = jnp.dot(attn, w_o, preferred_element_type=jnp.float32) + b_o
        return src + proj                                       # residual

    src = lax.fori_loop(0, T, attn_step, x_ref[...], unroll=True)

    # ---- MLP tail -----------------------------------------------------------
    xn2 = layernorm(src, ln2_g, ln2_b)
    h1 = jnp.dot(xn2, w_1, preferred_element_type=jnp.float32) + b_1
    # tanh-approximate GELU (EUP tanh; exact erf is a long VPU polynomial)
    c0 = math.sqrt(2.0 / math.pi)
    h1 = 0.5 * h1 * (1.0 + jnp.tanh(c0 * (h1 + 0.044715 * h1 * h1 * h1)))
    y = jnp.dot(h1, w_2, preferred_element_type=jnp.float32) + b_2
    o_ref[...] = src + y                       # residual; dropout p=0 -> id


def _pack_params(params, num_heads):
    """Pack all weights/biases into one lane-dense (rows, LANES) f32 buffer."""
    D = params["w_qkv"].shape[0]
    M = params["w_1"].shape[1]
    hd = D // num_heads
    scale = 1.0 / math.sqrt(hd)
    LANES = 128 * ((max(3 * D, M, D) + 127) // 128)

    # fold the attention score scale into the Q columns of the fused QKV proj
    q_scale = jnp.concatenate([jnp.full((D,), scale, jnp.float32),
                               jnp.ones((2 * D,), jnp.float32)])
    w_qkv = params["w_qkv"] * q_scale[None, :]
    b_qkv = params["b_qkv"] * q_scale[None, :]

    def pad_cols(a):
        a = jnp.asarray(a, jnp.float32)
        if a.ndim == 1:
            a = a[None, :]
        return jnp.pad(a, ((0, 0), (0, LANES - a.shape[1])))

    pieces = [
        pad_cols(w_qkv),            # D rows
        pad_cols(params["w_o"]),    # D rows
        pad_cols(params["w_1"]),    # D rows
        pad_cols(params["w_2"]),    # M rows
        pad_cols(params["ln1_g"]), pad_cols(params["ln1_b"]),
        pad_cols(b_qkv), pad_cols(params["b_o"]),
        pad_cols(params["ln2_g"]), pad_cols(params["ln2_b"]),
        pad_cols(params["b_1"]), pad_cols(params["b_2"]),
    ]
    packed = jnp.concatenate(pieces, axis=0)
    R = packed.shape[0]
    Rpad = 8 * ((R + 7) // 8)
    if Rpad != R:
        packed = jnp.pad(packed, ((0, Rpad - R), (0, 0)))
    return packed


def _make_fused_call(B, N, D, H, M, T, R, LANES):
    kern = functools.partial(fused_block_kernel, N=N, D=D, H=H, M=M, T=T)
    return pl.pallas_call(
        kern,
        out_shape=jax.ShapeDtypeStruct((B * N, D), jnp.float32),
        grid=(B,),
        in_specs=[
            pl.BlockSpec((N, D), lambda b: (b, 0)),      # per-batch activation
            pl.BlockSpec((R, LANES), lambda b: (0, 0)),  # packed params (resident)
        ],
        out_specs=pl.BlockSpec((N, D), lambda b: (b, 0)),
        compiler_params=pltpu.CompilerParams(
            dimension_semantics=("parallel",),           # engages both TCs on v7x
            vmem_limit_bytes=16 * 1024 * 1024),
    )


def init_params(key, embed_dim, mlp_dim):
    D, M = embed_dim, mlp_dim
    ks = jax.random.split(key, 4)
    s = lambda fan_in: 1.0 / math.sqrt(fan_in)
    return dict(
        ln1_g=jnp.ones((1, D), jnp.float32),
        ln1_b=jnp.zeros((1, D), jnp.float32),
        w_qkv=jax.random.normal(ks[0], (D, 3 * D), jnp.float32) * s(D),
        b_qkv=jnp.zeros((1, 3 * D), jnp.float32),
        w_o=jax.random.normal(ks[1], (D, D), jnp.float32) * s(D),
        b_o=jnp.zeros((1, D), jnp.float32),
        ln2_g=jnp.ones((1, D), jnp.float32),
        ln2_b=jnp.zeros((1, D), jnp.float32),
        w_1=jax.random.normal(ks[2], (D, M), jnp.float32) * s(D),
        b_1=jnp.zeros((1, M), jnp.float32),
        w_2=jax.random.normal(ks[3], (M, D), jnp.float32) * s(M),
        b_2=jnp.zeros((1, D), jnp.float32),
    )


@functools.partial(jax.jit, static_argnames=("T", "num_heads"))
def transformer_block_forward(src, params, T, num_heads):
    B, N, D = src.shape
    M = params["w_1"].shape[1]
    # NOTE: in a real deployment the packed buffer would be built once outside
    # the per-step jit; here it is a handful of tiny XLA pad/concats.
    packed = _pack_params(params, num_heads)
    R, LANES = packed.shape
    call = _make_fused_call(B, N, D, num_heads, M, T, R, LANES)
    out = call(src.reshape(B * N, D), packed)   # free row-major reshapes
    return out.reshape(B, N, D)


if __name__ == "__main__":
    B, N = 2, 16          # batch, sequence length (e.g. hw = (4, 4))
    embed_dim = 32
    num_heads = 4
    mlp_dim = 64
    T = 3

    key = jax.random.PRNGKey(0)
    k_x, k_p = jax.random.split(key)
    src = jax.random.normal(k_x, (B, N, embed_dim), jnp.float32)
    params = init_params(k_p, embed_dim, mlp_dim)

    out = transformer_block_forward(src, params, T=T, num_heads=num_heads)
    jax.block_until_ready(out)
    assert out.shape == (B, N, embed_dim) and out.dtype == jnp.float32
    assert bool(jnp.all(jnp.isfinite(out)))
    print("KERNEL_OK")
</pallas_src>

<mosaic_0001>
module attributes {stable_mosaic.version = 11 : i64} {
  func.func @fused_block_kernel(%arg0: i32, %arg1: memref<16x32xf32, #tpu.memory_space<vmem>>, %arg2: memref<168x128xf32, #tpu.memory_space<vmem>>, %arg3: memref<16x32xf32, #tpu.memory_space<vmem>>) attributes {dimension_semantics = [#tpu.dimension_semantics<parallel>], iteration_bounds = array<i64: 2>, scalar_prefetch = 0 : i64, scratch_operands = 0 : i64, tpu.core_type = #tpu.core_type<tc>, window_params = [{transform_indices = @transform_0, window_bounds = array<i64: 16, 32>}, {pipeline_mode = #tpu.pipeline_mode<synchronous>, transform_indices = @transform_1, window_bounds = array<i64: 168, 128>}, {transform_indices = @transform_2, window_bounds = array<i64: 16, 32>}]} {
    %c0 = arith.constant 0 : index
    %c0_0 = arith.constant 0 : index
    %0 = vector.load %arg2[%c0, %c0_0] : memref<168x128xf32, #tpu.memory_space<vmem>>, vector<32x96xf32>
    %c32 = arith.constant 32 : index
    %c0_1 = arith.constant 0 : index
    %1 = vector.load %arg2[%c32, %c0_1] : memref<168x128xf32, #tpu.memory_space<vmem>>, vector<32x32xf32>
    %c64 = arith.constant 64 : index
    %c0_2 = arith.constant 0 : index
    %2 = vector.load %arg2[%c64, %c0_2] : memref<168x128xf32, #tpu.memory_space<vmem>>, vector<32x64xf32>
    %c96 = arith.constant 96 : index
    %c0_3 = arith.constant 0 : index
    %3 = vector.load %arg2[%c96, %c0_3] : memref<168x128xf32, #tpu.memory_space<vmem>>, vector<64x32xf32>
    %c160 = arith.constant 160 : index
    %c0_4 = arith.constant 0 : index
    %4 = vector.load %arg2[%c160, %c0_4] : memref<168x128xf32, #tpu.memory_space<vmem>>, vector<1x32xf32>
    %c161 = arith.constant 161 : index
    %c0_5 = arith.constant 0 : index
    %5 = vector.load %arg2[%c161, %c0_5] : memref<168x128xf32, #tpu.memory_space<vmem>>, vector<1x32xf32>
    %c162 = arith.constant 162 : index
    %c0_6 = arith.constant 0 : index
    %6 = vector.load %arg2[%c162, %c0_6] : memref<168x128xf32, #tpu.memory_space<vmem>>, vector<1x96xf32>
    %c163 = arith.constant 163 : index
    %c0_7 = arith.constant 0 : index
    %7 = vector.load %arg2[%c163, %c0_7] : memref<168x128xf32, #tpu.memory_space<vmem>>, vector<1x32xf32>
    %c164 = arith.constant 164 : index
    %c0_8 = arith.constant 0 : index
    %8 = vector.load %arg2[%c164, %c0_8] : memref<168x128xf32, #tpu.memory_space<vmem>>, vector<1x32xf32>
    %c165 = arith.constant 165 : index
    %c0_9 = arith.constant 0 : index
    %9 = vector.load %arg2[%c165, %c0_9] : memref<168x128xf32, #tpu.memory_space<vmem>>, vector<1x32xf32>
    %c166 = arith.constant 166 : index
    %c0_10 = arith.constant 0 : index
    %10 = vector.load %arg2[%c166, %c0_10] : memref<168x128xf32, #tpu.memory_space<vmem>>, vector<1x64xf32>
    %c167 = arith.constant 167 : index
    %c0_11 = arith.constant 0 : index
    %11 = vector.load %arg2[%c167, %c0_11] : memref<168x128xf32, #tpu.memory_space<vmem>>, vector<1x32xf32>
    %c0_12 = arith.constant 0 : index
    %c0_13 = arith.constant 0 : index
    %12 = vector.load %arg1[%c0_12, %c0_13] : memref<16x32xf32, #tpu.memory_space<vmem>>, vector<16x32xf32>
    %c0_i32 = arith.constant 0 : i32
    %cst = arith.constant dense<0.000000e+00> : vector<16xf32>
    %13 = vector.multi_reduction <add>, %12, %cst [1] : vector<16x32xf32> to vector<16xf32>
    %14 = vector.shape_cast %13 : vector<16xf32> to vector<16x1xf32>
    %cst_14 = arith.constant 3.200000e+01 : f32
    %15 = vector.broadcast %cst_14 : f32 to vector<16x1xf32>
    %16 = arith.divf %14, %15 : vector<16x1xf32>
    %17 = vector.broadcast %16 : vector<16x1xf32> to vector<16x32xf32>
    %18 = arith.subf %12, %17 : vector<16x32xf32>
    %19 = arith.mulf %18, %18 : vector<16x32xf32>
    %cst_15 = arith.constant dense<0.000000e+00> : vector<16xf32>
    %20 = vector.multi_reduction <add>, %19, %cst_15 [1] : vector<16x32xf32> to vector<16xf32>
    %21 = vector.shape_cast %20 : vector<16xf32> to vector<16x1xf32>
    %cst_16 = arith.constant 3.200000e+01 : f32
    %22 = vector.broadcast %cst_16 : f32 to vector<16x1xf32>
    %23 = arith.divf %21, %22 : vector<16x1xf32>
    %24 = vector.broadcast %16 : vector<16x1xf32> to vector<16x32xf32>
    %25 = arith.subf %12, %24 : vector<16x32xf32>
    %cst_17 = arith.constant 9.99999974E-6 : f32
    %26 = vector.broadcast %cst_17 : f32 to vector<16x1xf32>
    %27 = arith.addf %23, %26 : vector<16x1xf32>
    %28 = math.rsqrt %27 : vector<16x1xf32>
    %29 = vector.broadcast %28 : vector<16x1xf32> to vector<16x32xf32>
    %30 = arith.mulf %25, %29 : vector<16x32xf32>
    %31 = vector.broadcast %4 : vector<1x32xf32> to vector<16x32xf32>
    %32 = arith.mulf %30, %31 : vector<16x32xf32>
    %33 = vector.broadcast %5 : vector<1x32xf32> to vector<16x32xf32>
    %34 = arith.addf %32, %33 : vector<16x32xf32>
    %cst_18 = arith.constant dense<0.000000e+00> : vector<16x96xf32>
    %35 = tpu.matmul %34, %0, %cst_18 {dimension_numbers = #tpu.dot_dimension_numbers<[1], [0], [0], [1], [0, 0, 1, 1], [], []>} : vector<16x32xf32>, vector<32x96xf32>, vector<16x96xf32> -> vector<16x96xf32>
    %36 = vector.broadcast %6 : vector<1x96xf32> to vector<16x96xf32>
    %37 = arith.addf %35, %36 : vector<16x96xf32>
    %38 = vector.extract_strided_slice %37 {offsets = [0, 0], sizes = [16, 8], strides = [1, 1]} : vector<16x96xf32> to vector<16x8xf32>
    %39 = vector.extract_strided_slice %37 {offsets = [0, 32], sizes = [16, 8], strides = [1, 1]} : vector<16x96xf32> to vector<16x8xf32>
    %40 = vector.extract_strided_slice %37 {offsets = [0, 64], sizes = [16, 8], strides = [1, 1]} : vector<16x96xf32> to vector<16x8xf32>
    "tpu.trace_start"() <{level = 10 : i32, message = "nd,md->nm"}> : () -> ()
    %cst_19 = arith.constant dense<0.000000e+00> : vector<16x16xf32>
    %41 = tpu.matmul %38, %39, %cst_19 {dimension_numbers = #tpu.dot_dimension_numbers<[1], [1], [0], [0], [0, 0, 1, 0], [], []>} : vector<16x8xf32>, vector<16x8xf32>, vector<16x16xf32> -> vector<16x16xf32>
    "tpu.trace_stop"() : () -> ()
    %cst_20 = arith.constant dense<0xFF800000> : vector<16xf32>
    %42 = vector.multi_reduction <maximumf>, %41, %cst_20 [1] : vector<16x16xf32> to vector<16xf32>
    %43 = vector.shape_cast %42 : vector<16xf32> to vector<16x1xf32>
    %44 = vector.broadcast %43 : vector<16x1xf32> to vector<16x16xf32>
    %45 = arith.subf %41, %44 : vector<16x16xf32>
    %46 = math.exp %45 : vector<16x16xf32>
    %cst_21 = arith.constant dense<0.000000e+00> : vector<16xf32>
    %47 = vector.multi_reduction <add>, %46, %cst_21 [1] : vector<16x16xf32> to vector<16xf32>
    %48 = vector.shape_cast %47 : vector<16xf32> to vector<16x1xf32>
    %49 = tpu.reciprocal %48 : vector<16x1xf32> -> vector<16x1xf32>
    %50 = vector.broadcast %49 : vector<16x1xf32> to vector<16x16xf32>
    %51 = arith.mulf %46, %50 : vector<16x16xf32>
    %cst_22 = arith.constant dense<0.000000e+00> : vector<16x8xf32>
    %52 = tpu.matmul %51, %40, %cst_22 {dimension_numbers = #tpu.dot_dimension_numbers<[1], [0], [0], [1], [0, 0, 1, 1], [], []>} : vector<16x16xf32>, vector<16x8xf32>, vector<16x8xf32> -> vector<16x8xf32>
    %53 = vector.extract_strided_slice %37 {offsets = [0, 8], sizes = [16, 8], strides = [1, 1]} : vector<16x96xf32> to vector<16x8xf32>
    %54 = vector.extract_strided_slice %37 {offsets = [0, 40], sizes = [16, 8], strides = [1, 1]} : vector<16x96xf32> to vector<16x8xf32>
    %55 = vector.extract_strided_slice %37 {offsets = [0, 72], sizes = [16, 8], strides = [1, 1]} : vector<16x96xf32> to vector<16x8xf32>
    "tpu.trace_start"() <{level = 10 : i32, message = "nd,md->nm"}> : () -> ()
    %cst_23 = arith.constant dense<0.000000e+00> : vector<16x16xf32>
    %56 = tpu.matmul %53, %54, %cst_23 {dimension_numbers = #tpu.dot_dimension_numbers<[1], [1], [0], [0], [0, 0, 1, 0], [], []>} : vector<16x8xf32>, vector<16x8xf32>, vector<16x16xf32> -> vector<16x16xf32>
    "tpu.trace_stop"() : () -> ()
    %cst_24 = arith.constant dense<0xFF800000> : vector<16xf32>
    %57 = vector.multi_reduction <maximumf>, %56, %cst_24 [1] : vector<16x16xf32> to vector<16xf32>
    %58 = vector.shape_cast %57 : vector<16xf32> to vector<16x1xf32>
    %59 = vector.broadcast %58 : vector<16x1xf32> to vector<16x16xf32>
    %60 = arith.subf %56, %59 : vector<16x16xf32>
    %61 = math.exp %60 : vector<16x16xf32>
    %cst_25 = arith.constant dense<0.000000e+00> : vector<16xf32>
    %62 = vector.multi_reduction <add>, %61, %cst_25 [1] : vector<16x16xf32> to vector<16xf32>
    %63 = vector.shape_cast %62 : vector<16xf32> to vector<16x1xf32>
    %64 = tpu.reciprocal %63 : vector<16x1xf32> -> vector<16x1xf32>
    %65 = vector.broadcast %64 : vector<16x1xf32> to vector<16x16xf32>
    %66 = arith.mulf %61, %65 : vector<16x16xf32>
    %cst_26 = arith.constant dense<0.000000e+00> : vector<16x8xf32>
    %67 = tpu.matmul %66, %55, %cst_26 {dimension_numbers = #tpu.dot_dimension_numbers<[1], [0], [0], [1], [0, 0, 1, 1], [], []>} : vector<16x16xf32>, vector<16x8xf32>, vector<16x8xf32> -> vector<16x8xf32>
    %68 = vector.extract_strided_slice %37 {offsets = [0, 16], sizes = [16, 8], strides = [1, 1]} : vector<16x96xf32> to vector<16x8xf32>
    %69 = vector.extract_strided_slice %37 {offsets = [0, 48], sizes = [16, 8], strides = [1, 1]} : vector<16x96xf32> to vector<16x8xf32>
    %70 = vector.extract_strided_slice %37 {offsets = [0, 80], sizes = [16, 8], strides = [1, 1]} : vector<16x96xf32> to vector<16x8xf32>
    "tpu.trace_start"() <{level = 10 : i32, message = "nd,md->nm"}> : () -> ()
    %cst_27 = arith.constant dense<0.000000e+00> : vector<16x16xf32>
    %71 = tpu.matmul %68, %69, %cst_27 {dimension_numbers = #tpu.dot_dimension_numbers<[1], [1], [0], [0], [0, 0, 1, 0], [], []>} : vector<16x8xf32>, vector<16x8xf32>, vector<16x16xf32> -> vector<16x16xf32>
    "tpu.trace_stop"() : () -> ()
    %cst_28 = arith.constant dense<0xFF800000> : vector<16xf32>
    %72 = vector.multi_reduction <maximumf>, %71, %cst_28 [1] : vector<16x16xf32> to vector<16xf32>
    %73 = vector.shape_cast %72 : vector<16xf32> to vector<16x1xf32>
    %74 = vector.broadcast %73 : vector<16x1xf32> to vector<16x16xf32>
    %75 = arith.subf %71, %74 : vector<16x16xf32>
    %76 = math.exp %75 : vector<16x16xf32>
    %cst_29 = arith.constant dense<0.000000e+00> : vector<16xf32>
    %77 = vector.multi_reduction <add>, %76, %cst_29 [1] : vector<16x16xf32> to vector<16xf32>
    %78 = vector.shape_cast %77 : vector<16xf32> to vector<16x1xf32>
    %79 = tpu.reciprocal %78 : vector<16x1xf32> -> vector<16x1xf32>
    %80 = vector.broadcast %79 : vector<16x1xf32> to vector<16x16xf32>
    %81 = arith.mulf %76, %80 : vector<16x16xf32>
    %cst_30 = arith.constant dense<0.000000e+00> : vector<16x8xf32>
    %82 = tpu.matmul %81, %70, %cst_30 {dimension_numbers = #tpu.dot_dimension_numbers<[1], [0], [0], [1], [0, 0, 1, 1], [], []>} : vector<16x16xf32>, vector<16x8xf32>, vector<16x8xf32> -> vector<16x8xf32>
    %83 = vector.extract_strided_slice %37 {offsets = [0, 24], sizes = [16, 8], strides = [1, 1]} : vector<16x96xf32> to vector<16x8xf32>
    %84 = vector.extract_strided_slice %37 {offsets = [0, 56], sizes = [16, 8], strides = [1, 1]} : vector<16x96xf32> to vector<16x8xf32>
    %85 = vector.extract_strided_slice %37 {offsets = [0, 88], sizes = [16, 8], strides = [1, 1]} : vector<16x96xf32> to vector<16x8xf32>
    "tpu.trace_start"() <{level = 10 : i32, message = "nd,md->nm"}> : () -> ()
    %cst_31 = arith.constant dense<0.000000e+00> : vector<16x16xf32>
    %86 = tpu.matmul %83, %84, %cst_31 {dimension_numbers = #tpu.dot_dimension_numbers<[1], [1], [0], [0], [0, 0, 1, 0], [], []>} : vector<16x8xf32>, vector<16x8xf32>, vector<16x16xf32> -> vector<16x16xf32>
    "tpu.trace_stop"() : () -> ()
    %cst_32 = arith.constant dense<0xFF800000> : vector<16xf32>
    %87 = vector.multi_reduction <maximumf>, %86, %cst_32 [1] : vector<16x16xf32> to vector<16xf32>
    %88 = vector.shape_cast %87 : vector<16xf32> to vector<16x1xf32>
    %89 = vector.broadcast %88 : vector<16x1xf32> to vector<16x16xf32>
    %90 = arith.subf %86, %89 : vector<16x16xf32>
    %91 = math.exp %90 : vector<16x16xf32>
    %cst_33 = arith.constant dense<0.000000e+00> : vector<16xf32>
    %92 = vector.multi_reduction <add>, %91, %cst_33 [1] : vector<16x16xf32> to vector<16xf32>
    %93 = vector.shape_cast %92 : vector<16xf32> to vector<16x1xf32>
    %94 = tpu.reciprocal %93 : vector<16x1xf32> -> vector<16x1xf32>
    %95 = vector.broadcast %94 : vector<16x1xf32> to vector<16x16xf32>
    %96 = arith.mulf %91, %95 : vector<16x16xf32>
    %cst_34 = arith.constant dense<0.000000e+00> : vector<16x8xf32>
    %97 = tpu.matmul %96, %85, %cst_34 {dimension_numbers = #tpu.dot_dimension_numbers<[1], [0], [0], [1], [0, 0, 1, 1], [], []>} : vector<16x16xf32>, vector<16x8xf32>, vector<16x8xf32> -> vector<16x8xf32>
    %98 = tpu.concatenate %52, %67, %82, %97 in 1 : vector<16x8xf32>, vector<16x8xf32>, vector<16x8xf32>, vector<16x8xf32> -> vector<16x32xf32>
    %cst_35 = arith.constant dense<0.000000e+00> : vector<16x32xf32>
    %99 = tpu.matmul %98, %1, %cst_35 {dimension_numbers = #tpu.dot_dimension_numbers<[1], [0], [0], [1], [0, 0, 1, 1], [], []>} : vector<16x32xf32>, vector<32x32xf32>, vector<16x32xf32> -> vector<16x32xf32>
    %100 = vector.broadcast %7 : vector<1x32xf32> to vector<16x32xf32>
    %101 = arith.addf %99, %100 : vector<16x32xf32>
    %102 = arith.addf %12, %101 : vector<16x32xf32>
    %c1_i32 = arith.constant 1 : i32
    %cst_36 = arith.constant dense<0.000000e+00> : vector<16xf32>
    %103 = vector.multi_reduction <add>, %102, %cst_36 [1] : vector<16x32xf32> to vector<16xf32>
    %104 = vector.shape_cast %103 : vector<16xf32> to vector<16x1xf32>
    %cst_37 = arith.constant 3.200000e+01 : f32
    %105 = vector.broadcast %cst_37 : f32 to vector<16x1xf32>
    %106 = arith.divf %104, %105 : vector<16x1xf32>
    %107 = vector.broadcast %106 : vector<16x1xf32> to vector<16x32xf32>
    %108 = arith.subf %102, %107 : vector<16x32xf32>
    %109 = arith.mulf %108, %108 : vector<16x32xf32>
    %cst_38 = arith.constant dense<0.000000e+00> : vector<16xf32>
    %110 = vector.multi_reduction <add>, %109, %cst_38 [1] : vector<16x32xf32> to vector<16xf32>
    %111 = vector.shape_cast %110 : vector<16xf32> to vector<16x1xf32>
    %cst_39 = arith.constant 3.200000e+01 : f32
    %112 = vector.broadcast %cst_39 : f32 to vector<16x1xf32>
    %113 = arith.divf %111, %112 : vector<16x1xf32>
    %114 = vector.broadcast %106 : vector<16x1xf32> to vector<16x32xf32>
    %115 = arith.subf %102, %114 : vector<16x32xf32>
    %cst_40 = arith.constant 9.99999974E-6 : f32
    %116 = vector.broadcast %cst_40 : f32 to vector<16x1xf32>
    %117 = arith.addf %113, %116 : vector<16x1xf32>
    %118 = math.rsqrt %117 : vector<16x1xf32>
    %119 = vector.broadcast %118 : vector<16x1xf32> to vector<16x32xf32>
    %120 = arith.mulf %115, %119 : vector<16x32xf32>
    %121 = vector.broadcast %4 : vector<1x32xf32> to vector<16x32xf32>
    %122 = arith.mulf %120, %121 : vector<16x32xf32>
    %123 = vector.broadcast %5 : vector<1x32xf32> to vector<16x32xf32>
    %124 = arith.addf %122, %123 : vector<16x32xf32>
    %cst_41 = arith.constant dense<0.000000e+00> : vector<16x96xf32>
    %125 = tpu.matmul %124, %0, %cst_41 {dimension_numbers = #tpu.dot_dimension_numbers<[1], [0], [0], [1], [0, 0, 1, 1], [], []>} : vector<16x32xf32>, vector<32x96xf32>, vector<16x96xf32> -> vector<16x96xf32>
    %126 = vector.broadcast %6 : vector<1x96xf32> to vector<16x96xf32>
    %127 = arith.addf %125, %126 : vector<16x96xf32>
    %128 = vector.extract_strided_slice %127 {offsets = [0, 0], sizes = [16, 8], strides = [1, 1]} : vector<16x96xf32> to vector<16x8xf32>
    %129 = vector.extract_strided_slice %127 {offsets = [0, 32], sizes = [16, 8], strides = [1, 1]} : vector<16x96xf32> to vector<16x8xf32>
    %130 = vector.extract_strided_slice %127 {offsets = [0, 64], sizes = [16, 8], strides = [1, 1]} : vector<16x96xf32> to vector<16x8xf32>
    "tpu.trace_start"() <{level = 10 : i32, message = "nd,md->nm"}> : () -> ()
    %cst_42 = arith.constant dense<0.000000e+00> : vector<16x16xf32>
    %131 = tpu.matmul %128, %129, %cst_42 {dimension_numbers = #tpu.dot_dimension_numbers<[1], [1], [0], [0], [0, 0, 1, 0], [], []>} : vector<16x8xf32>, vector<16x8xf32>, vector<16x16xf32> -> vector<16x16xf32>
    "tpu.trace_stop"() : () -> ()
    %cst_43 = arith.constant dense<0xFF800000> : vector<16xf32>
    %132 = vector.multi_reduction <maximumf>, %131, %cst_43 [1] : vector<16x16xf32> to vector<16xf32>
    %133 = vector.shape_cast %132 : vector<16xf32> to vector<16x1xf32>
    %134 = vector.broadcast %133 : vector<16x1xf32> to vector<16x16xf32>
    %135 = arith.subf %131, %134 : vector<16x16xf32>
    %136 = math.exp %135 : vector<16x16xf32>
    %cst_44 = arith.constant dense<0.000000e+00> : vector<16xf32>
    %137 = vector.multi_reduction <add>, %136, %cst_44 [1] : vector<16x16xf32> to vector<16xf32>
    %138 = vector.shape_cast %137 : vector<16xf32> to vector<16x1xf32>
    %139 = tpu.reciprocal %138 : vector<16x1xf32> -> vector<16x1xf32>
    %140 = vector.broadcast %139 : vector<16x1xf32> to vector<16x16xf32>
    %141 = arith.mulf %136, %140 : vector<16x16xf32>
    %cst_45 = arith.constant dense<0.000000e+00> : vector<16x8xf32>
    %142 = tpu.matmul %141, %130, %cst_45 {dimension_numbers = #tpu.dot_dimension_numbers<[1], [0], [0], [1], [0, 0, 1, 1], [], []>} : vector<16x16xf32>, vector<16x8xf32>, vector<16x8xf32> -> vector<16x8xf32>
    %143 = vector.extract_strided_slice %127 {offsets = [0, 8], sizes = [16, 8], strides = [1, 1]} : vector<16x96xf32> to vector<16x8xf32>
    %144 = vector.extract_strided_slice %127 {offsets = [0, 40], sizes = [16, 8], strides = [1, 1]} : vector<16x96xf32> to vector<16x8xf32>
    %145 = vector.extract_strided_slice %127 {offsets = [0, 72], sizes = [16, 8], strides = [1, 1]} : vector<16x96xf32> to vector<16x8xf32>
    "tpu.trace_start"() <{level = 10 : i32, message = "nd,md->nm"}> : () -> ()
    %cst_46 = arith.constant dense<0.000000e+00> : vector<16x16xf32>
    %146 = tpu.matmul %143, %144, %cst_46 {dimension_numbers = #tpu.dot_dimension_numbers<[1], [1], [0], [0], [0, 0, 1, 0], [], []>} : vector<16x8xf32>, vector<16x8xf32>, vector<16x16xf32> -> vector<16x16xf32>
    "tpu.trace_stop"() : () -> ()
    %cst_47 = arith.constant dense<0xFF800000> : vector<16xf32>
    %147 = vector.multi_reduction <maximumf>, %146, %cst_47 [1] : vector<16x16xf32> to vector<16xf32>
    %148 = vector.shape_cast %147 : vector<16xf32> to vector<16x1xf32>
    %149 = vector.broadcast %148 : vector<16x1xf32> to vector<16x16xf32>
    %150 = arith.subf %146, %149 : vector<16x16xf32>
    %151 = math.exp %150 : vector<16x16xf32>
    %cst_48 = arith.constant dense<0.000000e+00> : vector<16xf32>
    %152 = vector.multi_reduction <add>, %151, %cst_48 [1] : vector<16x16xf32> to vector<16xf32>
    %153 = vector.shape_cast %152 : vector<16xf32> to vector<16x1xf32>
    %154 = tpu.reciprocal %153 : vector<16x1xf32> -> vector<16x1xf32>
    %155 = vector.broadcast %154 : vector<16x1xf32> to vector<16x16xf32>
    %156 = arith.mulf %151, %155 : vector<16x16xf32>
    %cst_49 = arith.constant dense<0.000000e+00> : vector<16x8xf32>
    %157 = tpu.matmul %156, %145, %cst_49 {dimension_numbers = #tpu.dot_dimension_numbers<[1], [0], [0], [1], [0, 0, 1, 1], [], []>} : vector<16x16xf32>, vector<16x8xf32>, vector<16x8xf32> -> vector<16x8xf32>
    %158 = vector.extract_strided_slice %127 {offsets = [0, 16], sizes = [16, 8], strides = [1, 1]} : vector<16x96xf32> to vector<16x8xf32>
    %159 = vector.extract_strided_slice %127 {offsets = [0, 48], sizes = [16, 8], strides = [1, 1]} : vector<16x96xf32> to vector<16x8xf32>
    %160 = vector.extract_strided_slice %127 {offsets = [0, 80], sizes = [16, 8], strides = [1, 1]} : vector<16x96xf32> to vector<16x8xf32>
    "tpu.trace_start"() <{level = 10 : i32, message = "nd,md->nm"}> : () -> ()
    %cst_50 = arith.constant dense<0.000000e+00> : vector<16x16xf32>
    %161 = tpu.matmul %158, %159, %cst_50 {dimension_numbers = #tpu.dot_dimension_numbers<[1], [1], [0], [0], [0, 0, 1, 0], [], []>} : vector<16x8xf32>, vector<16x8xf32>, vector<16x16xf32> -> vector<16x16xf32>
    "tpu.trace_stop"() : () -> ()
    %cst_51 = arith.constant dense<0xFF800000> : vector<16xf32>
    %162 = vector.multi_reduction <maximumf>, %161, %cst_51 [1] : vector<16x16xf32> to vector<16xf32>
    %163 = vector.shape_cast %162 : vector<16xf32> to vector<16x1xf32>
    %164 = vector.broadcast %163 : vector<16x1xf32> to vector<16x16xf32>
    %165 = arith.subf %161, %164 : vector<16x16xf32>
    %166 = math.exp %165 : vector<16x16xf32>
    %cst_52 = arith.constant dense<0.000000e+00> : vector<16xf32>
    %167 = vector.multi_reduction <add>, %166, %cst_52 [1] : vector<16x16xf32> to vector<16xf32>
    %168 = vector.shape_cast %167 : vector<16xf32> to vector<16x1xf32>
    %169 = tpu.reciprocal %168 : vector<16x1xf32> -> vector<16x1xf32>
    %170 = vector.broadcast %169 : vector<16x1xf32> to vector<16x16xf32>
    %171 = arith.mulf %166, %170 : vector<16x16xf32>
    %cst_53 = arith.constant dense<0.000000e+00> : vector<16x8xf32>
    %172 = tpu.matmul %171, %160, %cst_53 {dimension_numbers = #tpu.dot_dimension_numbers<[1], [0], [0], [1], [0, 0, 1, 1], [], []>} : vector<16x16xf32>, vector<16x8xf32>, vector<16x8xf32> -> vector<16x8xf32>
    %173 = vector.extract_strided_slice %127 {offsets = [0, 24], sizes = [16, 8], strides = [1, 1]} : vector<16x96xf32> to vector<16x8xf32>
    %174 = vector.extract_strided_slice %127 {offsets = [0, 56], sizes = [16, 8], strides = [1, 1]} : vector<16x96xf32> to vector<16x8xf32>
    %175 = vector.extract_strided_slice %127 {offsets = [0, 88], sizes = [16, 8], strides = [1, 1]} : vector<16x96xf32> to vector<16x8xf32>
    "tpu.trace_start"() <{level = 10 : i32, message = "nd,md->nm"}> : () -> ()
    %cst_54 = arith.constant dense<0.000000e+00> : vector<16x16xf32>
    %176 = tpu.matmul %173, %174, %cst_54 {dimension_numbers = #tpu.dot_dimension_numbers<[1], [1], [0], [0], [0, 0, 1, 0], [], []>} : vector<16x8xf32>, vector<16x8xf32>, vector<16x16xf32> -> vector<16x16xf32>
    "tpu.trace_stop"() : () -> ()
    %cst_55 = arith.constant dense<0xFF800000> : vector<16xf32>
    %177 = vector.multi_reduction <maximumf>, %176, %cst_55 [1] : vector<16x16xf32> to vector<16xf32>
    %178 = vector.shape_cast %177 : vector<16xf32> to vector<16x1xf32>
    %179 = vector.broadcast %178 : vector<16x1xf32> to vector<16x16xf32>
    %180 = arith.subf %176, %179 : vector<16x16xf32>
    %181 = math.exp %180 : vector<16x16xf32>
    %cst_56 = arith.constant dense<0.000000e+00> : vector<16xf32>
    %182 = vector.multi_reduction <add>, %181, %cst_56 [1] : vector<16x16xf32> to vector<16xf32>
    %183 = vector.shape_cast %182 : vector<16xf32> to vector<16x1xf32>
    %184 = tpu.reciprocal %183 : vector<16x1xf32> -> vector<16x1xf32>
    %185 = vector.broadcast %184 : vector<16x1xf32> to vector<16x16xf32>
    %186 = arith.mulf %181, %185 : vector<16x16xf32>
    %cst_57 = arith.constant dense<0.000000e+00> : vector<16x8xf32>
    %187 = tpu.matmul %186, %175, %cst_57 {dimension_numbers = #tpu.dot_dimension_numbers<[1], [0], [0], [1], [0, 0, 1, 1], [], []>} : vector<16x16xf32>, vector<16x8xf32>, vector<16x8xf32> -> vector<16x8xf32>
    %188 = tpu.concatenate %142, %157, %172, %187 in 1 : vector<16x8xf32>, vector<16x8xf32>, vector<16x8xf32>, vector<16x8xf32> -> vector<16x32xf32>
    %cst_58 = arith.constant dense<0.000000e+00> : vector<16x32xf32>
    %189 = tpu.matmul %188, %1, %cst_58 {dimension_numbers = #tpu.dot_dimension_numbers<[1], [0], [0], [1], [0, 0, 1, 1], [], []>} : vector<16x32xf32>, vector<32x32xf32>, vector<16x32xf32> -> vector<16x32xf32>
    %190 = vector.broadcast %7 : vector<1x32xf32> to vector<16x32xf32>
    %191 = arith.addf %189, %190 : vector<16x32xf32>
    %192 = arith.addf %102, %191 : vector<16x32xf32>
    %c2_i32 = arith.constant 2 : i32
    %cst_59 = arith.constant dense<0.000000e+00> : vector<16xf32>
    %193 = vector.multi_reduction <add>, %192, %cst_59 [1] : vector<16x32xf32> to vector<16xf32>
    %194 = vector.shape_cast %193 : vector<16xf32> to vector<16x1xf32>
    %cst_60 = arith.constant 3.200000e+01 : f32
    %195 = vector.broadcast %cst_60 : f32 to vector<16x1xf32>
    %196 = arith.divf %194, %195 : vector<16x1xf32>
    %197 = vector.broadcast %196 : vector<16x1xf32> to vector<16x32xf32>
    %198 = arith.subf %192, %197 : vector<16x32xf32>
    %199 = arith.mulf %198, %198 : vector<16x32xf32>
    %cst_61 = arith.constant dense<0.000000e+00> : vector<16xf32>
    %200 = vector.multi_reduction <add>, %199, %cst_61 [1] : vector<16x32xf32> to vector<16xf32>
    %201 = vector.shape_cast %200 : vector<16xf32> to vector<16x1xf32>
    %cst_62 = arith.constant 3.200000e+01 : f32
    %202 = vector.broadcast %cst_62 : f32 to vector<16x1xf32>
    %203 = arith.divf %201, %202 : vector<16x1xf32>
    %204 = vector.broadcast %196 : vector<16x1xf32> to vector<16x32xf32>
    %205 = arith.subf %192, %204 : vector<16x32xf32>
    %cst_63 = arith.constant 9.99999974E-6 : f32
    %206 = vector.broadcast %cst_63 : f32 to vector<16x1xf32>
    %207 = arith.addf %203, %206 : vector<16x1xf32>
    %208 = math.rsqrt %207 : vector<16x1xf32>
    %209 = vector.broadcast %208 : vector<16x1xf32> to vector<16x32xf32>
    %210 = arith.mulf %205, %209 : vector<16x32xf32>
    %211 = vector.broadcast %4 : vector<1x32xf32> to vector<16x32xf32>
    %212 = arith.mulf %210, %211 : vector<16x32xf32>
    %213 = vector.broadcast %5 : vector<1x32xf32> to vector<16x32xf32>
    %214 = arith.addf %212, %213 : vector<16x32xf32>
    %cst_64 = arith.constant dense<0.000000e+00> : vector<16x96xf32>
    %215 = tpu.matmul %214, %0, %cst_64 {dimension_numbers = #tpu.dot_dimension_numbers<[1], [0], [0], [1], [0, 0, 1, 1], [], []>} : vector<16x32xf32>, vector<32x96xf32>, vector<16x96xf32> -> vector<16x96xf32>
    %216 = vector.broadcast %6 : vector<1x96xf32> to vector<16x96xf32>
    %217 = arith.addf %215, %216 : vector<16x96xf32>
    %218 = vector.extract_strided_slice %217 {offsets = [0, 0], sizes = [16, 8], strides = [1, 1]} : vector<16x96xf32> to vector<16x8xf32>
    %219 = vector.extract_strided_slice %217 {offsets = [0, 32], sizes = [16, 8], strides = [1, 1]} : vector<16x96xf32> to vector<16x8xf32>
    %220 = vector.extract_strided_slice %217 {offsets = [0, 64], sizes = [16, 8], strides = [1, 1]} : vector<16x96xf32> to vector<16x8xf32>
    "tpu.trace_start"() <{level = 10 : i32, message = "nd,md->nm"}> : () -> ()
    %cst_65 = arith.constant dense<0.000000e+00> : vector<16x16xf32>
    %221 = tpu.matmul %218, %219, %cst_65 {dimension_numbers = #tpu.dot_dimension_numbers<[1], [1], [0], [0], [0, 0, 1, 0], [], []>} : vector<16x8xf32>, vector<16x8xf32>, vector<16x16xf32> -> vector<16x16xf32>
    "tpu.trace_stop"() : () -> ()
    %cst_66 = arith.constant dense<0xFF800000> : vector<16xf32>
    %222 = vector.multi_reduction <maximumf>, %221, %cst_66 [1] : vector<16x16xf32> to vector<16xf32>
    %223 = vector.shape_cast %222 : vector<16xf32> to vector<16x1xf32>
    %224 = vector.broadcast %223 : vector<16x1xf32> to vector<16x16xf32>
    %225 = arith.subf %221, %224 : vector<16x16xf32>
    %226 = math.exp %225 : vector<16x16xf32>
    %cst_67 = arith.constant dense<0.000000e+00> : vector<16xf32>
    %227 = vector.multi_reduction <add>, %226, %cst_67 [1] : vector<16x16xf32> to vector<16xf32>
    %228 = vector.shape_cast %227 : vector<16xf32> to vector<16x1xf32>
    %229 = tpu.reciprocal %228 : vector<16x1xf32> -> vector<16x1xf32>
    %230 = vector.broadcast %229 : vector<16x1xf32> to vector<16x16xf32>
    %231 = arith.mulf %226, %230 : vector<16x16xf32>
    %cst_68 = arith.constant dense<0.000000e+00> : vector<16x8xf32>
    %232 = tpu.matmul %231, %220, %cst_68 {dimension_numbers = #tpu.dot_dimension_numbers<[1], [0], [0], [1], [0, 0, 1, 1], [], []>} : vector<16x16xf32>, vector<16x8xf32>, vector<16x8xf32> -> vector<16x8xf32>
    %233 = vector.extract_strided_slice %217 {offsets = [0, 8], sizes = [16, 8], strides = [1, 1]} : vector<16x96xf32> to vector<16x8xf32>
    %234 = vector.extract_strided_slice %217 {offsets = [0, 40], sizes = [16, 8], strides = [1, 1]} : vector<16x96xf32> to vector<16x8xf32>
    %235 = vector.extract_strided_slice %217 {offsets = [0, 72], sizes = [16, 8], strides = [1, 1]} : vector<16x96xf32> to vector<16x8xf32>
    "tpu.trace_start"() <{level = 10 : i32, message = "nd,md->nm"}> : () -> ()
    %cst_69 = arith.constant dense<0.000000e+00> : vector<16x16xf32>
    %236 = tpu.matmul %233, %234, %cst_69 {dimension_numbers = #tpu.dot_dimension_numbers<[1], [1], [0], [0], [0, 0, 1, 0], [], []>} : vector<16x8xf32>, vector<16x8xf32>, vector<16x16xf32> -> vector<16x16xf32>
    "tpu.trace_stop"() : () -> ()
    %cst_70 = arith.constant dense<0xFF800000> : vector<16xf32>
    %237 = vector.multi_reduction <maximumf>, %236, %cst_70 [1] : vector<16x16xf32> to vector<16xf32>
    %238 = vector.shape_cast %237 : vector<16xf32> to vector<16x1xf32>
    %239 = vector.broadcast %238 : vector<16x1xf32> to vector<16x16xf32>
    %240 = arith.subf %236, %239 : vector<16x16xf32>
    %241 = math.exp %240 : vector<16x16xf32>
    %cst_71 = arith.constant dense<0.000000e+00> : vector<16xf32>
    %242 = vector.multi_reduction <add>, %241, %cst_71 [1] : vector<16x16xf32> to vector<16xf32>
    %243 = vector.shape_cast %242 : vector<16xf32> to vector<16x1xf32>
    %244 = tpu.reciprocal %243 : vector<16x1xf32> -> vector<16x1xf32>
    %245 = vector.broadcast %244 : vector<16x1xf32> to vector<16x16xf32>
    %246 = arith.mulf %241, %245 : vector<16x16xf32>
    %cst_72 = arith.constant dense<0.000000e+00> : vector<16x8xf32>
    %247 = tpu.matmul %246, %235, %cst_72 {dimension_numbers = #tpu.dot_dimension_numbers<[1], [0], [0], [1], [0, 0, 1, 1], [], []>} : vector<16x16xf32>, vector<16x8xf32>, vector<16x8xf32> -> vector<16x8xf32>
    %248 = vector.extract_strided_slice %217 {offsets = [0, 16], sizes = [16, 8], strides = [1, 1]} : vector<16x96xf32> to vector<16x8xf32>
    %249 = vector.extract_strided_slice %217 {offsets = [0, 48], sizes = [16, 8], strides = [1, 1]} : vector<16x96xf32> to vector<16x8xf32>
    %250 = vector.extract_strided_slice %217 {offsets = [0, 80], sizes = [16, 8], strides = [1, 1]} : vector<16x96xf32> to vector<16x8xf32>
    "tpu.trace_start"() <{level = 10 : i32, message = "nd,md->nm"}> : () -> ()
    %cst_73 = arith.constant dense<0.000000e+00> : vector<16x16xf32>
    %251 = tpu.matmul %248, %249, %cst_73 {dimension_numbers = #tpu.dot_dimension_numbers<[1], [1], [0], [0], [0, 0, 1, 0], [], []>} : vector<16x8xf32>, vector<16x8xf32>, vector<16x16xf32> -> vector<16x16xf32>
    "tpu.trace_stop"() : () -> ()
    %cst_74 = arith.constant dense<0xFF800000> : vector<16xf32>
    %252 = vector.multi_reduction <maximumf>, %251, %cst_74 [1] : vector<16x16xf32> to vector<16xf32>
    %253 = vector.shape_cast %252 : vector<16xf32> to vector<16x1xf32>
    %254 = vector.broadcast %253 : vector<16x1xf32> to vector<16x16xf32>
    %255 = arith.subf %251, %254 : vector<16x16xf32>
    %256 = math.exp %255 : vector<16x16xf32>
    %cst_75 = arith.constant dense<0.000000e+00> : vector<16xf32>
    %257 = vector.multi_reduction <add>, %256, %cst_75 [1] : vector<16x16xf32> to vector<16xf32>
    %258 = vector.shape_cast %257 : vector<16xf32> to vector<16x1xf32>
    %259 = tpu.reciprocal %258 : vector<16x1xf32> -> vector<16x1xf32>
    %260 = vector.broadcast %259 : vector<16x1xf32> to vector<16x16xf32>
    %261 = arith.mulf %256, %260 : vector<16x16xf32>
    %cst_76 = arith.constant dense<0.000000e+00> : vector<16x8xf32>
    %262 = tpu.matmul %261, %250, %cst_76 {dimension_numbers = #tpu.dot_dimension_numbers<[1], [0], [0], [1], [0, 0, 1, 1], [], []>} : vector<16x16xf32>, vector<16x8xf32>, vector<16x8xf32> -> vector<16x8xf32>
    %263 = vector.extract_strided_slice %217 {offsets = [0, 24], sizes = [16, 8], strides = [1, 1]} : vector<16x96xf32> to vector<16x8xf32>
    %264 = vector.extract_strided_slice %217 {offsets = [0, 56], sizes = [16, 8], strides = [1, 1]} : vector<16x96xf32> to vector<16x8xf32>
    %265 = vector.extract_strided_slice %217 {offsets = [0, 88], sizes = [16, 8], strides = [1, 1]} : vector<16x96xf32> to vector<16x8xf32>
    "tpu.trace_start"() <{level = 10 : i32, message = "nd,md->nm"}> : () -> ()
    %cst_77 = arith.constant dense<0.000000e+00> : vector<16x16xf32>
    %266 = tpu.matmul %263, %264, %cst_77 {dimension_numbers = #tpu.dot_dimension_numbers<[1], [1], [0], [0], [0, 0, 1, 0], [], []>} : vector<16x8xf32>, vector<16x8xf32>, vector<16x16xf32> -> vector<16x16xf32>
    "tpu.trace_stop"() : () -> ()
    %cst_78 = arith.constant dense<0xFF800000> : vector<16xf32>
    %267 = vector.multi_reduction <maximumf>, %266, %cst_78 [1] : vector<16x16xf32> to vector<16xf32>
    %268 = vector.shape_cast %267 : vector<16xf32> to vector<16x1xf32>
    %269 = vector.broadcast %268 : vector<16x1xf32> to vector<16x16xf32>
    %270 = arith.subf %266, %269 : vector<16x16xf32>
    %271 = math.exp %270 : vector<16x16xf32>
    %cst_79 = arith.constant dense<0.000000e+00> : vector<16xf32>
    %272 = vector.multi_reduction <add>, %271, %cst_79 [1] : vector<16x16xf32> to vector<16xf32>
    %273 = vector.shape_cast %272 : vector<16xf32> to vector<16x1xf32>
    %274 = tpu.reciprocal %273 : vector<16x1xf32> -> vector<16x1xf32>
    %275 = vector.broadcast %274 : vector<16x1xf32> to vector<16x16xf32>
    %276 = arith.mulf %271, %275 : vector<16x16xf32>
    %cst_80 = arith.constant dense<0.000000e+00> : vector<16x8xf32>
    %277 = tpu.matmul %276, %265, %cst_80 {dimension_numbers = #tpu.dot_dimension_numbers<[1], [0], [0], [1], [0, 0, 1, 1], [], []>} : vector<16x16xf32>, vector<16x8xf32>, vector<16x8xf32> -> vector<16x8xf32>
    %278 = tpu.concatenate %232, %247, %262, %277 in 1 : vector<16x8xf32>, vector<16x8xf32>, vector<16x8xf32>, vector<16x8xf32> -> vector<16x32xf32>
    %cst_81 = arith.constant dense<0.000000e+00> : vector<16x32xf32>
    %279 = tpu.matmul %278, %1, %cst_81 {dimension_numbers = #tpu.dot_dimension_numbers<[1], [0], [0], [1], [0, 0, 1, 1], [], []>} : vector<16x32xf32>, vector<32x32xf32>, vector<16x32xf32> -> vector<16x32xf32>
    %280 = vector.broadcast %7 : vector<1x32xf32> to vector<16x32xf32>
    %281 = arith.addf %279, %280 : vector<16x32xf32>
    %282 = arith.addf %192, %281 : vector<16x32xf32>
    %cst_82 = arith.constant dense<0.000000e+00> : vector<16xf32>
    %283 = vector.multi_reduction <add>, %282, %cst_82 [1] : vector<16x32xf32> to vector<16xf32>
    %284 = vector.shape_cast %283 : vector<16xf32> to vector<16x1xf32>
    %cst_83 = arith.constant 3.200000e+01 : f32
    %285 = vector.broadcast %cst_83 : f32 to vector<16x1xf32>
    %286 = arith.divf %284, %285 : vector<16x1xf32>
    %287 = vector.broadcast %286 : vector<16x1xf32> to vector<16x32xf32>
    %288 = arith.subf %282, %287 : vector<16x32xf32>
    %289 = arith.mulf %288, %288 : vector<16x32xf32>
    %cst_84 = arith.constant dense<0.000000e+00> : vector<16xf32>
    %290 = vector.multi_reduction <add>, %289, %cst_84 [1] : vector<16x32xf32> to vector<16xf32>
    %291 = vector.shape_cast %290 : vector<16xf32> to vector<16x1xf32>
    %cst_85 = arith.constant 3.200000e+01 : f32
    %292 = vector.broadcast %cst_85 : f32 to vector<16x1xf32>
    %293 = arith.divf %291, %292 : vector<16x1xf32>
    %294 = vector.broadcast %286 : vector<16x1xf32> to vector<16x32xf32>
    %295 = arith.subf %282, %294 : vector<16x32xf32>
    %cst_86 = arith.constant 9.99999974E-6 : f32
    %296 = vector.broadcast %cst_86 : f32 to vector<16x1xf32>
    %297 = arith.addf %293, %296 : vector<16x1xf32>
    %298 = math.rsqrt %297 : vector<16x1xf32>
    %299 = vector.broadcast %298 : vector<16x1xf32> to vector<16x32xf32>
    %300 = arith.mulf %295, %299 : vector<16x32xf32>
    %301 = vector.broadcast %8 : vector<1x32xf32> to vector<16x32xf32>
    %302 = arith.mulf %300, %301 : vector<16x32xf32>
    %303 = vector.broadcast %9 : vector<1x32xf32> to vector<16x32xf32>
    %304 = arith.addf %302, %303 : vector<16x32xf32>
    %cst_87 = arith.constant dense<0.000000e+00> : vector<16x64xf32>
    %305 = tpu.matmul %304, %2, %cst_87 {dimension_numbers = #tpu.dot_dimension_numbers<[1], [0], [0], [1], [0, 0, 1, 1], [], []>} : vector<16x32xf32>, vector<32x64xf32>, vector<16x64xf32> -> vector<16x64xf32>
    %306 = vector.broadcast %10 : vector<1x64xf32> to vector<16x64xf32>
    %307 = arith.addf %305, %306 : vector<16x64xf32>
    %cst_88 = arith.constant 5.000000e-01 : f32
    %308 = vector.broadcast %cst_88 : f32 to vector<16x64xf32>
    %309 = arith.mulf %308, %307 : vector<16x64xf32>
    %cst_89 = arith.constant 4.471500e-02 : f32
    %310 = vector.broadcast %cst_89 : f32 to vector<16x64xf32>
    %311 = arith.mulf %310, %307 : vector<16x64xf32>
    %312 = arith.mulf %311, %307 : vector<16x64xf32>
    %313 = arith.mulf %312, %307 : vector<16x64xf32>
    %314 = arith.addf %307, %313 : vector<16x64xf32>
    %cst_90 = arith.constant 0.797884583 : f32
    %315 = vector.broadcast %cst_90 : f32 to vector<16x64xf32>
    %316 = arith.mulf %315, %314 : vector<16x64xf32>
    %317 = math.tanh %316 : vector<16x64xf32>
    %cst_91 = arith.constant 1.000000e+00 : f32
    %318 = vector.broadcast %cst_91 : f32 to vector<16x64xf32>
    %319 = arith.addf %318, %317 : vector<16x64xf32>
    %320 = arith.mulf %309, %319 : vector<16x64xf32>
    %cst_92 = arith.constant dense<0.000000e+00> : vector<16x32xf32>
    %321 = tpu.matmul %320, %3, %cst_92 {dimension_numbers = #tpu.dot_dimension_numbers<[1], [0], [0], [1], [0, 0, 1, 1], [], []>} : vector<16x64xf32>, vector<64x32xf32>, vector<16x32xf32> -> vector<16x32xf32>
    %322 = vector.broadcast %11 : vector<1x32xf32> to vector<16x32xf32>
    %323 = arith.addf %321, %322 : vector<16x32xf32>
    %324 = arith.addf %282, %323 : vector<16x32xf32>
    %c0_93 = arith.constant 0 : index
    %c0_94 = arith.constant 0 : index
    %325 = vector.load %arg3[%c0_93, %c0_94] : memref<16x32xf32, #tpu.memory_space<vmem>>, vector<16x32xf32>
    tpu.vector_store %arg3[%c0_93, %c0_94], %324 {strides = array<i32>} : memref<16x32xf32, #tpu.memory_space<vmem>>, vector<16x32xf32>,
    return
  }
  func.func @transform_0(%arg0: i32) -> (i32, i32) {
    %c0_i32 = arith.constant 0 : i32
    %c0_i32_0 = arith.constant 0 : i32
    return %arg0, %c0_i32 : i32, i32
  }
  func.func @transform_1(%arg0: i32) -> (i32, i32) {
    %c0_i32 = arith.constant 0 : i32
    %c0_i32_0 = arith.constant 0 : i32
    %c0_i32_1 = arith.constant 0 : i32
    return %c0_i32, %c0_i32_0 : i32, i32
  }
  func.func @transform_2(%arg0: i32) -> (i32, i32) {
    %c0_i32 = arith.constant 0 : i32
    %c0_i32_0 = arith.constant 0 : i32
    return %arg0, %c0_i32 : i32, i32
  }
}

</mosaic_0001>

<llo_original>
// kernel: mul.9
$region0: #{mul.9}
  #allocation0 [shape = 's32[1]{0}', space=sflag, size = 0x4, scoped, tag = 'scoped memory for mul.9']
  %s0 = inlined_call_operand.vmem [shape: f32[1,96], index: 0, kind: input, shape index: {}]
  %s1 = inlined_call_operand.vmem [shape: f32[1,96], index: 1, kind: input, shape index: {}]
  %s2 = inlined_call_operand.vmem [shape: f32[1,96], index: 2, kind: output, shape index: {}]
  %v3 = vld [vmem:[%s0] sm:$0x1]
  %v4 = vld [vmem:[%s1] sm:$0x1]
  %5 = xla_tuple %v3, %v4
  %6 = xla_tuple %5
  %v7 = vmul.f32 %v3, %v4
  %8 = xla_tuple %v7
  %9 = vst [vmem:[%s2] sm:$0x1] %v7

// kernel: transformer_block_forward.1
$region0: #{transformer_block_forward.1}
  #allocation0 [shape = 'u32[]', space=smem, size = 0x4, offset = 0x4, fixed_abs, tag = 'smem constant byte address 0x4 - core index']
  #allocation1 [shape = 'u32[144,128]{1,0:T(1,128)}', space=vmem, size = 0x12000, scoped, tag = 'internal scratch']
  %s0 = inlined_call_operand.vmem [shape: f32[32,32], index: 0, kind: input, shape index: {}]
  %s1 = inlined_call_operand.vmem [shape: f32[168,128], index: 1, kind: input, shape index: {}]
  %s2 = inlined_call_operand.hbm [shape: f32[32,32], index: 2, kind: output, shape index: {}]
  %s3 = sld [smem:[#allocation0]]
  $region41: #{transformer_block_forward.1} parent=0
    _
  %s5 = ssub.s32 1, %s3
  %s6 = scalar_select 0, %s5, %s3
  $region1: #{transformer_block_forward.1} parent=0
    #allocation2 [shape = 'u8[16384]{0}', space=vmem, size = 0x4000, scoped, tag = 'output window, operand 0']
    #allocation3 [shape = 's32[2]{0}', space=sflag, size = 0x8, scoped, tag = 'scoped memory for transformer_block_forward.1']
    %7 = vsyncpa [#allocation3], 0
    %s8 = scalar_lea.sflag [#allocation3], 1
    %9 = vsyncpa %s8, 0
    loop: start=0, step=1, limit=4
    $region2: #{transformer_block_forward.1} parent=1 // loop_pre_header
      _
    $region3: #{transformer_block_forward.1} parent=1 // loop_header
      %s11 = sphi 0, %s15
      %p12 = scmp.ge.s32.totalorder %s11, 4
      %s21 = sphi 0, %s23
      %s24 = sphi 0, %s21
      %s25 = sphi 0, %s24
      %s41 = sphi 0, %s25
      %s45 = sphi 0, %s45
      %s47 = sphi 0, %s45
      %s48 = sphi 0, %s47
      %s62 = sphi 0, %s48
      %s68 = sphi 0, %s70
      %s71 = sphi 0, %s68
      %s72 = sphi 0, %s71
      %s88 = sphi 0, %s72
    $region4: #{transformer_block_forward.1} parent=1 // loop_header_branch
      %14 = sbr.rel (%p12) target = $region8
    $region5: #{transformer_block_forward.1} parent=1 // loop_body
      %s16 = ssub.s32 %s11, 1
      %s17 = ssub.s32 %s11, 2
      %s18 = sadd.s32 %s11, 1
      %s19 = ssub.s32 %s11, %s18
      %p20 = scmp.eq.s32.totalorder %s19, 0
      %s22 = sadd.s32 %s21, 1
      %s23 = scalar_select %p20, %s21, %s22
      %p26 = pneg %p20
      %p27 = scmp.eq.s32.totalorder %s11, 1
      %p28 = por %p26, %p27
      %p29 = scmp.ne.s32.totalorder %s21, %s24
      %p30 = scmp.eq.s32.totalorder %s11, 0
      %p31 = por %p29, %p30
      %p32 = scmp.ne.s32.totalorder %s21, %s24
      %p33 = scmp.eq.s32.totalorder %s16, 1
      %p34 = por %p32, %p33
      %p35 = scmp.ne.s32.totalorder %s24, %s25
      %p36 = scmp.eq.s32.totalorder %s16, 0
      %p37 = por %p35, %p36
      %p38 = scmp.ne.s32.totalorder %s24, %s25
      %p39 = scmp.eq.s32.totalorder %s17, 1
      %p40 = por %p38, %p39
      %p42 = scmp.ne.s32.totalorder %s25, %s41
      %p43 = scmp.eq.s32.totalorder %s17, 0
      %p44 = por %p42, %p43
      %s46 = sadd.s32 %s45, 1
      %p49 = scmp.eq.s32.totalorder %s11, 1
      %p50 = scmp.ne.s32.totalorder %s45, %s47
      %p51 = scmp.eq.s32.totalorder %s11, 0
      %p52 = por %p50, %p51
      %p53 = scmp.ne.s32.totalorder %s45, %s47
      %p54 = scmp.eq.s32.totalorder %s16, 1
      %p55 = por %p53, %p54
      %p56 = scmp.ne.s32.totalorder %s47, %s48
      %p57 = scmp.eq.s32.totalorder %s16, 0
      %p58 = por %p56, %p57
      %p59 = scmp.ne.s32.totalorder %s47, %s48
      %p60 = scmp.eq.s32.totalorder %s17, 1
      %p61 = por %p59, %p60
      %p63 = scmp.ne.s32.totalorder %s48, %s62
      %p64 = scmp.eq.s32.totalorder %s17, 0
      %p65 = por %p63, %p64
      %s66 = ssub.s32 %s11, %s18
      %p67 = scmp.eq.s32.totalorder %s66, 0
      %s69 = sadd.s32 %s68, 1
      %s70 = scalar_select %p67, %s68, %s69
      %p73 = pneg %p67
      %p74 = scmp.eq.s32.totalorder %s11, 1
      %p75 = por %p73, %p74
      %p76 = scmp.ne.s32.totalorder %s68, %s71
      %p77 = scmp.eq.s32.totalorder %s11, 0
      %p78 = por %p76, %p77
      %p79 = scmp.ne.s32.totalorder %s68, %s71
      %p80 = scmp.eq.s32.totalorder %s16, 1
      %p81 = por %p79, %p80
      %p82 = scmp.ne.s32.totalorder %s71, %s72
      %p83 = scmp.eq.s32.totalorder %s16, 0
      %p84 = por %p82, %p83
      %p85 = scmp.ne.s32.totalorder %s71, %s72
      %p86 = scmp.eq.s32.totalorder %s17, 1
      %p87 = por %p85, %p86
      %p89 = scmp.ne.s32.totalorder %s72, %s88
      %p90 = scmp.eq.s32.totalorder %s17, 0
      %p91 = por %p89, %p90
      %p92 = scmp.le.s32.totalorder 1, %s11
      %p93 = scmp.lt.s32.totalorder %s11, 3
      %p94 = pnand %p92, %p93
      %p95 = pneg %p94
      // Predicated region
      $region9: #{transformer_block_forward.1} parent=5 // pred_check
        _
      $region10: #{transformer_block_forward.1} parent=5 // pred_check_branch
        %97 = sbr.rel (%p94) target = $region12
      $region11: #{transformer_block_forward.1} parent=5 // pred_region
        %s98 = ssub.s32 %s11, 1
        // Predicated region
        $region13: #{transformer_block_forward.1} parent=11 // pred_check
          %p99 = pneg %p58
        $region14: #{transformer_block_forward.1} parent=11 // pred_check_branch
          %101 = sbr.rel (%p99) target = $region16
        $region15: #{transformer_block_forward.1} parent=11 // pred_region
          _
        $region16: #{transformer_block_forward.1} parent=11 // pred_fallthru
          _
      $region12: #{transformer_block_forward.1} parent=5 // pred_fallthru
        _
      %p102 = scmp.lt.s32.totalorder %s11, 2
      // Predicated region
      $region17: #{transformer_block_forward.1} parent=5 // pred_check
        %p103 = pneg %p102
      $region18: #{transformer_block_forward.1} parent=5 // pred_check_branch
        %105 = sbr.rel (%p103) target = $region20
      $region19: #{transformer_block_forward.1} parent=5 // pred_region
        // Predicated region
        $region21: #{transformer_block_forward.1} parent=19 // pred_check
          %p106 = pneg %p31
        $region22: #{transformer_block_forward.1} parent=19 // pred_check_branch
          %108 = sbr.rel (%p106) target = $region24
        $region23: #{transformer_block_forward.1} parent=19 // pred_region
          %s109 = smul.u32 2, %s11
          %p110 = scmp.lt.s32.totalorder %s109, 3
          %s111 = scalar_select %p110, %s109, 3
          %s112 = smul.addr %s111, 8
          %s113 = scalar_lea.vmem %s0, %s112
          %s114 = smul.u32 2, %s11
        $region24: #{transformer_block_forward.1} parent=19 // pred_fallthru
          _
      $region20: #{transformer_block_forward.1} parent=5 // pred_fallthru
        _
      %p115 = scmp.le.s32.totalorder 1, %s11
      %p116 = scmp.lt.s32.totalorder %s11, 3
      %p117 = pnand %p115, %p116
      %p118 = pneg %p117
      // Predicated region
      $region25: #{transformer_block_forward.1} parent=5 // pred_check
        _
      $region26: #{transformer_block_forward.1} parent=5 // pred_check_branch
        %120 = sbr.rel (%p117) target = $region28
      $region27: #{transformer_block_forward.1} parent=5 // pred_region
        %s121 = ssub.s32 %s11, 1
        %s122 = smul.u32 2, %s16
        %p123 = scmp.lt.s32.totalorder %s122, 3
        %s124 = scalar_select %p123, %s122, 3
        %s125 = smul.addr %s124, 8
        %s126 = scalar_lea.vmem %s0, %s125
        %p127 = pneg %p37
        %p128 = pneg %p34
        %p129 = pneg %p58
        %p130 = pneg %p55
        %p131 = pneg %p84
        %p132 = pneg %p81
        %s133 = sand.u32 %s71, 1
        %s134 = scalar_lea.sflag [#allocation3], %s133
        %s135 = sand.u32 %s71, 1
        %s136 = smul.addr %s135, 16
        %s137 = scalar_lea.vmem [#allocation2], %s136
        %s138 = smul.u32 2, %s16
        %p139 = scmp.lt.s32.totalorder %s138, 3
        %s140 = scalar_select %p139, %s138, 3
        %s141 = smul.addr %s140, 8
        %s142 = scalar_lea.vmem %s0, %s141
        %s143 = smul.u32 2, %s16
        %s144 = smul.u32 2, %s16
        %v145 = vld [vmem:[%s1] sm:$0xff]
        %v146 = vld [vmem:[%s1 + $0x8] sm:$0xff]
        %v147 = vld [vmem:[%s1 + $0x10] sm:$0xff]
        %v148 = vld [vmem:[%s1 + $0x18] sm:$0xff]
        %v149 = vld [vmem:[%s1 + $0x20] sm:$0xff]
        %v150 = vld [vmem:[%s1 + $0x28] sm:$0xff]
        %v151 = vld [vmem:[%s1 + $0x30] sm:$0xff]
        %v152 = vld [vmem:[%s1 + $0x38] sm:$0xff]
        %v153 = vld [vmem:[%s1 + $0x40] sm:$0xff]
        %v154 = vld [vmem:[%s1 + $0x48] sm:$0xff]
        %v155 = vld [vmem:[%s1 + $0x50] sm:$0xff]
        %v156 = vld [vmem:[%s1 + $0x58] sm:$0xff]
        %v157 = vld [vmem:[%s1 + $0x60] sm:$0xff]
        %v158 = vld [vmem:[%s1 + $0x68] sm:$0xff]
        %v159 = vld [vmem:[%s1 + $0x70] sm:$0xff]
        %v160 = vld [vmem:[%s1 + $0x78] sm:$0xff]
        %v161 = vld [vmem:[%s1 + $0x80] sm:$0xff]
        %v162 = vld [vmem:[%s1 + $0x88] sm:$0xff]
        %v163 = vld [vmem:[%s1 + $0x90] sm:$0xff]
        %v164 = vld [vmem:[%s1 + $0x98] sm:$0xff]
        %v165 = vld [vmem:[%s1 + $0xa0] sm:$0x1]
        %v166 = vld [vmem:[%s1 + $0xa1] sm:$0x1]
        %v167 = vld [vmem:[%s1 + $0xa2] sm:$0x1]
        %v168 = vld [vmem:[%s1 + $0xa3] sm:$0x1]
        %v169 = vld [vmem:[%s1 + $0xa4] sm:$0x1]
        %v170 = vld [vmem:[%s1 + $0xa5] sm:$0x1]
        %v171 = vld [vmem:[%s1 + $0xa6] sm:$0x1]
        %v172 = vld [vmem:[%s1 + $0xa7] sm:$0x1]
        %v173 = vld [vmem:[%s142] sm:$0xff]
        %v174 = vld [vmem:[%s142 + $0x8] sm:$0xff]
        %vm175 = vcmask 261120
        %v176 = vsel %vm175, %v173, 0.0
        %177 = vadd.xlane.f32.xlu0 %v176
        %v178 = vpop.xlane.xlu0 %177
        %v179 = vsel %vm175, %v174, 0.0
        %180 = vadd.xlane.f32.xlu0 %v179
        %v181 = vpop.xlane.xlu0 %180
        %v182 = vrcp.pop 32.0
        %v183 = vmul.f32 %v178, %v182
        %v184 = vmul.f32 %v181, %v182
        %v185 = vsub.f32 %v173, %v183
        %v186 = vsub.f32 %v174, %v184
        %v187 = vmul.f32 %v185, %v185
        %v188 = vmul.f32 %v186, %v186
        %v189 = vsel %vm175, %v187, 0.0
        %190 = vadd.xlane.f32.xlu0 %v189
        %v191 = vpop.xlane.xlu0 %190
        %v192 = vsel %vm175, %v188, 0.0
        %193 = vadd.xlane.f32.xlu0 %v192
        %v194 = vpop.xlane.xlu0 %193
        %v195 = vmul.f32 %v191, %v182
        %v196 = vmul.f32 %v194, %v182
        %v197 = vadd.f32 %v195, 1e-05
        %v198 = vadd.f32 %v196, 1e-05
        %v199 = vrsqrt.pop %v197
        %v200 = vrsqrt.pop %v198
        %v201 = vmul.f32 %v185, %v199
        %v202 = vmul.f32 %v186, %v200
        %v203 = vlaneseq
        %v204 = vshrl.u32 %v203, 7
        %v205 = vsub.s32 0, %v204
        %v206 = vrot.slane %v165, %v205
        %v207 = vmul.f32 %v201, %v206
        %v208 = vmul.f32 %v202, %v206
        %v209 = vlaneseq
        %v210 = vshrl.u32 %v209, 7
        %v211 = vsub.s32 0, %v210
        %v212 = vrot.slane %v166, %v211
        %v213 = vadd.f32 %v207, %v212
        %v214 = vadd.f32 %v208, %v212
        %v215 = vlaneseq
        %v216 = vshrl.u32 %v215, 7
        %v217 = vsub.s32 0, %v216
        %v218 = vrot.slane %v167, %v217
        %v220 = vsel %vm175, %v213, 0
        %v223 = vsel %vm175, %v214, 0
        %225 = vmatprep.subr.mxu0 0.0
        %226 = vmatpush1.msra.mxu0 %v145
        %227 = vmatprep.subr.mxu0 0.0
        %228 = vmatpush1.msra.mxu0 %v146
        %229 = vmatprep.subr.mxu0 0.0
        %230 = vmatpush1.msra.mxu0 %v147
        %231 = vmatprep.subr.mxu0 0.0
        %232 = vmatpush1.msra.mxu0 %v148
        %233 = vmatprep.subr.mxu0 0.0
        %234 = vmatpush1.msra.mxu0 0.0
        %235 = vmatprep.subr.mxu0 0.0
        %236 = vmatpush1.msra.mxu0 0.0
        %237 = vmatprep.subr.mxu0 0.0
        %238 = vmatpush1.msra.mxu0 0.0
        %239 = vmatprep.subr.mxu0 0.0
        %240 = vmatpush1.msra.mxu0 0.0
        %241 = vmatprep.subr.mxu0 0.0
        %242 = vmatpush1.msra.mxu0 0.0
        %243 = vmatprep.subr.mxu0 0.0
        %244 = vmatpush1.msra.mxu0 0.0
        %245 = vmatprep.subr.mxu0 0.0
        %246 = vmatpush1.msra.mxu0 0.0
        %247 = vmatprep.subr.mxu0 0.0
        %248 = vmatpush1.msra.mxu0 0.0
        %249 = vmatprep.subr.mxu0 0.0
        %250 = vmatpush1.msra.mxu0 0.0
        %251 = vmatprep.subr.mxu0 0.0
        %252 = vmatpush1.msra.mxu0 0.0
        %253 = vmatprep.subr.mxu0 0.0
        %254 = vmatpush1.msra.mxu0 0.0
        %255 = vmatprep.subr.mxu0 0.0
        %256 = vmatpush1.msra.mxu0 0.0
        %257 = vmatprep.subr.mxu0 0.0
        %258 = vmatpush1.msra.mxu0 0.0
        %259 = vmatprep.subr.mxu0 0.0
        %260 = vmatpush1.msra.mxu0 0.0
        %261 = vmatprep.subr.mxu0 0.0
        %262 = vmatpush1.msra.mxu0 0.0
        %263 = vmatprep.subr.mxu0 0.0
        %264 = vmatpush1.msra.mxu0 0.0
        %265 = vmatprep.subr.mxu0 0.0
        %266 = vmatpush1.msra.mxu0 0.0
        %267 = vmatprep.subr.mxu0 0.0
        %268 = vmatpush1.msra.mxu0 0.0
        %269 = vmatprep.subr.mxu0 0.0
        %270 = vmatpush1.msra.mxu0 0.0
        %271 = vmatprep.subr.mxu0 0.0
        %272 = vmatpush1.msra.mxu0 0.0
        %273 = vmatprep.subr.mxu0 0.0
        %274 = vmatpush1.msra.mxu0 0.0
        %275 = vmatprep.subr.mxu0 0.0
        %276 = vmatpush1.msra.mxu0 0.0
        %277 = vmatprep.subr.mxu0 0.0
        %278 = vmatpush1.msra.mxu0 0.0
        %279 = vmatprep.subr.mxu0 0.0
        %280 = vmatpush1.msra.mxu0 0.0
        %281 = vmatprep.subr.mxu0 0.0
        %282 = vmatpush1.msra.mxu0 0.0
        %283 = vmatprep.subr.mxu0 0.0
        %284 = vmatpush1.msra.mxu0 0.0
        %285 = vmatprep.subr.mxu0 0.0
        %286 = vmatpush1.msra.mxu0 0.0
        %287 = vmatprep.subr.mxu0 0.0
        %288 = vmatpush1.msra.mxu0 0.0
        %289 = vmatprep.mubr.f32.mxu0 0.0
        %290 = vmatmul.mubr.f32.gmra.mrb[0].mxu0 %v220
        %v291 = vpop.f32.mrb[0].mxu0
        %v292 = vadd.f32 %v218, %v291
        %v293 = vpop.f32.mrb[0].mxu0
        %294 = vmatprep.mubr.f32.mxu0 0.0
        %295 = vmatmul.mubr.f32.gmra.mrb[0].mxu0 %v223
        %v296 = vpop.f32.mrb[0].mxu0
        %v297 = vadd.f32 %v218, %v296
        %v298 = vpop.f32.mrb[0].mxu0
        %299 = vdwg.mxu0
        %302 = vrot.lane.b32.xlu0 %v292, 96
        %v303 = vpop.permute.xlu0 %302
        %304 = vrot.lane.b32.xlu0 %v297, 96
        %v305 = vpop.permute.xlu0 %304
        %vm306 = vcmask 64512
        %v307 = vsel %vm306, %v292, 0
        %v309 = vsel %vm306, %v297, 0
        %v311 = vsel %vm306, %v303, 0
        %v313 = vsel %vm306, %v305, 0
        %315 = vmatprep.subr.mxu0 0.0
        %316 = vmatpush1.xpose.msra.mxu0 %v311
        %317 = vmatprep.subr.mxu0 0.0
        %318 = vmatpush1.xpose.msra.mxu0 %v313
        %319 = vmatprep.subr.mxu0 0.0
        %320 = vmatpush1.xpose.msra.mxu0 0.0
        %321 = vmatprep.subr.mxu0 0.0
        %322 = vmatpush1.xpose.msra.mxu0 0.0
        %323 = vmatprep.subr.mxu0 0.0
        %324 = vmatpush1.xpose.msra.mxu0 0.0
        %325 = vmatprep.subr.mxu0 0.0
        %326 = vmatpush1.xpose.msra.mxu0 0.0
        %327 = vmatprep.subr.mxu0 0.0
        %328 = vmatpush1.xpose.msra.mxu0 0.0
        %329 = vmatprep.subr.mxu0 0.0
        %330 = vmatpush1.xpose.msra.mxu0 0.0
        %331 = vmatprep.subr.mxu0 0.0
        %332 = vmatpush1.xpose.msra.mxu0 0.0
        %333 = vmatprep.subr.mxu0 0.0
        %334 = vmatpush1.xpose.msra.mxu0 0.0
        %335 = vmatprep.subr.mxu0 0.0
        %336 = vmatpush1.xpose.msra.mxu0 0.0
        %337 = vmatprep.subr.mxu0 0.0
        %338 = vmatpush1.xpose.msra.mxu0 0.0
        %339 = vmatprep.subr.mxu0 0.0
        %340 = vmatpush1.xpose.msra.mxu0 0.0
        %341 = vmatprep.subr.mxu0 0.0
        %342 = vmatpush1.xpose.msra.mxu0 0.0
        %343 = vmatprep.subr.mxu0 0.0
        %344 = vmatpush1.xpose.msra.mxu0 0.0
        %345 = vmatprep.subr.mxu0 0.0
        %346 = vmatpush1.xpose.msra.mxu0 0.0
        %347 = vmatprep.subr.mxu0 0.0
        %348 = vmatpush1.xpose.msra.mxu0 0.0
        %349 = vmatprep.subr.mxu0 0.0
        %350 = vmatpush1.xpose.msra.mxu0 0.0
        %351 = vmatprep.subr.mxu0 0.0
        %352 = vmatpush1.xpose.msra.mxu0 0.0
        %353 = vmatprep.subr.mxu0 0.0
        %354 = vmatpush1.xpose.msra.mxu0 0.0
        %355 = vmatprep.subr.mxu0 0.0
        %356 = vmatpush1.xpose.msra.mxu0 0.0
        %357 = vmatprep.subr.mxu0 0.0
        %358 = vmatpush1.xpose.msra.mxu0 0.0
        %359 = vmatprep.subr.mxu0 0.0
        %360 = vmatpush1.xpose.msra.mxu0 0.0
        %361 = vmatprep.subr.mxu0 0.0
        %362 = vmatpush1.xpose.msra.mxu0 0.0
        %363 = vmatprep.subr.mxu0 0.0
        %364 = vmatpush1.xpose.msra.mxu0 0.0
        %365 = vmatprep.subr.mxu0 0.0
        %366 = vmatpush1.xpose.msra.mxu0 0.0
        %367 = vmatprep.subr.mxu0 0.0
        %368 = vmatpush1.xpose.msra.mxu0 0.0
        %369 = vmatprep.subr.mxu0 0.0
        %370 = vmatpush1.xpose.msra.mxu0 0.0
        %371 = vmatprep.subr.mxu0 0.0
        %372 = vmatpush1.xpose.msra.mxu0 0.0
        %373 = vmatprep.subr.mxu0 0.0
        %374 = vmatpush1.xpose.msra.mxu0 0.0
        %375 = vmatprep.subr.mxu0 0.0
        %376 = vmatpush1.xpose.msra.mxu0 0.0
        %377 = vmatprep.subr.mxu0 0.0
        %378 = vmatpush1.xpose.msra.mxu0 0.0
        %379 = vmatprep.mubr.f32.mxu0 0.0
        %380 = vmatmul.mubr.f32.gmra.mrb[0].mxu0 %v307
        %v381 = vpop.f32.mrb[0].mxu0
        %v382 = vadd.f32 0.0, %v381
        %v383 = vpop.f32.mrb[0].mxu0
        %384 = vmatprep.mubr.f32.mxu0 0.0
        %385 = vmatmul.mubr.f32.gmra.mrb[0].mxu0 %v309
        %v386 = vpop.f32.mrb[0].mxu0
        %v387 = vadd.f32 0.0, %v386
        %v388 = vpop.f32.mrb[0].mxu0
        %389 = vdwg.mxu0
        %vm390 = vcmask 130048
        %v391 = vsel %vm390, %v382, -inf
        %392 = vmax.xlane.f32.xlu0 %v391
        %v393 = vpop.xlane.xlu0 %392
        %v394 = vsel %vm390, %v387, -inf
        %395 = vmax.xlane.f32.xlu0 %v394
        %v396 = vpop.xlane.xlu0 %395
        %v397 = vsub.f32 %v382, %v393
        %v398 = vsub.f32 %v387, %v396
        %v399 = vmul.f32 %v397, 1.442695
        %v400 = vpow.pop %v399
        %v401 = vmul.f32 %v398, 1.442695
        %v402 = vpow.pop %v401
        %v403 = vsel %vm390, %v400, 0.0
        %404 = vadd.xlane.f32.xlu0 %v403
        %v405 = vpop.xlane.xlu0 %404
        %v406 = vsel %vm390, %v402, 0.0
        %407 = vadd.xlane.f32.xlu0 %v406
        %v408 = vpop.xlane.xlu0 %407
        %v409 = vrcp.pop %v405
        %v410 = vrcp.pop %v408
        %v411 = vmul.f32 %v400, %v409
        %v412 = vmul.f32 %v402, %v410
        %413 = vrot.lane.b32.xlu0 %v292, 64
        %v414 = vpop.permute.xlu0 %413
        %415 = vrot.lane.b32.xlu0 %v297, 64
        %v416 = vpop.permute.xlu0 %415
        %v420 = vsel %vm390, %v411, 0
        %v423 = vsel %vm390, %v412, 0
        %425 = vmatprep.subr.mxu0 0.0
        %426 = vmatpush1.msra.mxu0 %v414
        %427 = vmatprep.subr.mxu0 0.0
        %428 = vmatpush1.msra.mxu0 %v416
        %429 = vmatprep.subr.mxu0 0.0
        %430 = vmatpush1.msra.mxu0 0.0
        %431 = vmatprep.subr.mxu0 0.0
        %432 = vmatpush1.msra.mxu0 0.0
        %433 = vmatprep.subr.mxu0 0.0
        %434 = vmatpush1.msra.mxu0 0.0
        %435 = vmatprep.subr.mxu0 0.0
        %436 = vmatpush1.msra.mxu0 0.0
        %437 = vmatprep.subr.mxu0 0.0
        %438 = vmatpush1.msra.mxu0 0.0
        %439 = vmatprep.subr.mxu0 0.0
        %440 = vmatpush1.msra.mxu0 0.0
        %441 = vmatprep.subr.mxu0 0.0
        %442 = vmatpush1.msra.mxu0 0.0
        %443 = vmatprep.subr.mxu0 0.0
        %444 = vmatpush1.msra.mxu0 0.0
        %445 = vmatprep.subr.mxu0 0.0
        %446 = vmatpush1.msra.mxu0 0.0
        %447 = vmatprep.subr.mxu0 0.0
        %448 = vmatpush1.msra.mxu0 0.0
        %449 = vmatprep.subr.mxu0 0.0
        %450 = vmatpush1.msra.mxu0 0.0
        %451 = vmatprep.subr.mxu0 0.0
        %452 = vmatpush1.msra.mxu0 0.0
        %453 = vmatprep.subr.mxu0 0.0
        %454 = vmatpush1.msra.mxu0 0.0
        %455 = vmatprep.subr.mxu0 0.0
        %456 = vmatpush1.msra.mxu0 0.0
        %457 = vmatprep.subr.mxu0 0.0
        %458 = vmatpush1.msra.mxu0 0.0
        %459 = vmatprep.subr.mxu0 0.0
        %460 = vmatpush1.msra.mxu0 0.0
        %461 = vmatprep.subr.mxu0 0.0
        %462 = vmatpush1.msra.mxu0 0.0
        %463 = vmatprep.subr.mxu0 0.0
        %464 = vmatpush1.msra.mxu0 0.0
        %465 = vmatprep.subr.mxu0 0.0
        %466 = vmatpush1.msra.mxu0 0.0
        %467 = vmatprep.subr.mxu0 0.0
        %468 = vmatpush1.msra.mxu0 0.0
        %469 = vmatprep.subr.mxu0 0.0
        %470 = vmatpush1.msra.mxu0 0.0
        %471 = vmatprep.subr.mxu0 0.0
        %472 = vmatpush1.msra.mxu0 0.0
        %473 = vmatprep.subr.mxu0 0.0
        %474 = vmatpush1.msra.mxu0 0.0
        %475 = vmatprep.subr.mxu0 0.0
        %476 = vmatpush1.msra.mxu0 0.0
        %477 = vmatprep.subr.mxu0 0.0
        %478 = vmatpush1.msra.mxu0 0.0
        %479 = vmatprep.subr.mxu0 0.0
        %480 = vmatpush1.msra.mxu0 0.0
        %481 = vmatprep.subr.mxu0 0.0
        %482 = vmatpush1.msra.mxu0 0.0
        %483 = vmatprep.subr.mxu0 0.0
        %484 = vmatpush1.msra.mxu0 0.0
        %485 = vmatprep.subr.mxu0 0.0
        %486 = vmatpush1.msra.mxu0 0.0
        %487 = vmatprep.subr.mxu0 0.0
        %488 = vmatpush1.msra.mxu0 0.0
        %489 = vmatprep.mubr.f32.mxu0 0.0
        %490 = vmatmul.mubr.f32.gmra.mrb[0].mxu0 %v420
        %v491 = vpop.f32.mrb[0].mxu0
        %v492 = vadd.f32 0.0, %v491
        %v493 = vpop.f32.mrb[0].mxu0
        %494 = vmatprep.mubr.f32.mxu0 0.0
        %495 = vmatmul.mubr.f32.gmra.mrb[0].mxu0 %v423
        %v496 = vpop.f32.mrb[0].mxu0
        %v497 = vadd.f32 0.0, %v496
        %v498 = vpop.f32.mrb[0].mxu0
        %499 = vdwg.mxu0
        %500 = vrot.lane.b32.xlu0 %v292, 120
        %v501 = vpop.permute.xlu0 %500
        %502 = vrot.lane.b32.xlu0 %v297, 120
        %v503 = vpop.permute.xlu0 %502
        %504 = vrot.lane.b32.xlu0 %v292, 88
        %v505 = vpop.permute.xlu0 %504
        %506 = vrot.lane.b32.xlu0 %v297, 88
        %v507 = vpop.permute.xlu0 %506
        %v508 = vsel %vm306, %v501, 0
        %v510 = vsel %vm306, %v503, 0
        %v512 = vsel %vm306, %v505, 0
        %v514 = vsel %vm306, %v507, 0
        %516 = vmatprep.subr.mxu0 0.0
        %517 = vmatpush1.xpose.msra.mxu0 %v512
        %518 = vmatprep.subr.mxu0 0.0
        %519 = vmatpush1.xpose.msra.mxu0 %v514
        %520 = vmatprep.subr.mxu0 0.0
        %521 = vmatpush1.xpose.msra.mxu0 0.0
        %522 = vmatprep.subr.mxu0 0.0
        %523 = vmatpush1.xpose.msra.mxu0 0.0
        %524 = vmatprep.subr.mxu0 0.0
        %525 = vmatpush1.xpose.msra.mxu0 0.0
        %526 = vmatprep.subr.mxu0 0.0
        %527 = vmatpush1.xpose.msra.mxu0 0.0
        %528 = vmatprep.subr.mxu0 0.0
        %529 = vmatpush1.xpose.msra.mxu0 0.0
        %530 = vmatprep.subr.mxu0 0.0
        %531 = vmatpush1.xpose.msra.mxu0 0.0
        %532 = vmatprep.subr.mxu0 0.0
        %533 = vmatpush1.xpose.msra.mxu0 0.0
        %534 = vmatprep.subr.mxu0 0.0
        %535 = vmatpush1.xpose.msra.mxu0 0.0
        %536 = vmatprep.subr.mxu0 0.0
        %537 = vmatpush1.xpose.msra.mxu0 0.0
        %538 = vmatprep.subr.mxu0 0.0
        %539 = vmatpush1.xpose.msra.mxu0 0.0
        %540 = vmatprep.subr.mxu0 0.0
        %541 = vmatpush1.xpose.msra.mxu0 0.0
        %542 = vmatprep.subr.mxu0 0.0
        %543 = vmatpush1.xpose.msra.mxu0 0.0
        %544 = vmatprep.subr.mxu0 0.0
        %545 = vmatpush1.xpose.msra.mxu0 0.0
        %546 = vmatprep.subr.mxu0 0.0
        %547 = vmatpush1.xpose.msra.mxu0 0.0
        %548 = vmatprep.subr.mxu0 0.0
        %549 = vmatpush1.xpose.msra.mxu0 0.0
        %550 = vmatprep.subr.mxu0 0.0
        %551 = vmatpush1.xpose.msra.mxu0 0.0
        %552 = vmatprep.subr.mxu0 0.0
        %553 = vmatpush1.xpose.msra.mxu0 0.0
        %554 = vmatprep.subr.mxu0 0.0
        %555 = vmatpush1.xpose.msra.mxu0 0.0
        %556 = vmatprep.subr.mxu0 0.0
        %557 = vmatpush1.xpose.msra.mxu0 0.0
        %558 = vmatprep.subr.mxu0 0.0
        %559 = vmatpush1.xpose.msra.mxu0 0.0
        %560 = vmatprep.subr.mxu0 0.0
        %561 = vmatpush1.xpose.msra.mxu0 0.0
        %562 = vmatprep.subr.mxu0 0.0
        %563 = vmatpush1.xpose.msra.mxu0 0.0
        %564 = vmatprep.subr.mxu0 0.0
        %565 = vmatpush1.xpose.msra.mxu0 0.0
        %566 = vmatprep.subr.mxu0 0.0
        %567 = vmatpush1.xpose.msra.mxu0 0.0
        %568 = vmatprep.subr.mxu0 0.0
        %569 = vmatpush1.xpose.msra.mxu0 0.0
        %570 = vmatprep.subr.mxu0 0.0
        %571 = vmatpush1.xpose.msra.mxu0 0.0
        %572 = vmatprep.subr.mxu0 0.0
        %573 = vmatpush1.xpose.msra.mxu0 0.0
        %574 = vmatprep.subr.mxu0 0.0
        %575 = vmatpush1.xpose.msra.mxu0 0.0
        %576 = vmatprep.subr.mxu0 0.0
        %577 = vmatpush1.xpose.msra.mxu0 0.0
        %578 = vmatprep.subr.mxu0 0.0
        %579 = vmatpush1.xpose.msra.mxu0 0.0
        %580 = vmatprep.mubr.f32.mxu0 0.0
        %581 = vmatmul.mubr.f32.gmra.mrb[0].mxu0 %v508
        %v582 = vpop.f32.mrb[0].mxu0
        %v583 = vadd.f32 0.0, %v582
        %v584 = vpop.f32.mrb[0].mxu0
        %585 = vmatprep.mubr.f32.mxu0 0.0
        %586 = vmatmul.mubr.f32.gmra.mrb[0].mxu0 %v510
        %v587 = vpop.f32.mrb[0].mxu0
        %v588 = vadd.f32 0.0, %v587
        %v589 = vpop.f32.mrb[0].mxu0
        %590 = vdwg.mxu0
        %v591 = vsel %vm390, %v583, -inf
        %592 = vmax.xlane.f32.xlu0 %v591
        %v593 = vpop.xlane.xlu0 %592
        %v594 = vsel %vm390, %v588, -inf
        %595 = vmax.xlane.f32.xlu0 %v594
        %v596 = vpop.xlane.xlu0 %595
        %v597 = vsub.f32 %v583, %v593
        %v598 = vsub.f32 %v588, %v596
        %v599 = vmul.f32 %v597, 1.442695
        %v600 = vpow.pop %v599
        %v601 = vmul.f32 %v598, 1.442695
        %v602 = vpow.pop %v601
        %v603 = vsel %vm390, %v600, 0.0
        %604 = vadd.xlane.f32.xlu0 %v603
        %v605 = vpop.xlane.xlu0 %604
        %v606 = vsel %vm390, %v602, 0.0
        %607 = vadd.xlane.f32.xlu0 %v606
        %v608 = vpop.xlane.xlu0 %607
        %v609 = vrcp.pop %v605
        %v610 = vrcp.pop %v608
        %v611 = vmul.f32 %v600, %v609
        %v612 = vmul.f32 %v602, %v610
        %613 = vrot.lane.b32.xlu0 %v292, 56
        %v614 = vpop.permute.xlu0 %613
        %615 = vrot.lane.b32.xlu0 %v297, 56
        %v616 = vpop.permute.xlu0 %615
        %v620 = vsel %vm390, %v611, 0
        %v623 = vsel %vm390, %v612, 0
        %625 = vmatprep.subr.mxu0 0.0
        %626 = vmatpush1.msra.mxu0 %v614
        %627 = vmatprep.subr.mxu0 0.0
        %628 = vmatpush1.msra.mxu0 %v616
        %629 = vmatprep.subr.mxu0 0.0
        %630 = vmatpush1.msra.mxu0 0.0
        %631 = vmatprep.subr.mxu0 0.0
        %632 = vmatpush1.msra.mxu0 0.0
        %633 = vmatprep.subr.mxu0 0.0
        %634 = vmatpush1.msra.mxu0 0.0
        %635 = vmatprep.subr.mxu0 0.0
        %636 = vmatpush1.msra.mxu0 0.0
        %637 = vmatprep.subr.mxu0 0.0
        %638 = vmatpush1.msra.mxu0 0.0
        %639 = vmatprep.subr.mxu0 0.0
        %640 = vmatpush1.msra.mxu0 0.0
        %641 = vmatprep.subr.mxu0 0.0
        %642 = vmatpush1.msra.mxu0 0.0
        %643 = vmatprep.subr.mxu0 0.0
        %644 = vmatpush1.msra.mxu0 0.0
        %645 = vmatprep.subr.mxu0 0.0
        %646 = vmatpush1.msra.mxu0 0.0
        %647 = vmatprep.subr.mxu0 0.0
        %648 = vmatpush1.msra.mxu0 0.0
        %649 = vmatprep.subr.mxu0 0.0
        %650 = vmatpush1.msra.mxu0 0.0
        %651 = vmatprep.subr.mxu0 0.0
        %652 = vmatpush1.msra.mxu0 0.0
        %653 = vmatprep.subr.mxu0 0.0
        %654 = vmatpush1.msra.mxu0 0.0
        %655 = vmatprep.subr.mxu0 0.0
        %656 = vmatpush1.msra.mxu0 0.0
        %657 = vmatprep.subr.mxu0 0.0
        %658 = vmatpush1.msra.mxu0 0.0
        %659 = vmatprep.subr.mxu0 0.0
        %660 = vmatpush1.msra.mxu0 0.0
        %661 = vmatprep.subr.mxu0 0.0
        %662 = vmatpush1.msra.mxu0 0.0
        %663 = vmatprep.subr.mxu0 0.0
        %664 = vmatpush1.msra.mxu0 0.0
        %665 = vmatprep.subr.mxu0 0.0
        %666 = vmatpush1.msra.mxu0 0.0
        %667 = vmatprep.subr.mxu0 0.0
        %668 = vmatpush1.msra.mxu0 0.0
        %669 = vmatprep.subr.mxu0 0.0
        %670 = vmatpush1.msra.mxu0 0.0
        %671 = vmatprep.subr.mxu0 0.0
        %672 = vmatpush1.msra.mxu0 0.0
        %673 = vmatprep.subr.mxu0 0.0
        %674 = vmatpush1.msra.mxu0 0.0
        %675 = vmatprep.subr.mxu0 0.0
        %676 = vmatpush1.msra.mxu0 0.0
        %677 = vmatprep.subr.mxu0 0.0
        %678 = vmatpush1.msra.mxu0 0.0
        %679 = vmatprep.subr.mxu0 0.0
        %680 = vmatpush1.msra.mxu0 0.0
        %681 = vmatprep.subr.mxu0 0.0
        %682 = vmatpush1.msra.mxu0 0.0
        %683 = vmatprep.subr.mxu0 0.0
        %684 = vmatpush1.msra.mxu0 0.0
        %685 = vmatprep.subr.mxu0 0.0
        %686 = vmatpush1.msra.mxu0 0.0
        %687 = vmatprep.subr.mxu0 0.0
        %688 = vmatpush1.msra.mxu0 0.0
        %689 = vmatprep.mubr.f32.mxu0 0.0
        %690 = vmatmul.mubr.f32.gmra.mrb[0].mxu0 %v620
        %v691 = vpop.f32.mrb[0].mxu0
        %v692 = vadd.f32 0.0, %v691
        %v693 = vpop.f32.mrb[0].mxu0
        %694 = vmatprep.mubr.f32.mxu0 0.0
        %695 = vmatmul.mubr.f32.gmra.mrb[0].mxu0 %v623
        %v696 = vpop.f32.mrb[0].mxu0
        %v697 = vadd.f32 0.0, %v696
        %v698 = vpop.f32.mrb[0].mxu0
        %699 = vdwg.mxu0
        %700 = vrot.lane.b32.xlu0 %v292, 112
        %v701 = vpop.permute.xlu0 %700
        %702 = vrot.lane.b32.xlu0 %v297, 112
        %v703 = vpop.permute.xlu0 %702
        %704 = vrot.lane.b32.xlu0 %v292, 80
        %v705 = vpop.permute.xlu0 %704
        %706 = vrot.lane.b32.xlu0 %v297, 80
        %v707 = vpop.permute.xlu0 %706
        %v708 = vsel %vm306, %v701, 0
        %v710 = vsel %vm306, %v703, 0
        %v712 = vsel %vm306, %v705, 0
        %v714 = vsel %vm306, %v707, 0
        %716 = vmatprep.subr.mxu0 0.0
        %717 = vmatpush1.xpose.msra.mxu0 %v712
        %718 = vmatprep.subr.mxu0 0.0
        %719 = vmatpush1.xpose.msra.mxu0 %v714
        %720 = vmatprep.subr.mxu0 0.0
        %721 = vmatpush1.xpose.msra.mxu0 0.0
        %722 = vmatprep.subr.mxu0 0.0
        %723 = vmatpush1.xpose.msra.mxu0 0.0
        %724 = vmatprep.subr.mxu0 0.0
        %725 = vmatpush1.xpose.msra.mxu0 0.0
        %726 = vmatprep.subr.mxu0 0.0
        %727 = vmatpush1.xpose.msra.mxu0 0.0
        %728 = vmatprep.subr.mxu0 0.0
        %729 = vmatpush1.xpose.msra.mxu0 0.0
        %730 = vmatprep.subr.mxu0 0.0
        %731 = vmatpush1.xpose.msra.mxu0 0.0
        %732 = vmatprep.subr.mxu0 0.0
        %733 = vmatpush1.xpose.msra.mxu0 0.0
        %734 = vmatprep.subr.mxu0 0.0
        %735 = vmatpush1.xpose.msra.mxu0 0.0
        %736 = vmatprep.subr.mxu0 0.0
        %737 = vmatpush1.xpose.msra.mxu0 0.0
        %738 = vmatprep.subr.mxu0 0.0
        %739 = vmatpush1.xpose.msra.mxu0 0.0
        %740 = vmatprep.subr.mxu0 0.0
        %741 = vmatpush1.xpose.msra.mxu0 0.0
        %742 = vmatprep.subr.mxu0 0.0
        %743 = vmatpush1.xpose.msra.mxu0 0.0
        %744 = vmatprep.subr.mxu0 0.0
        %745 = vmatpush1.xpose.msra.mxu0 0.0
        %746 = vmatprep.subr.mxu0 0.0
        %747 = vmatpush1.xpose.msra.mxu0 0.0
        %748 = vmatprep.subr.mxu0 0.0
        %749 = vmatpush1.xpose.msra.mxu0 0.0
        %750 = vmatprep.subr.mxu0 0.0
        %751 = vmatpush1.xpose.msra.mxu0 0.0
        %752 = vmatprep.subr.mxu0 0.0
        %753 = vmatpush1.xpose.msra.mxu0 0.0
        %754 = vmatprep.subr.mxu0 0.0
        %755 = vmatpush1.xpose.msra.mxu0 0.0
        %756 = vmatprep.subr.mxu0 0.0
        %757 = vmatpush1.xpose.msra.mxu0 0.0
        %758 = vmatprep.subr.mxu0 0.0
        %759 = vmatpush1.xpose.msra.mxu0 0.0
        %760 = vmatprep.subr.mxu0 0.0
        %761 = vmatpush1.xpose.msra.mxu0 0.0
        %762 = vmatprep.subr.mxu0 0.0
        %763 = vmatpush1.xpose.msra.mxu0 0.0
        %764 = vmatprep.subr.mxu0 0.0
        %765 = vmatpush1.xpose.msra.mxu0 0.0
        %766 = vmatprep.subr.mxu0 0.0
        %767 = vmatpush1.xpose.msra.mxu0 0.0
        %768 = vmatprep.subr.mxu0 0.0
        %769 = vmatpush1.xpose.msra.mxu0 0.0
        %770 = vmatprep.subr.mxu0 0.0
        %771 = vmatpush1.xpose.msra.mxu0 0.0
        %772 = vmatprep.subr.mxu0 0.0
        %773 = vmatpush1.xpose.msra.mxu0 0.0
        %774 = vmatprep.subr.mxu0 0.0
        %775 = vmatpush1.xpose.msra.mxu0 0.0
        %776 = vmatprep.subr.mxu0 0.0
        %777 = vmatpush1.xpose.msra.mxu0 0.0
        %778 = vmatprep.subr.mxu0 0.0
        %779 = vmatpush1.xpose.msra.mxu0 0.0
        %780 = vmatprep.mubr.f32.mxu0 0.0
        %781 = vmatmul.mubr.f32.gmra.mrb[0].mxu0 %v708
        %v782 = vpop.f32.mrb[0].mxu0
        %v783 = vadd.f32 0.0, %v782
        %v784 = vpop.f32.mrb[0].mxu0
        %785 = vmatprep.mubr.f32.mxu0 0.0
        %786 = vmatmul.mubr.f32.gmra.mrb[0].mxu0 %v710
        %v787 = vpop.f32.mrb[0].mxu0
        %v788 = vadd.f32 0.0, %v787
        %v789 = vpop.f32.mrb[0].mxu0
        %790 = vdwg.mxu0
        %v791 = vsel %vm390, %v783, -inf
        %792 = vmax.xlane.f32.xlu0 %v791
        %v793 = vpop.xlane.xlu0 %792
        %v794 = vsel %vm390, %v788, -inf
        %795 = vmax.xlane.f32.xlu0 %v794
        %v796 = vpop.xlane.xlu0 %795
        %v797 = vsub.f32 %v783, %v793
        %v798 = vsub.f32 %v788, %v796
        %v799 = vmul.f32 %v797, 1.442695
        %v800 = vpow.pop %v799
        %v801 = vmul.f32 %v798, 1.442695
        %v802 = vpow.pop %v801
        %v803 = vsel %vm390, %v800, 0.0
        %804 = vadd.xlane.f32.xlu0 %v803
        %v805 = vpop.xlane.xlu0 %804
        %v806 = vsel %vm390, %v802, 0.0
        %807 = vadd.xlane.f32.xlu0 %v806
        %v808 = vpop.xlane.xlu0 %807
        %v809 = vrcp.pop %v805
        %v810 = vrcp.pop %v808
        %v811 = vmul.f32 %v800, %v809
        %v812 = vmul.f32 %v802, %v810
        %813 = vrot.lane.b32.xlu0 %v292, 48
        %v814 = vpop.permute.xlu0 %813
        %815 = vrot.lane.b32.xlu0 %v297, 48
        %v816 = vpop.permute.xlu0 %815
        %v820 = vsel %vm390, %v811, 0
        %v823 = vsel %vm390, %v812, 0
        %825 = vmatprep.subr.mxu0 0.0
        %826 = vmatpush1.msra.mxu0 %v814
        %827 = vmatprep.subr.mxu0 0.0
        %828 = vmatpush1.msra.mxu0 %v816
        %829 = vmatprep.subr.mxu0 0.0
        %830 = vmatpush1.msra.mxu0 0.0
        %831 = vmatprep.subr.mxu0 0.0
        %832 = vmatpush1.msra.mxu0 0.0
        %833 = vmatprep.subr.mxu0 0.0
        %834 = vmatpush1.msra.mxu0 0.0
        %835 = vmatprep.subr.mxu0 0.0
        %836 = vmatpush1.msra.mxu0 0.0
        %837 = vmatprep.subr.mxu0 0.0
        %838 = vmatpush1.msra.mxu0 0.0
        %839 = vmatprep.subr.mxu0 0.0
        %840 = vmatpush1.msra.mxu0 0.0
        %841 = vmatprep.subr.mxu0 0.0
        %842 = vmatpush1.msra.mxu0 0.0
        %843 = vmatprep.subr.mxu0 0.0
        %844 = vmatpush1.msra.mxu0 0.0
        %845 = vmatprep.subr.mxu0 0.0
        %846 = vmatpush1.msra.mxu0 0.0
        %847 = vmatprep.subr.mxu0 0.0
        %848 = vmatpush1.msra.mxu0 0.0
        %849 = vmatprep.subr.mxu0 0.0
        %850 = vmatpush1.msra.mxu0 0.0
        %851 = vmatprep.subr.mxu0 0.0
        %852 = vmatpush1.msra.mxu0 0.0
        %853 = vmatprep.subr.mxu0 0.0
        %854 = vmatpush1.msra.mxu0 0.0
        %855 = vmatprep.subr.mxu0 0.0
        %856 = vmatpush1.msra.mxu0 0.0
        %857 = vmatprep.subr.mxu0 0.0
        %858 = vmatpush1.msra.mxu0 0.0
        %859 = vmatprep.subr.mxu0 0.0
        %860 = vmatpush1.msra.mxu0 0.0
        %861 = vmatprep.subr.mxu0 0.0
        %862 = vmatpush1.msra.mxu0 0.0
        %863 = vmatprep.subr.mxu0 0.0
        %864 = vmatpush1.msra.mxu0 0.0
        %865 = vmatprep.subr.mxu0 0.0
        %866 = vmatpush1.msra.mxu0 0.0
        %867 = vmatprep.subr.mxu0 0.0
        %868 = vmatpush1.msra.mxu0 0.0
        %869 = vmatprep.subr.mxu0 0.0
        %870 = vmatpush1.msra.mxu0 0.0
        %871 = vmatprep.subr.mxu0 0.0
        %872 = vmatpush1.msra.mxu0 0.0
        %873 = vmatprep.subr.mxu0 0.0
        %874 = vmatpush1.msra.mxu0 0.0
        %875 = vmatprep.subr.mxu0 0.0
        %876 = vmatpush1.msra.mxu0 0.0
        %877 = vmatprep.subr.mxu0 0.0
        %878 = vmatpush1.msra.mxu0 0.0
        %879 = vmatprep.subr.mxu0 0.0
        %880 = vmatpush1.msra.mxu0 0.0
        %881 = vmatprep.subr.mxu0 0.0
        %882 = vmatpush1.msra.mxu0 0.0
        %883 = vmatprep.subr.mxu0 0.0
        %884 = vmatpush1.msra.mxu0 0.0
        %885 = vmatprep.subr.mxu0 0.0
        %886 = vmatpush1.msra.mxu0 0.0
        %887 = vmatprep.subr.mxu0 0.0
        %888 = vmatpush1.msra.mxu0 0.0
        %889 = vmatprep.mubr.f32.mxu0 0.0
        %890 = vmatmul.mubr.f32.gmra.mrb[0].mxu0 %v820
        %v891 = vpop.f32.mrb[0].mxu0
        %v892 = vadd.f32 0.0, %v891
        %v893 = vpop.f32.mrb[0].mxu0
        %894 = vmatprep.mubr.f32.mxu0 0.0
        %895 = vmatmul.mubr.f32.gmra.mrb[0].mxu0 %v823
        %v896 = vpop.f32.mrb[0].mxu0
        %v897 = vadd.f32 0.0, %v896
        %v898 = vpop.f32.mrb[0].mxu0
        %899 = vdwg.mxu0
        %900 = vrot.lane.b32.xlu0 %v292, 104
        %v901 = vpop.permute.xlu0 %900
        %902 = vrot.lane.b32.xlu0 %v297, 104
        %v903 = vpop.permute.xlu0 %902
        %904 = vrot.lane.b32.xlu0 %v292, 72
        %v905 = vpop.permute.xlu0 %904
        %906 = vrot.lane.b32.xlu0 %v297, 72
        %v907 = vpop.permute.xlu0 %906
        %v908 = vsel %vm306, %v901, 0
        %v910 = vsel %vm306, %v903, 0
        %v912 = vsel %vm306, %v905, 0
        %v914 = vsel %vm306, %v907, 0
        %916 = vmatprep.subr.mxu0 0.0
        %917 = vmatpush1.xpose.msra.mxu0 %v912
        %918 = vmatprep.subr.mxu0 0.0
        %919 = vmatpush1.xpose.msra.mxu0 %v914
        %920 = vmatprep.subr.mxu0 0.0
        %921 = vmatpush1.xpose.msra.mxu0 0.0
        %922 = vmatprep.subr.mxu0 0.0
        %923 = vmatpush1.xpose.msra.mxu0 0.0
        %924 = vmatprep.subr.mxu0 0.0
        %925 = vmatpush1.xpose.msra.mxu0 0.0
        %926 = vmatprep.subr.mxu0 0.0
        %927 = vmatpush1.xpose.msra.mxu0 0.0
        %928 = vmatprep.subr.mxu0 0.0
        %929 = vmatpush1.xpose.msra.mxu0 0.0
        %930 = vmatprep.subr.mxu0 0.0
        %931 = vmatpush1.xpose.msra.mxu0 0.0
        %932 = vmatprep.subr.mxu0 0.0
        %933 = vmatpush1.xpose.msra.mxu0 0.0
        %934 = vmatprep.subr.mxu0 0.0
        %935 = vmatpush1.xpose.msra.mxu0 0.0
        %936 = vmatprep.subr.mxu0 0.0
        %937 = vmatpush1.xpose.msra.mxu0 0.0
        %938 = vmatprep.subr.mxu0 0.0
        %939 = vmatpush1.xpose.msra.mxu0 0.0
        %940 = vmatprep.subr.mxu0 0.0
        %941 = vmatpush1.xpose.msra.mxu0 0.0
        %942 = vmatprep.subr.mxu0 0.0
        %943 = vmatpush1.xpose.msra.mxu0 0.0
        %944 = vmatprep.subr.mxu0 0.0
        %945 = vmatpush1.xpose.msra.mxu0 0.0
        %946 = vmatprep.subr.mxu0 0.0
        %947 = vmatpush1.xpose.msra.mxu0 0.0
        %948 = vmatprep.subr.mxu0 0.0
        %949 = vmatpush1.xpose.msra.mxu0 0.0
        %950 = vmatprep.subr.mxu0 0.0
        %951 = vmatpush1.xpose.msra.mxu0 0.0
        %952 = vmatprep.subr.mxu0 0.0
        %953 = vmatpush1.xpose.msra.mxu0 0.0
        %954 = vmatprep.subr.mxu0 0.0
        %955 = vmatpush1.xpose.msra.mxu0 0.0
        %956 = vmatprep.subr.mxu0 0.0
        %957 = vmatpush1.xpose.msra.mxu0 0.0
        %958 = vmatprep.subr.mxu0 0.0
        %959 = vmatpush1.xpose.msra.mxu0 0.0
        %960 = vmatprep.subr.mxu0 0.0
        %961 = vmatpush1.xpose.msra.mxu0 0.0
        %962 = vmatprep.subr.mxu0 0.0
        %963 = vmatpush1.xpose.msra.mxu0 0.0
        %964 = vmatprep.subr.mxu0 0.0
        %965 = vmatpush1.xpose.msra.mxu0 0.0
        %966 = vmatprep.subr.mxu0 0.0
        %967 = vmatpush1.xpose.msra.mxu0 0.0
        %968 = vmatprep.subr.mxu0 0.0
        %969 = vmatpush1.xpose.msra.mxu0 0.0
        %970 = vmatprep.subr.mxu0 0.0
        %971 = vmatpush1.xpose.msra.mxu0 0.0
        %972 = vmatprep.subr.mxu0 0.0
        %973 = vmatpush1.xpose.msra.mxu0 0.0
        %974 = vmatprep.subr.mxu0 0.0
        %975 = vmatpush1.xpose.msra.mxu0 0.0
        %976 = vmatprep.subr.mxu0 0.0
        %977 = vmatpush1.xpose.msra.mxu0 0.0
        %978 = vmatprep.subr.mxu0 0.0
        %979 = vmatpush1.xpose.msra.mxu0 0.0
        %980 = vmatprep.mubr.f32.mxu0 0.0
        %981 = vmatmul.mubr.f32.gmra.mrb[0].mxu0 %v908
        %v982 = vpop.f32.mrb[0].mxu0
        %v983 = vadd.f32 0.0, %v982
        %v984 = vpop.f32.mrb[0].mxu0
        %985 = vmatprep.mubr.f32.mxu0 0.0
        %986 = vmatmul.mubr.f32.gmra.mrb[0].mxu0 %v910
        %v987 = vpop.f32.mrb[0].mxu0
        %v988 = vadd.f32 0.0, %v987
        %v989 = vpop.f32.mrb[0].mxu0
        %990 = vdwg.mxu0
        %v991 = vsel %vm390, %v983, -inf
        %992 = vmax.xlane.f32.xlu0 %v991
        %v993 = vpop.xlane.xlu0 %992
        %v994 = vsel %vm390, %v988, -inf
        %995 = vmax.xlane.f32.xlu0 %v994
        %v996 = vpop.xlane.xlu0 %995
        %v997 = vsub.f32 %v983, %v993
        %v998 = vsub.f32 %v988, %v996
        %v999 = vmul.f32 %v997, 1.442695
        %v1000 = vpow.pop %v999
        %v1001 = vmul.f32 %v998, 1.442695
        %v1002 = vpow.pop %v1001
        %v1003 = vsel %vm390, %v1000, 0.0
        %1004 = vadd.xlane.f32.xlu0 %v1003
        %v1005 = vpop.xlane.xlu0 %1004
        %v1006 = vsel %vm390, %v1002, 0.0
        %1007 = vadd.xlane.f32.xlu0 %v1006
        %v1008 = vpop.xlane.xlu0 %1007
        %v1009 = vrcp.pop %v1005
        %v1010 = vrcp.pop %v1008
        %v1011 = vmul.f32 %v1000, %v1009
        %v1012 = vmul.f32 %v1002, %v1010
        %1013 = vrot.lane.b32.xlu0 %v292, 40
        %v1014 = vpop.permute.xlu0 %1013
        %1015 = vrot.lane.b32.xlu0 %v297, 40
        %v1016 = vpop.permute.xlu0 %1015
        %v1020 = vsel %vm390, %v1011, 0
        %v1023 = vsel %vm390, %v1012, 0
        %1025 = vmatprep.subr.mxu0 0.0
        %1026 = vmatpush1.msra.mxu0 %v1014
        %1027 = vmatprep.subr.mxu0 0.0
        %1028 = vmatpush1.msra.mxu0 %v1016
        %1029 = vmatprep.subr.mxu0 0.0
        %1030 = vmatpush1.msra.mxu0 0.0
        %1031 = vmatprep.subr.mxu0 0.0
        %1032 = vmatpush1.msra.mxu0 0.0
        %1033 = vmatprep.subr.mxu0 0.0
        %1034 = vmatpush1.msra.mxu0 0.0
        %1035 = vmatprep.subr.mxu0 0.0
        %1036 = vmatpush1.msra.mxu0 0.0
        %1037 = vmatprep.subr.mxu0 0.0
        %1038 = vmatpush1.msra.mxu0 0.0
        %1039 = vmatprep.subr.mxu0 0.0
        %1040 = vmatpush1.msra.mxu0 0.0
        %1041 = vmatprep.subr.mxu0 0.0
        %1042 = vmatpush1.msra.mxu0 0.0
        %1043 = vmatprep.subr.mxu0 0.0
        %1044 = vmatpush1.msra.mxu0 0.0
        %1045 = vmatprep.subr.mxu0 0.0
        %1046 = vmatpush1.msra.mxu0 0.0
        %1047 = vmatprep.subr.mxu0 0.0
        %1048 = vmatpush1.msra.mxu0 0.0
        %1049 = vmatprep.subr.mxu0 0.0
        %1050 = vmatpush1.msra.mxu0 0.0
        %1051 = vmatprep.subr.mxu0 0.0
        %1052 = vmatpush1.msra.mxu0 0.0
        %1053 = vmatprep.subr.mxu0 0.0
        %1054 = vmatpush1.msra.mxu0 0.0
        %1055 = vmatprep.subr.mxu0 0.0
        %1056 = vmatpush1.msra.mxu0 0.0
        %1057 = vmatprep.subr.mxu0 0.0
        %1058 = vmatpush1.msra.mxu0 0.0
        %1059 = vmatprep.subr.mxu0 0.0
        %1060 = vmatpush1.msra.mxu0 0.0
        %1061 = vmatprep.subr.mxu0 0.0
        %1062 = vmatpush1.msra.mxu0 0.0
        %1063 = vmatprep.subr.mxu0 0.0
        %1064 = vmatpush1.msra.mxu0 0.0
        %1065 = vmatprep.subr.mxu0 0.0
        %1066 = vmatpush1.msra.mxu0 0.0
        %1067 = vmatprep.subr.mxu0 0.0
        %1068 = vmatpush1.msra.mxu0 0.0
        %1069 = vmatprep.subr.mxu0 0.0
        %1070 = vmatpush1.msra.mxu0 0.0
        %1071 = vmatprep.subr.mxu0 0.0
        %1072 = vmatpush1.msra.mxu0 0.0
        %1073 = vmatprep.subr.mxu0 0.0
        %1074 = vmatpush1.msra.mxu0 0.0
        %1075 = vmatprep.subr.mxu0 0.0
        %1076 = vmatpush1.msra.mxu0 0.0
        %1077 = vmatprep.subr.mxu0 0.0
        %1078 = vmatpush1.msra.mxu0 0.0
        %1079 = vmatprep.subr.mxu0 0.0
        %1080 = vmatpush1.msra.mxu0 0.0
        %1081 = vmatprep.subr.mxu0 0.0
        %1082 = vmatpush1.msra.mxu0 0.0
        %1083 = vmatprep.subr.mxu0 0.0
        %1084 = vmatpush1.msra.mxu0 0.0
        %1085 = vmatprep.subr.mxu0 0.0
        %1086 = vmatpush1.msra.mxu0 0.0
        %1087 = vmatprep.subr.mxu0 0.0
        %1088 = vmatpush1.msra.mxu0 0.0
        %1089 = vmatprep.mubr.f32.mxu0 0.0
        %1090 = vmatmul.mubr.f32.gmra.mrb[0].mxu0 %v1020
        %v1091 = vpop.f32.mrb[0].mxu0
        %v1092 = vadd.f32 0.0, %v1091
        %v1093 = vpop.f32.mrb[0].mxu0
        %1094 = vmatprep.mubr.f32.mxu0 0.0
        %1095 = vmatmul.mubr.f32.gmra.mrb[0].mxu0 %v1023
        %v1096 = vpop.f32.mrb[0].mxu0
        %v1097 = vadd.f32 0.0, %v1096
        %v1098 = vpop.f32.mrb[0].mxu0
        %1099 = vdwg.mxu0
        %1102 = vrot.lane.b32.xlu0 %v692, 8
        %v1103 = vpop.permute.xlu0 %1102
        %1104 = vrot.lane.b32.xlu0 %v697, 8
        %v1105 = vpop.permute.xlu0 %1104
        %1110 = vrot.lane.b32.xlu0 %v892, 16
        %v1111 = vpop.permute.xlu0 %1110
        %1112 = vrot.lane.b32.xlu0 %v897, 16
        %v1113 = vpop.permute.xlu0 %1112
        %1118 = vrot.lane.b32.xlu0 %v1092, 24
        %v1119 = vpop.permute.xlu0 %1118
        %1120 = vrot.lane.b32.xlu0 %v1097, 24
        %v1121 = vpop.permute.xlu0 %1120
        %v1124 = vsel %vm306, %v492, %v1103
        %v1125 = vsel %vm306, %v497, %v1105
        %v1126 = vsel %vm390, %v1124, %v1111
        %v1127 = vsel %vm390, %v1125, %v1113
        %vm1128 = vcmask 195584
        %v1129 = vsel %vm1128, %v1126, %v1119
        %v1130 = vsel %vm1128, %v1127, %v1121
        %v1131 = vlaneseq
        %v1132 = vshrl.u32 %v1131, 7
        %v1133 = vsub.s32 0, %v1132
        %v1134 = vrot.slane %v168, %v1133
        %v1136 = vsel %vm175, %v1129, 0
        %v1139 = vsel %vm175, %v1130, 0
        %1141 = vmatprep.subr.mxu0 0.0
        %1142 = vmatpush1.msra.mxu0 %v149
        %1143 = vmatprep.subr.mxu0 0.0
        %1144 = vmatpush1.msra.mxu0 %v150
        %1145 = vmatprep.subr.mxu0 0.0
        %1146 = vmatpush1.msra.mxu0 %v151
        %1147 = vmatprep.subr.mxu0 0.0
        %1148 = vmatpush1.msra.mxu0 %v152
        %1149 = vmatprep.subr.mxu0 0.0
        %1150 = vmatpush1.msra.mxu0 0.0
        %1151 = vmatprep.subr.mxu0 0.0
        %1152 = vmatpush1.msra.mxu0 0.0
        %1153 = vmatprep.subr.mxu0 0.0
        %1154 = vmatpush1.msra.mxu0 0.0
        %1155 = vmatprep.subr.mxu0 0.0
        %1156 = vmatpush1.msra.mxu0 0.0
        %1157 = vmatprep.subr.mxu0 0.0
        %1158 = vmatpush1.msra.mxu0 0.0
        %1159 = vmatprep.subr.mxu0 0.0
        %1160 = vmatpush1.msra.mxu0 0.0
        %1161 = vmatprep.subr.mxu0 0.0
        %1162 = vmatpush1.msra.mxu0 0.0
        %1163 = vmatprep.subr.mxu0 0.0
        %1164 = vmatpush1.msra.mxu0 0.0
        %1165 = vmatprep.subr.mxu0 0.0
        %1166 = vmatpush1.msra.mxu0 0.0
        %1167 = vmatprep.subr.mxu0 0.0
        %1168 = vmatpush1.msra.mxu0 0.0
        %1169 = vmatprep.subr.mxu0 0.0
        %1170 = vmatpush1.msra.mxu0 0.0
        %1171 = vmatprep.subr.mxu0 0.0
        %1172 = vmatpush1.msra.mxu0 0.0
        %1173 = vmatprep.subr.mxu0 0.0
        %1174 = vmatpush1.msra.mxu0 0.0
        %1175 = vmatprep.subr.mxu0 0.0
        %1176 = vmatpush1.msra.mxu0 0.0
        %1177 = vmatprep.subr.mxu0 0.0
        %1178 = vmatpush1.msra.mxu0 0.0
        %1179 = vmatprep.subr.mxu0 0.0
        %1180 = vmatpush1.msra.mxu0 0.0
        %1181 = vmatprep.subr.mxu0 0.0
        %1182 = vmatpush1.msra.mxu0 0.0
        %1183 = vmatprep.subr.mxu0 0.0
        %1184 = vmatpush1.msra.mxu0 0.0
        %1185 = vmatprep.subr.mxu0 0.0
        %1186 = vmatpush1.msra.mxu0 0.0
        %1187 = vmatprep.subr.mxu0 0.0
        %1188 = vmatpush1.msra.mxu0 0.0
        %1189 = vmatprep.subr.mxu0 0.0
        %1190 = vmatpush1.msra.mxu0 0.0
        %1191 = vmatprep.subr.mxu0 0.0
        %1192 = vmatpush1.msra.mxu0 0.0
        %1193 = vmatprep.subr.mxu0 0.0
        %1194 = vmatpush1.msra.mxu0 0.0
        %1195 = vmatprep.subr.mxu0 0.0
        %1196 = vmatpush1.msra.mxu0 0.0
        %1197 = vmatprep.subr.mxu0 0.0
        %1198 = vmatpush1.msra.mxu0 0.0
        %1199 = vmatprep.subr.mxu0 0.0
        %1200 = vmatpush1.msra.mxu0 0.0
        %1201 = vmatprep.subr.mxu0 0.0
        %1202 = vmatpush1.msra.mxu0 0.0
        %1203 = vmatprep.subr.mxu0 0.0
        %1204 = vmatpush1.msra.mxu0 0.0
        %1205 = vmatprep.mubr.f32.mxu0 0.0
        %1206 = vmatmul.mubr.f32.gmra.mrb[0].mxu0 %v1136
        %v1207 = vpop.f32.mrb[0].mxu0
        %v1208 = vadd.f32 %v1134, %v1207
        %v1209 = vpop.f32.mrb[0].mxu0
        %1210 = vmatprep.mubr.f32.mxu0 0.0
        %1211 = vmatmul.mubr.f32.gmra.mrb[0].mxu0 %v1139
        %v1212 = vpop.f32.mrb[0].mxu0
        %v1213 = vadd.f32 %v1134, %v1212
        %v1214 = vpop.f32.mrb[0].mxu0
        %1215 = vdwg.mxu0
        %v1216 = vadd.f32 %v173, %v1208
        %v1217 = vadd.f32 %v174, %v1213
        %v1218 = vsel %vm175, %v1216, 0.0
        %1219 = vadd.xlane.f32.xlu0 %v1218
        %v1220 = vpop.xlane.xlu0 %1219
        %v1221 = vsel %vm175, %v1217, 0.0
        %1222 = vadd.xlane.f32.xlu0 %v1221
        %v1223 = vpop.xlane.xlu0 %1222
        %v1224 = vmul.f32 %v1220, %v182
        %v1225 = vmul.f32 %v1223, %v182
        %v1226 = vsub.f32 %v1216, %v1224
        %v1227 = vsub.f32 %v1217, %v1225
        %v1228 = vmul.f32 %v1226, %v1226
        %v1229 = vmul.f32 %v1227, %v1227
        %v1230 = vsel %vm175, %v1228, 0.0
        %1231 = vadd.xlane.f32.xlu0 %v1230
        %v1232 = vpop.xlane.xlu0 %1231
        %v1233 = vsel %vm175, %v1229, 0.0
        %1234 = vadd.xlane.f32.xlu0 %v1233
        %v1235 = vpop.xlane.xlu0 %1234
        %v1236 = vmul.f32 %v1232, %v182
        %v1237 = vmul.f32 %v1235, %v182
        %v1238 = vadd.f32 %v1236, 1e-05
        %v1239 = vadd.f32 %v1237, 1e-05
        %v1240 = vrsqrt.pop %v1238
        %v1241 = vrsqrt.pop %v1239
        %v1242 = vmul.f32 %v1226, %v1240
        %v1243 = vmul.f32 %v1227, %v1241
        %v1244 = vmul.f32 %v1242, %v206
        %v1245 = vmul.f32 %v1243, %v206
        %v1246 = vadd.f32 %v1244, %v212
        %v1247 = vadd.f32 %v1245, %v212
        %v1249 = vsel %vm175, %v1246, 0
        %v1252 = vsel %vm175, %v1247, 0
        %1254 = vmatprep.subr.mxu0 0.0
        %1255 = vmatpush1.msra.mxu0 %v145
        %1256 = vmatprep.subr.mxu0 0.0
        %1257 = vmatpush1.msra.mxu0 %v146
        %1258 = vmatprep.subr.mxu0 0.0
        %1259 = vmatpush1.msra.mxu0 %v147
        %1260 = vmatprep.subr.mxu0 0.0
        %1261 = vmatpush1.msra.mxu0 %v148
        %1262 = vmatprep.subr.mxu0 0.0
        %1263 = vmatpush1.msra.mxu0 0.0
        %1264 = vmatprep.subr.mxu0 0.0
        %1265 = vmatpush1.msra.mxu0 0.0
        %1266 = vmatprep.subr.mxu0 0.0
        %1267 = vmatpush1.msra.mxu0 0.0
        %1268 = vmatprep.subr.mxu0 0.0
        %1269 = vmatpush1.msra.mxu0 0.0
        %1270 = vmatprep.subr.mxu0 0.0
        %1271 = vmatpush1.msra.mxu0 0.0
        %1272 = vmatprep.subr.mxu0 0.0
        %1273 = vmatpush1.msra.mxu0 0.0
        %1274 = vmatprep.subr.mxu0 0.0
        %1275 = vmatpush1.msra.mxu0 0.0
        %1276 = vmatprep.subr.mxu0 0.0
        %1277 = vmatpush1.msra.mxu0 0.0
        %1278 = vmatprep.subr.mxu0 0.0
        %1279 = vmatpush1.msra.mxu0 0.0
        %1280 = vmatprep.subr.mxu0 0.0
        %1281 = vmatpush1.msra.mxu0 0.0
        %1282 = vmatprep.subr.mxu0 0.0
        %1283 = vmatpush1.msra.mxu0 0.0
        %1284 = vmatprep.subr.mxu0 0.0
        %1285 = vmatpush1.msra.mxu0 0.0
        %1286 = vmatprep.subr.mxu0 0.0
        %1287 = vmatpush1.msra.mxu0 0.0
        %1288 = vmatprep.subr.mxu0 0.0
        %1289 = vmatpush1.msra.mxu0 0.0
        %1290 = vmatprep.subr.mxu0 0.0
        %1291 = vmatpush1.msra.mxu0 0.0
        %1292 = vmatprep.subr.mxu0 0.0
        %1293 = vmatpush1.msra.mxu0 0.0
        %1294 = vmatprep.subr.mxu0 0.0
        %1295 = vmatpush1.msra.mxu0 0.0
        %1296 = vmatprep.subr.mxu0 0.0
        %1297 = vmatpush1.msra.mxu0 0.0
        %1298 = vmatprep.subr.mxu0 0.0
        %1299 = vmatpush1.msra.mxu0 0.0
        %1300 = vmatprep.subr.mxu0 0.0
        %1301 = vmatpush1.msra.mxu0 0.0
        %1302 = vmatprep.subr.mxu0 0.0
        %1303 = vmatpush1.msra.mxu0 0.0
        %1304 = vmatprep.subr.mxu0 0.0
        %1305 = vmatpush1.msra.mxu0 0.0
        %1306 = vmatprep.subr.mxu0 0.0
        %1307 = vmatpush1.msra.mxu0 0.0
        %1308 = vmatprep.subr.mxu0 0.0
        %1309 = vmatpush1.msra.mxu0 0.0
        %1310 = vmatprep.subr.mxu0 0.0
        %1311 = vmatpush1.msra.mxu0 0.0
        %1312 = vmatprep.subr.mxu0 0.0
        %1313 = vmatpush1.msra.mxu0 0.0
        %1314 = vmatprep.subr.mxu0 0.0
        %1315 = vmatpush1.msra.mxu0 0.0
        %1316 = vmatprep.subr.mxu0 0.0
        %1317 = vmatpush1.msra.mxu0 0.0
        %1318 = vmatprep.mubr.f32.mxu0 0.0
        %1319 = vmatmul.mubr.f32.gmra.mrb[0].mxu0 %v1249
        %v1320 = vpop.f32.mrb[0].mxu0
        %v1321 = vadd.f32 %v218, %v1320
        %v1322 = vpop.f32.mrb[0].mxu0
        %1323 = vmatprep.mubr.f32.mxu0 0.0
        %1324 = vmatmul.mubr.f32.gmra.mrb[0].mxu0 %v1252
        %v1325 = vpop.f32.mrb[0].mxu0
        %v1326 = vadd.f32 %v218, %v1325
        %v1327 = vpop.f32.mrb[0].mxu0
        %1328 = vdwg.mxu0
        %1331 = vrot.lane.b32.xlu0 %v1321, 96
        %v1332 = vpop.permute.xlu0 %1331
        %1333 = vrot.lane.b32.xlu0 %v1326, 96
        %v1334 = vpop.permute.xlu0 %1333
        %v1335 = vsel %vm306, %v1321, 0
        %v1337 = vsel %vm306, %v1326, 0
        %v1339 = vsel %vm306, %v1332, 0
        %v1341 = vsel %vm306, %v1334, 0
        %1343 = vmatprep.subr.mxu0 0.0
        %1344 = vmatpush1.xpose.msra.mxu0 %v1339
        %1345 = vmatprep.subr.mxu0 0.0
        %1346 = vmatpush1.xpose.msra.mxu0 %v1341
        %1347 = vmatprep.subr.mxu0 0.0
        %1348 = vmatpush1.xpose.msra.mxu0 0.0
        %1349 = vmatprep.subr.mxu0 0.0
        %1350 = vmatpush1.xpose.msra.mxu0 0.0
        %1351 = vmatprep.subr.mxu0 0.0
        %1352 = vmatpush1.xpose.msra.mxu0 0.0
        %1353 = vmatprep.subr.mxu0 0.0
        %1354 = vmatpush1.xpose.msra.mxu0 0.0
        %1355 = vmatprep.subr.mxu0 0.0
        %1356 = vmatpush1.xpose.msra.mxu0 0.0
        %1357 = vmatprep.subr.mxu0 0.0
        %1358 = vmatpush1.xpose.msra.mxu0 0.0
        %1359 = vmatprep.subr.mxu0 0.0
        %1360 = vmatpush1.xpose.msra.mxu0 0.0
        %1361 = vmatprep.subr.mxu0 0.0
        %1362 = vmatpush1.xpose.msra.mxu0 0.0
        %1363 = vmatprep.subr.mxu0 0.0
        %1364 = vmatpush1.xpose.msra.mxu0 0.0
        %1365 = vmatprep.subr.mxu0 0.0
        %1366 = vmatpush1.xpose.msra.mxu0 0.0
        %1367 = vmatprep.subr.mxu0 0.0
        %1368 = vmatpush1.xpose.msra.mxu0 0.0
        %1369 = vmatprep.subr.mxu0 0.0
        %1370 = vmatpush1.xpose.msra.mxu0 0.0
        %1371 = vmatprep.subr.mxu0 0.0
        %1372 = vmatpush1.xpose.msra.mxu0 0.0
        %1373 = vmatprep.subr.mxu0 0.0
        %1374 = vmatpush1.xpose.msra.mxu0 0.0
        %1375 = vmatprep.subr.mxu0 0.0
        %1376 = vmatpush1.xpose.msra.mxu0 0.0
        %1377 = vmatprep.subr.mxu0 0.0
        %1378 = vmatpush1.xpose.msra.mxu0 0.0
        %1379 = vmatprep.subr.mxu0 0.0
        %1380 = vmatpush1.xpose.msra.mxu0 0.0
        %1381 = vmatprep.subr.mxu0 0.0
        %1382 = vmatpush1.xpose.msra.mxu0 0.0
        %1383 = vmatprep.subr.mxu0 0.0
        %1384 = vmatpush1.xpose.msra.mxu0 0.0
        %1385 = vmatprep.subr.mxu0 0.0
        %1386 = vmatpush1.xpose.msra.mxu0 0.0
        %1387 = vmatprep.subr.mxu0 0.0
        %1388 = vmatpush1.xpose.msra.mxu0 0.0
        %1389 = vmatprep.subr.mxu0 0.0
        %1390 = vmatpush1.xpose.msra.mxu0 0.0
        %1391 = vmatprep.subr.mxu0 0.0
        %1392 = vmatpush1.xpose.msra.mxu0 0.0
        %1393 = vmatprep.subr.mxu0 0.0
        %1394 = vmatpush1.xpose.msra.mxu0 0.0
        %1395 = vmatprep.subr.mxu0 0.0
        %1396 = vmatpush1.xpose.msra.mxu0 0.0
        %1397 = vmatprep.subr.mxu0 0.0
        %1398 = vmatpush1.xpose.msra.mxu0 0.0
        %1399 = vmatprep.subr.mxu0 0.0
        %1400 = vmatpush1.xpose.msra.mxu0 0.0
        %1401 = vmatprep.subr.mxu0 0.0
        %1402 = vmatpush1.xpose.msra.mxu0 0.0
        %1403 = vmatprep.subr.mxu0 0.0
        %1404 = vmatpush1.xpose.msra.mxu0 0.0
        %1405 = vmatprep.subr.mxu0 0.0
        %1406 = vmatpush1.xpose.msra.mxu0 0.0
        %1407 = vmatprep.mubr.f32.mxu0 0.0
        %1408 = vmatmul.mubr.f32.gmra.mrb[0].mxu0 %v1335
        %v1409 = vpop.f32.mrb[0].mxu0
        %v1410 = vadd.f32 0.0, %v1409
        %v1411 = vpop.f32.mrb[0].mxu0
        %1412 = vmatprep.mubr.f32.mxu0 0.0
        %1413 = vmatmul.mubr.f32.gmra.mrb[0].mxu0 %v1337
        %v1414 = vpop.f32.mrb[0].mxu0
        %v1415 = vadd.f32 0.0, %v1414
        %v1416 = vpop.f32.mrb[0].mxu0
        %1417 = vdwg.mxu0
        %v1418 = vsel %vm390, %v1410, -inf
        %1419 = vmax.xlane.f32.xlu0 %v1418
        %v1420 = vpop.xlane.xlu0 %1419
        %v1421 = vsel %vm390, %v1415, -inf
        %1422 = vmax.xlane.f32.xlu0 %v1421
        %v1423 = vpop.xlane.xlu0 %1422
        %v1424 = vsub.f32 %v1410, %v1420
        %v1425 = vsub.f32 %v1415, %v1423
        %v1426 = vmul.f32 %v1424, 1.442695
        %v1427 = vpow.pop %v1426
        %v1428 = vmul.f32 %v1425, 1.442695
        %v1429 = vpow.pop %v1428
        %v1430 = vsel %vm390, %v1427, 0.0
        %1431 = vadd.xlane.f32.xlu0 %v1430
        %v1432 = vpop.xlane.xlu0 %1431
        %v1433 = vsel %vm390, %v1429, 0.0
        %1434 = vadd.xlane.f32.xlu0 %v1433
        %v1435 = vpop.xlane.xlu0 %1434
        %v1436 = vrcp.pop %v1432
        %v1437 = vrcp.pop %v1435
        %v1438 = vmul.f32 %v1427, %v1436
        %v1439 = vmul.f32 %v1429, %v1437
        %1440 = vrot.lane.b32.xlu0 %v1321, 64
        %v1441 = vpop.permute.xlu0 %1440
        %1442 = vrot.lane.b32.xlu0 %v1326, 64
        %v1443 = vpop.permute.xlu0 %1442
        %v1447 = vsel %vm390, %v1438, 0
        %v1450 = vsel %vm390, %v1439, 0
        %1452 = vmatprep.subr.mxu0 0.0
        %1453 = vmatpush1.msra.mxu0 %v1441
        %1454 = vmatprep.subr.mxu0 0.0
        %1455 = vmatpush1.msra.mxu0 %v1443
        %1456 = vmatprep.subr.mxu0 0.0
        %1457 = vmatpush1.msra.mxu0 0.0
        %1458 = vmatprep.subr.mxu0 0.0
        %1459 = vmatpush1.msra.mxu0 0.0
        %1460 = vmatprep.subr.mxu0 0.0
        %1461 = vmatpush1.msra.mxu0 0.0
        %1462 = vmatprep.subr.mxu0 0.0
        %1463 = vmatpush1.msra.mxu0 0.0
        %1464 = vmatprep.subr.mxu0 0.0
        %1465 = vmatpush1.msra.mxu0 0.0
        %1466 = vmatprep.subr.mxu0 0.0
        %1467 = vmatpush1.msra.mxu0 0.0
        %1468 = vmatprep.subr.mxu0 0.0
        %1469 = vmatpush1.msra.mxu0 0.0
        %1470 = vmatprep.subr.mxu0 0.0
        %1471 = vmatpush1.msra.mxu0 0.0
        %1472 = vmatprep.subr.mxu0 0.0
        %1473 = vmatpush1.msra.mxu0 0.0
        %1474 = vmatprep.subr.mxu0 0.0
        %1475 = vmatpush1.msra.mxu0 0.0
        %1476 = vmatprep.subr.mxu0 0.0
        %1477 = vmatpush1.msra.mxu0 0.0
        %1478 = vmatprep.subr.mxu0 0.0
        %1479 = vmatpush1.msra.mxu0 0.0
        %1480 = vmatprep.subr.mxu0 0.0
        %1481 = vmatpush1.msra.mxu0 0.0
        %1482 = vmatprep.subr.mxu0 0.0
        %1483 = vmatpush1.msra.mxu0 0.0
        %1484 = vmatprep.subr.mxu0 0.0
        %1485 = vmatpush1.msra.mxu0 0.0
        %1486 = vmatprep.subr.mxu0 0.0
        %1487 = vmatpush1.msra.mxu0 0.0
        %1488 = vmatprep.subr.mxu0 0.0
        %1489 = vmatpush1.msra.mxu0 0.0
        %1490 = vmatprep.subr.mxu0 0.0
        %1491 = vmatpush1.msra.mxu0 0.0
        %1492 = vmatprep.subr.mxu0 0.0
        %1493 = vmatpush1.msra.mxu0 0.0
        %1494 = vmatprep.subr.mxu0 0.0
        %1495 = vmatpush1.msra.mxu0 0.0
        %1496 = vmatprep.subr.mxu0 0.0
        %1497 = vmatpush1.msra.mxu0 0.0
        %1498 = vmatprep.subr.mxu0 0.0
        %1499 = vmatpush1.msra.mxu0 0.0
        %1500 = vmatprep.subr.mxu0 0.0
        %1501 = vmatpush1.msra.mxu0 0.0
        %1502 = vmatprep.subr.mxu0 0.0
        %1503 = vmatpush1.msra.mxu0 0.0
        %1504 = vmatprep.subr.mxu0 0.0
        %1505 = vmatpush1.msra.mxu0 0.0
        %1506 = vmatprep.subr.mxu0 0.0
        %1507 = vmatpush1.msra.mxu0 0.0
        %1508 = vmatprep.subr.mxu0 0.0
        %1509 = vmatpush1.msra.mxu0 0.0
        %1510 = vmatprep.subr.mxu0 0.0
        %1511 = vmatpush1.msra.mxu0 0.0
        %1512 = vmatprep.subr.mxu0 0.0
        %1513 = vmatpush1.msra.mxu0 0.0
        %1514 = vmatprep.subr.mxu0 0.0
        %1515 = vmatpush1.msra.mxu0 0.0
        %1516 = vmatprep.mubr.f32.mxu0 0.0
        %1517 = vmatmul.mubr.f32.gmra.mrb[0].mxu0 %v1447
        %v1518 = vpop.f32.mrb[0].mxu0
        %v1519 = vadd.f32 0.0, %v1518
        %v1520 = vpop.f32.mrb[0].mxu0
        %1521 = vmatprep.mubr.f32.mxu0 0.0
        %1522 = vmatmul.mubr.f32.gmra.mrb[0].mxu0 %v1450
        %v1523 = vpop.f32.mrb[0].mxu0
        %v1524 = vadd.f32 0.0, %v1523
        %v1525 = vpop.f32.mrb[0].mxu0
        %1526 = vdwg.mxu0
        %1527 = vrot.lane.b32.xlu0 %v1321, 120
        %v1528 = vpop.permute.xlu0 %1527
        %1529 = vrot.lane.b32.xlu0 %v1326, 120
        %v1530 = vpop.permute.xlu0 %1529
        %1531 = vrot.lane.b32.xlu0 %v1321, 88
        %v1532 = vpop.permute.xlu0 %1531
        %1533 = vrot.lane.b32.xlu0 %v1326, 88
        %v1534 = vpop.permute.xlu0 %1533
        %v1535 = vsel %vm306, %v1528, 0
        %v1537 = vsel %vm306, %v1530, 0
        %v1539 = vsel %vm306, %v1532, 0
        %v1541 = vsel %vm306, %v1534, 0
        %1543 = vmatprep.subr.mxu0 0.0
        %1544 = vmatpush1.xpose.msra.mxu0 %v1539
        %1545 = vmatprep.subr.mxu0 0.0
        %1546 = vmatpush1.xpose.msra.mxu0 %v1541
        %1547 = vmatprep.subr.mxu0 0.0
        %1548 = vmatpush1.xpose.msra.mxu0 0.0
        %1549 = vmatprep.subr.mxu0 0.0
        %1550 = vmatpush1.xpose.msra.mxu0 0.0
        %1551 = vmatprep.subr.mxu0 0.0
        %1552 = vmatpush1.xpose.msra.mxu0 0.0
        %1553 = vmatprep.subr.mxu0 0.0
        %1554 = vmatpush1.xpose.msra.mxu0 0.0
        %1555 = vmatprep.subr.mxu0 0.0
        %1556 = vmatpush1.xpose.msra.mxu0 0.0
        %1557 = vmatprep.subr.mxu0 0.0
        %1558 = vmatpush1.xpose.msra.mxu0 0.0
        %1559 = vmatprep.subr.mxu0 0.0
        %1560 = vmatpush1.xpose.msra.mxu0 0.0
        %1561 = vmatprep.subr.mxu0 0.0
        %1562 = vmatpush1.xpose.msra.mxu0 0.0
        %1563 = vmatprep.subr.mxu0 0.0
        %1564 = vmatpush1.xpose.msra.mxu0 0.0
        %1565 = vmatprep.subr.mxu0 0.0
        %1566 = vmatpush1.xpose.msra.mxu0 0.0
        %1567 = vmatprep.subr.mxu0 0.0
        %1568 = vmatpush1.xpose.msra.mxu0 0.0
        %1569 = vmatprep.subr.mxu0 0.0
        %1570 = vmatpush1.xpose.msra.mxu0 0.0
        %1571 = vmatprep.subr.mxu0 0.0
        %1572 = vmatpush1.xpose.msra.mxu0 0.0
        %1573 = vmatprep.subr.mxu0 0.0
        %1574 = vmatpush1.xpose.msra.mxu0 0.0
        %1575 = vmatprep.subr.mxu0 0.0
        %1576 = vmatpush1.xpose.msra.mxu0 0.0
        %1577 = vmatprep.subr.mxu0 0.0
        %1578 = vmatpush1.xpose.msra.mxu0 0.0
        %1579 = vmatprep.subr.mxu0 0.0
        %1580 = vmatpush1.xpose.msra.mxu0 0.0
        %1581 = vmatprep.subr.mxu0 0.0
        %1582 = vmatpush1.xpose.msra.mxu0 0.0
        %1583 = vmatprep.subr.mxu0 0.0
        %1584 = vmatpush1.xpose.msra.mxu0 0.0
        %1585 = vmatprep.subr.mxu0 0.0
        %1586 = vmatpush1.xpose.msra.mxu0 0.0
        %1587 = vmatprep.subr.mxu0 0.0
        %1588 = vmatpush1.xpose.msra.mxu0 0.0
        %1589 = vmatprep.subr.mxu0 0.0
        %1590 = vmatpush1.xpose.msra.mxu0 0.0
        %1591 = vmatprep.subr.mxu0 0.0
        %1592 = vmatpush1.xpose.msra.mxu0 0.0
        %1593 = vmatprep.subr.mxu0 0.0
        %1594 = vmatpush1.xpose.msra.mxu0 0.0
        %1595 = vmatprep.subr.mxu0 0.0
        %1596 = vmatpush1.xpose.msra.mxu0 0.0
        %1597 = vmatprep.subr.mxu0 0.0
        %1598 = vmatpush1.xpose.msra.mxu0 0.0
        %1599 = vmatprep.subr.mxu0 0.0
        %1600 = vmatpush1.xpose.msra.mxu0 0.0
        %1601 = vmatprep.subr.mxu0 0.0
        %1602 = vmatpush1.xpose.msra.mxu0 0.0
        %1603 = vmatprep.subr.mxu0 0.0
        %1604 = vmatpush1.xpose.msra.mxu0 0.0
        %1605 = vmatprep.subr.mxu0 0.0
        %1606 = vmatpush1.xpose.msra.mxu0 0.0
        %1607 = vmatprep.mubr.f32.mxu0 0.0
        %1608 = vmatmul.mubr.f32.gmra.mrb[0].mxu0 %v1535
        %v1609 = vpop.f32.mrb[0].mxu0
        %v1610 = vadd.f32 0.0, %v1609
        %v1611 = vpop.f32.mrb[0].mxu0
        %1612 = vmatprep.mubr.f32.mxu0 0.0
        %1613 = vmatmul.mubr.f32.gmra.mrb[0].mxu0 %v1537
        %v1614 = vpop.f32.mrb[0].mxu0
        %v1615 = vadd.f32 0.0, %v1614
        %v1616 = vpop.f32.mrb[0].mxu0
        %1617 = vdwg.mxu0
        %v1618 = vsel %vm390, %v1610, -inf
        %1619 = vmax.xlane.f32.xlu0 %v1618
        %v1620 = vpop.xlane.xlu0 %1619
        %v1621 = vsel %vm390, %v1615, -inf
        %1622 = vmax.xlane.f32.xlu0 %v1621
        %v1623 = vpop.xlane.xlu0 %1622
        %v1624 = vsub.f32 %v1610, %v1620
        %v1625 = vsub.f32 %v1615, %v1623
        %v1626 = vmul.f32 %v1624, 1.442695
        %v1627 = vpow.pop %v1626
        %v1628 = vmul.f32 %v1625, 1.442695
        %v1629 = vpow.pop %v1628
        %v1630 = vsel %vm390, %v1627, 0.0
        %1631 = vadd.xlane.f32.xlu0 %v1630
        %v1632 = vpop.xlane.xlu0 %1631
        %v1633 = vsel %vm390, %v1629, 0.0
        %1634 = vadd.xlane.f32.xlu0 %v1633
        %v1635 = vpop.xlane.xlu0 %1634
        %v1636 = vrcp.pop %v1632
        %v1637 = vrcp.pop %v1635
        %v1638 = vmul.f32 %v1627, %v1636
        %v1639 = vmul.f32 %v1629, %v1637
        %1640 = vrot.lane.b32.xlu0 %v1321, 56
        %v1641 = vpop.permute.xlu0 %1640
        %1642 = vrot.lane.b32.xlu0 %v1326, 56
        %v1643 = vpop.permute.xlu0 %1642
        %v1647 = vsel %vm390, %v1638, 0
        %v1650 = vsel %vm390, %v1639, 0
        %1652 = vmatprep.subr.mxu0 0.0
        %1653 = vmatpush1.msra.mxu0 %v1641
        %1654 = vmatprep.subr.mxu0 0.0
        %1655 = vmatpush1.msra.mxu0 %v1643
        %1656 = vmatprep.subr.mxu0 0.0
        %1657 = vmatpush1.msra.mxu0 0.0
        %1658 = vmatprep.subr.mxu0 0.0
        %1659 = vmatpush1.msra.mxu0 0.0
        %1660 = vmatprep.subr.mxu0 0.0
        %1661 = vmatpush1.msra.mxu0 0.0
        %1662 = vmatprep.subr.mxu0 0.0
        %1663 = vmatpush1.msra.mxu0 0.0
        %1664 = vmatprep.subr.mxu0 0.0
        %1665 = vmatpush1.msra.mxu0 0.0
        %1666 = vmatprep.subr.mxu0 0.0
        %1667 = vmatpush1.msra.mxu0 0.0
        %1668 = vmatprep.subr.mxu0 0.0
        %1669 = vmatpush1.msra.mxu0 0.0
        %1670 = vmatprep.subr.mxu0 0.0
        %1671 = vmatpush1.msra.mxu0 0.0
        %1672 = vmatprep.subr.mxu0 0.0
        %1673 = vmatpush1.msra.mxu0 0.0
        %1674 = vmatprep.subr.mxu0 0.0
        %1675 = vmatpush1.msra.mxu0 0.0
        %1676 = vmatprep.subr.mxu0 0.0
        %1677 = vmatpush1.msra.mxu0 0.0
        %1678 = vmatprep.subr.mxu0 0.0
        %1679 = vmatpush1.msra.mxu0 0.0
        %1680 = vmatprep.subr.mxu0 0.0
        %1681 = vmatpush1.msra.mxu0 0.0
        %1682 = vmatprep.subr.mxu0 0.0
        %1683 = vmatpush1.msra.mxu0 0.0
        %1684 = vmatprep.subr.mxu0 0.0
        %1685 = vmatpush1.msra.mxu0 0.0
        %1686 = vmatprep.subr.mxu0 0.0
        %1687 = vmatpush1.msra.mxu0 0.0
        %1688 = vmatprep.subr.mxu0 0.0
        %1689 = vmatpush1.msra.mxu0 0.0
        %1690 = vmatprep.subr.mxu0 0.0
        %1691 = vmatpush1.msra.mxu0 0.0
        %1692 = vmatprep.subr.mxu0 0.0
        %1693 = vmatpush1.msra.mxu0 0.0
        %1694 = vmatprep.subr.mxu0 0.0
        %1695 = vmatpush1.msra.mxu0 0.0
        %1696 = vmatprep.subr.mxu0 0.0
        %1697 = vmatpush1.msra.mxu0 0.0
        %1698 = vmatprep.subr.mxu0 0.0
        %1699 = vmatpush1.msra.mxu0 0.0
        %1700 = vmatprep.subr.mxu0 0.0
        %1701 = vmatpush1.msra.mxu0 0.0
        %1702 = vmatprep.subr.mxu0 0.0
        %1703 = vmatpush1.msra.mxu0 0.0
        %1704 = vmatprep.subr.mxu0 0.0
        %1705 = vmatpush1.msra.mxu0 0.0
        %1706 = vmatprep.subr.mxu0 0.0
        %1707 = vmatpush1.msra.mxu0 0.0
        %1708 = vmatprep.subr.mxu0 0.0
        %1709 = vmatpush1.msra.mxu0 0.0
        %1710 = vmatprep.subr.mxu0 0.0
        %1711 = vmatpush1.msra.mxu0 0.0
        %1712 = vmatprep.subr.mxu0 0.0
        %1713 = vmatpush1.msra.mxu0 0.0
        %1714 = vmatprep.subr.mxu0 0.0
        %1715 = vmatpush1.msra.mxu0 0.0
        %1716 = vmatprep.mubr.f32.mxu0 0.0
        %1717 = vmatmul.mubr.f32.gmra.mrb[0].mxu0 %v1647
        %v1718 = vpop.f32.mrb[0].mxu0
        %v1719 = vadd.f32 0.0, %v1718
        %v1720 = vpop.f32.mrb[0].mxu0
        %1721 = vmatprep.mubr.f32.mxu0 0.0
        %1722 = vmatmul.mubr.f32.gmra.mrb[0].mxu0 %v1650
        %v1723 = vpop.f32.mrb[0].mxu0
        %v1724 = vadd.f32 0.0, %v1723
        %v1725 = vpop.f32.mrb[0].mxu0
        %1726 = vdwg.mxu0
        %1727 = vrot.lane.b32.xlu0 %v1321, 112
        %v1728 = vpop.permute.xlu0 %1727
        %1729 = vrot.lane.b32.xlu0 %v1326, 112
        %v1730 = vpop.permute.xlu0 %1729
        %1731 = vrot.lane.b32.xlu0 %v1321, 80
        %v1732 = vpop.permute.xlu0 %1731
        %1733 = vrot.lane.b32.xlu0 %v1326, 80
        %v1734 = vpop.permute.xlu0 %1733
        %v1735 = vsel %vm306, %v1728, 0
        %v1737 = vsel %vm306, %v1730, 0
        %v1739 = vsel %vm306, %v1732, 0
        %v1741 = vsel %vm306, %v1734, 0
        %1743 = vmatprep.subr.mxu0 0.0
        %1744 = vmatpush1.xpose.msra.mxu0 %v1739
        %1745 = vmatprep.subr.mxu0 0.0
        %1746 = vmatpush1.xpose.msra.mxu0 %v1741
        %1747 = vmatprep.subr.mxu0 0.0
        %1748 = vmatpush1.xpose.msra.mxu0 0.0
        %1749 = vmatprep.subr.mxu0 0.0
        %1750 = vmatpush1.xpose.msra.mxu0 0.0
        %1751 = vmatprep.subr.mxu0 0.0
        %1752 = vmatpush1.xpose.msra.mxu0 0.0
        %1753 = vmatprep.subr.mxu0 0.0
        %1754 = vmatpush1.xpose.msra.mxu0 0.0
        %1755 = vmatprep.subr.mxu0 0.0
        %1756 = vmatpush1.xpose.msra.mxu0 0.0
        %1757 = vmatprep.subr.mxu0 0.0
        %1758 = vmatpush1.xpose.msra.mxu0 0.0
        %1759 = vmatprep.subr.mxu0 0.0
        %1760 = vmatpush1.xpose.msra.mxu0 0.0
        %1761 = vmatprep.subr.mxu0 0.0
        %1762 = vmatpush1.xpose.msra.mxu0 0.0
        %1763 = vmatprep.subr.mxu0 0.0
        %1764 = vmatpush1.xpose.msra.mxu0 0.0
        %1765 = vmatprep.subr.mxu0 0.0
        %1766 = vmatpush1.xpose.msra.mxu0 0.0
        %1767 = vmatprep.subr.mxu0 0.0
        %1768 = vmatpush1.xpose.msra.mxu0 0.0
        %1769 = vmatprep.subr.mxu0 0.0
        %1770 = vmatpush1.xpose.msra.mxu0 0.0
        %1771 = vmatprep.subr.mxu0 0.0
        %1772 = vmatpush1.xpose.msra.mxu0 0.0
        %1773 = vmatprep.subr.mxu0 0.0
        %1774 = vmatpush1.xpose.msra.mxu0 0.0
        %1775 = vmatprep.subr.mxu0 0.0
        %1776 = vmatpush1.xpose.msra.mxu0 0.0
        %1777 = vmatprep.subr.mxu0 0.0
        %1778 = vmatpush1.xpose.msra.mxu0 0.0
        %1779 = vmatprep.subr.mxu0 0.0
        %1780 = vmatpush1.xpose.msra.mxu0 0.0
        %1781 = vmatprep.subr.mxu0 0.0
        %1782 = vmatpush1.xpose.msra.mxu0 0.0
        %1783 = vmatprep.subr.mxu0 0.0
        %1784 = vmatpush1.xpose.msra.mxu0 0.0
        %1785 = vmatprep.subr.mxu0 0.0
        %1786 = vmatpush1.xpose.msra.mxu0 0.0
        %1787 = vmatprep.subr.mxu0 0.0
        %1788 = vmatpush1.xpose.msra.mxu0 0.0
        %1789 = vmatprep.subr.mxu0 0.0
        %1790 = vmatpush1.xpose.msra.mxu0 0.0
        %1791 = vmatprep.subr.mxu0 0.0
        %1792 = vmatpush1.xpose.msra.mxu0 0.0
        %1793 = vmatprep.subr.mxu0 0.0
        %1794 = vmatpush1.xpose.msra.mxu0 0.0
        %1795 = vmatprep.subr.mxu0 0.0
        %1796 = vmatpush1.xpose.msra.mxu0 0.0
        %1797 = vmatprep.subr.mxu0 0.0
        %1798 = vmatpush1.xpose.msra.mxu0 0.0
        %1799 = vmatprep.subr.mxu0 0.0
        %1800 = vmatpush1.xpose.msra.mxu0 0.0
        %1801 = vmatprep.subr.mxu0 0.0
        %1802 = vmatpush1.xpose.msra.mxu0 0.0
        %1803 = vmatprep.subr.mxu0 0.0
        %1804 = vmatpush1.xpose.msra.mxu0 0.0
        %1805 = vmatprep.subr.mxu0 0.0
        %1806 = vmatpush1.xpose.msra.mxu0 0.0
        %1807 = vmatprep.mubr.f32.mxu0 0.0
        %1808 = vmatmul.mubr.f32.gmra.mrb[0].mxu0 %v1735
        %v1809 = vpop.f32.mrb[0].mxu0
        %v1810 = vadd.f32 0.0, %v1809
        %v1811 = vpop.f32.mrb[0].mxu0
        %1812 = vmatprep.mubr.f32.mxu0 0.0
        %1813 = vmatmul.mubr.f32.gmra.mrb[0].mxu0 %v1737
        %v1814 = vpop.f32.mrb[0].mxu0
        %v1815 = vadd.f32 0.0, %v1814
        %v1816 = vpop.f32.mrb[0].mxu0
        %1817 = vdwg.mxu0
        %v1818 = vsel %vm390, %v1810, -inf
        %1819 = vmax.xlane.f32.xlu0 %v1818
        %v1820 = vpop.xlane.xlu0 %1819
        %v1821 = vsel %vm390, %v1815, -inf
        %1822 = vmax.xlane.f32.xlu0 %v1821
        %v1823 = vpop.xlane.xlu0 %1822
        %v1824 = vsub.f32 %v1810, %v1820
        %v1825 = vsub.f32 %v1815, %v1823
        %v1826 = vmul.f32 %v1824, 1.442695
        %v1827 = vpow.pop %v1826
        %v1828 = vmul.f32 %v1825, 1.442695
        %v1829 = vpow.pop %v1828
        %v1830 = vsel %vm390, %v1827, 0.0
        %1831 = vadd.xlane.f32.xlu0 %v1830
        %v1832 = vpop.xlane.xlu0 %1831
        %v1833 = vsel %vm390, %v1829, 0.0
        %1834 = vadd.xlane.f32.xlu0 %v1833
        %v1835 = vpop.xlane.xlu0 %1834
        %v1836 = vrcp.pop %v1832
        %v1837 = vrcp.pop %v1835
        %v1838 = vmul.f32 %v1827, %v1836
        %v1839 = vmul.f32 %v1829, %v1837
        %1840 = vrot.lane.b32.xlu0 %v1321, 48
        %v1841 = vpop.permute.xlu0 %1840
        %1842 = vrot.lane.b32.xlu0 %v1326, 48
        %v1843 = vpop.permute.xlu0 %1842
        %v1847 = vsel %vm390, %v1838, 0
        %v1850 = vsel %vm390, %v1839, 0
        %1852 = vmatprep.subr.mxu0 0.0
        %1853 = vmatpush1.msra.mxu0 %v1841
        %1854 = vmatprep.subr.mxu0 0.0
        %1855 = vmatpush1.msra.mxu0 %v1843
        %1856 = vmatprep.subr.mxu0 0.0
        %1857 = vmatpush1.msra.mxu0 0.0
        %1858 = vmatprep.subr.mxu0 0.0
        %1859 = vmatpush1.msra.mxu0 0.0
        %1860 = vmatprep.subr.mxu0 0.0
        %1861 = vmatpush1.msra.mxu0 0.0
        %1862 = vmatprep.subr.mxu0 0.0
        %1863 = vmatpush1.msra.mxu0 0.0
        %1864 = vmatprep.subr.mxu0 0.0
        %1865 = vmatpush1.msra.mxu0 0.0
        %1866 = vmatprep.subr.mxu0 0.0
        %1867 = vmatpush1.msra.mxu0 0.0
        %1868 = vmatprep.subr.mxu0 0.0
        %1869 = vmatpush1.msra.mxu0 0.0
        %1870 = vmatprep.subr.mxu0 0.0
        %1871 = vmatpush1.msra.mxu0 0.0
        %1872 = vmatprep.subr.mxu0 0.0
        %1873 = vmatpush1.msra.mxu0 0.0
        %1874 = vmatprep.subr.mxu0 0.0
        %1875 = vmatpush1.msra.mxu0 0.0
        %1876 = vmatprep.subr.mxu0 0.0
        %1877 = vmatpush1.msra.mxu0 0.0
        %1878 = vmatprep.subr.mxu0 0.0
        %1879 = vmatpush1.msra.mxu0 0.0
        %1880 = vmatprep.subr.mxu0 0.0
        %1881 = vmatpush1.msra.mxu0 0.0
        %1882 = vmatprep.subr.mxu0 0.0
        %1883 = vmatpush1.msra.mxu0 0.0
        %1884 = vmatprep.subr.mxu0 0.0
        %1885 = vmatpush1.msra.mxu0 0.0
        %1886 = vmatprep.subr.mxu0 0.0
        %1887 = vmatpush1.msra.mxu0 0.0
        %1888 = vmatprep.subr.mxu0 0.0
        %1889 = vmatpush1.msra.mxu0 0.0
        %1890 = vmatprep.subr.mxu0 0.0
        %1891 = vmatpush1.msra.mxu0 0.0
        %1892 = vmatprep.subr.mxu0 0.0
        %1893 = vmatpush1.msra.mxu0 0.0
        %1894 = vmatprep.subr.mxu0 0.0
        %1895 = vmatpush1.msra.mxu0 0.0
        %1896 = vmatprep.subr.mxu0 0.0
        %1897 = vmatpush1.msra.mxu0 0.0
        %1898 = vmatprep.subr.mxu0 0.0
        %1899 = vmatpush1.msra.mxu0 0.0
        %1900 = vmatprep.subr.mxu0 0.0
        %1901 = vmatpush1.msra.mxu0 0.0
        %1902 = vmatprep.subr.mxu0 0.0
        %1903 = vmatpush1.msra.mxu0 0.0
        %1904 = vmatprep.subr.mxu0 0.0
        %1905 = vmatpush1.msra.mxu0 0.0
        %1906 = vmatprep.subr.mxu0 0.0
        %1907 = vmatpush1.msra.mxu0 0.0
        %1908 = vmatprep.subr.mxu0 0.0
        %1909 = vmatpush1.msra.mxu0 0.0
        %1910 = vmatprep.subr.mxu0 0.0
        %1911 = vmatpush1.msra.mxu0 0.0
        %1912 = vmatprep.subr.mxu0 0.0
        %1913 = vmatpush1.msra.mxu0 0.0
        %1914 = vmatprep.subr.mxu0 0.0
        %1915 = vmatpush1.msra.mxu0 0.0
        %1916 = vmatprep.mubr.f32.mxu0 0.0
        %1917 = vmatmul.mubr.f32.gmra.mrb[0].mxu0 %v1847
        %v1918 = vpop.f32.mrb[0].mxu0
        %v1919 = vadd.f32 0.0, %v1918
        %v1920 = vpop.f32.mrb[0].mxu0
        %1921 = vmatprep.mubr.f32.mxu0 0.0
        %1922 = vmatmul.mubr.f32.gmra.mrb[0].mxu0 %v1850
        %v1923 = vpop.f32.mrb[0].mxu0
        %v1924 = vadd.f32 0.0, %v1923
        %v1925 = vpop.f32.mrb[0].mxu0
        %1926 = vdwg.mxu0
        %1927 = vrot.lane.b32.xlu0 %v1321, 104
        %v1928 = vpop.permute.xlu0 %1927
        %1929 = vrot.lane.b32.xlu0 %v1326, 104
        %v1930 = vpop.permute.xlu0 %1929
        %1931 = vrot.lane.b32.xlu0 %v1321, 72
        %v1932 = vpop.permute.xlu0 %1931
        %1933 = vrot.lane.b32.xlu0 %v1326, 72
        %v1934 = vpop.permute.xlu0 %1933
        %v1935 = vsel %vm306, %v1928, 0
        %v1937 = vsel %vm306, %v1930, 0
        %v1939 = vsel %vm306, %v1932, 0
        %v1941 = vsel %vm306, %v1934, 0
        %1943 = vmatprep.subr.mxu0 0.0
        %1944 = vmatpush1.xpose.msra.mxu0 %v1939
        %1945 = vmatprep.subr.mxu0 0.0
        %1946 = vmatpush1.xpose.msra.mxu0 %v1941
        %1947 = vmatprep.subr.mxu0 0.0
        %1948 = vmatpush1.xpose.msra.mxu0 0.0
        %1949 = vmatprep.subr.mxu0 0.0
        %1950 = vmatpush1.xpose.msra.mxu0 0.0
        %1951 = vmatprep.subr.mxu0 0.0
        %1952 = vmatpush1.xpose.msra.mxu0 0.0
        %1953 = vmatprep.subr.mxu0 0.0
        %1954 = vmatpush1.xpose.msra.mxu0 0.0
        %1955 = vmatprep.subr.mxu0 0.0
        %1956 = vmatpush1.xpose.msra.mxu0 0.0
        %1957 = vmatprep.subr.mxu0 0.0
        %1958 = vmatpush1.xpose.msra.mxu0 0.0
        %1959 = vmatprep.subr.mxu0 0.0
        %1960 = vmatpush1.xpose.msra.mxu0 0.0
        %1961 = vmatprep.subr.mxu0 0.0
        %1962 = vmatpush1.xpose.msra.mxu0 0.0
        %1963 = vmatprep.subr.mxu0 0.0
        %1964 = vmatpush1.xpose.msra.mxu0 0.0
        %1965 = vmatprep.subr.mxu0 0.0
        %1966 = vmatpush1.xpose.msra.mxu0 0.0
        %1967 = vmatprep.subr.mxu0 0.0
        %1968 = vmatpush1.xpose.msra.mxu0 0.0
        %1969 = vmatprep.subr.mxu0 0.0
        %1970 = vmatpush1.xpose.msra.mxu0 0.0
        %1971 = vmatprep.subr.mxu0 0.0
        %1972 = vmatpush1.xpose.msra.mxu0 0.0
        %1973 = vmatprep.subr.mxu0 0.0
        %1974 = vmatpush1.xpose.msra.mxu0 0.0
        %1975 = vmatprep.subr.mxu0 0.0
        %1976 = vmatpush1.xpose.msra.mxu0 0.0
        %1977 = vmatprep.subr.mxu0 0.0
        %1978 = vmatpush1.xpose.msra.mxu0 0.0
        %1979 = vmatprep.subr.mxu0 0.0
        %1980 = vmatpush1.xpose.msra.mxu0 0.0
        %1981 = vmatprep.subr.mxu0 0.0
        %1982 = vmatpush1.xpose.msra.mxu0 0.0
        %1983 = vmatprep.subr.mxu0 0.0
        %1984 = vmatpush1.xpose.msra.mxu0 0.0
        %1985 = vmatprep.subr.mxu0 0.0
        %1986 = vmatpush1.xpose.msra.mxu0 0.0
        %1987 = vmatprep.subr.mxu0 0.0
        %1988 = vmatpush1.xpose.msra.mxu0 0.0
        %1989 = vmatprep.subr.mxu0 0.0
        %1990 = vmatpush1.xpose.msra.mxu0 0.0
        %1991 = vmatprep.subr.mxu0 0.0
        %1992 = vmatpush1.xpose.msra.mxu0 0.0
        %1993 = vmatprep.subr.mxu0 0.0
        %1994 = vmatpush1.xpose.msra.mxu0 0.0
        %1995 = vmatprep.subr.mxu0 0.0
        %1996 = vmatpush1.xpose.msra.mxu0 0.0
        %1997 = vmatprep.subr.mxu0 0.0
        %1998 = vmatpush1.xpose.msra.mxu0 0.0
        %1999 = vmatprep.subr.mxu0 0.0
        %2000 = vmatpush1.xpose.msra.mxu0 0.0
        %2001 = vmatprep.subr.mxu0 0.0
        %2002 = vmatpush1.xpose.msra.mxu0 0.0
        %2003 = vmatprep.subr.mxu0 0.0
        %2004 = vmatpush1.xpose.msra.mxu0 0.0
        %2005 = vmatprep.subr.mxu0 0.0
        %2006 = vmatpush1.xpose.msra.mxu0 0.0
        %2007 = vmatprep.mubr.f32.mxu0 0.0
        %2008 = vmatmul.mubr.f32.gmra.mrb[0].mxu0 %v1935
        %v2009 = vpop.f32.mrb[0].mxu0
        %v2010 = vadd.f32 0.0, %v2009
        %v2011 = vpop.f32.mrb[0].mxu0
        %2012 = vmatprep.mubr.f32.mxu0 0.0
        %2013 = vmatmul.mubr.f32.gmra.mrb[0].mxu0 %v1937
        %v2014 = vpop.f32.mrb[0].mxu0
        %v2015 = vadd.f32 0.0, %v2014
        %v2016 = vpop.f32.mrb[0].mxu0
        %2017 = vdwg.mxu0
        %v2018 = vsel %vm390, %v2010, -inf
        %2019 = vmax.xlane.f32.xlu0 %v2018
        %v2020 = vpop.xlane.xlu0 %2019
        %v2021 = vsel %vm390, %v2015, -inf
        %2022 = vmax.xlane.f32.xlu0 %v2021
        %v2023 = vpop.xlane.xlu0 %2022
        %v2024 = vsub.f32 %v2010, %v2020
        %v2025 = vsub.f32 %v2015, %v2023
        %v2026 = vmul.f32 %v2024, 1.442695
        %v2027 = vpow.pop %v2026
        %v2028 = vmul.f32 %v2025, 1.442695
        %v2029 = vpow.pop %v2028
        %v2030 = vsel %vm390, %v2027, 0.0
        %2031 = vadd.xlane.f32.xlu0 %v2030
        %v2032 = vpop.xlane.xlu0 %2031
        %v2033 = vsel %vm390, %v2029, 0.0
        %2034 = vadd.xlane.f32.xlu0 %v2033
        %v2035 = vpop.xlane.xlu0 %2034
        %v2036 = vrcp.pop %v2032
        %v2037 = vrcp.pop %v2035
        %v2038 = vmul.f32 %v2027, %v2036
        %v2039 = vmul.f32 %v2029, %v2037
        %2040 = vrot.lane.b32.xlu0 %v1321, 40
        %v2041 = vpop.permute.xlu0 %2040
        %2042 = vrot.lane.b32.xlu0 %v1326, 40
        %v2043 = vpop.permute.xlu0 %2042
        %v2047 = vsel %vm390, %v2038, 0
        %v2050 = vsel %vm390, %v2039, 0
        %2052 = vmatprep.subr.mxu0 0.0
        %2053 = vmatpush1.msra.mxu0 %v2041
        %2054 = vmatprep.subr.mxu0 0.0
        %2055 = vmatpush1.msra.mxu0 %v2043
        %2056 = vmatprep.subr.mxu0 0.0
        %2057 = vmatpush1.msra.mxu0 0.0
        %2058 = vmatprep.subr.mxu0 0.0
        %2059 = vmatpush1.msra.mxu0 0.0
        %2060 = vmatprep.subr.mxu0 0.0
        %2061 = vmatpush1.msra.mxu0 0.0
        %2062 = vmatprep.subr.mxu0 0.0
        %2063 = vmatpush1.msra.mxu0 0.0
        %2064 = vmatprep.subr.mxu0 0.0
        %2065 = vmatpush1.msra.mxu0 0.0
        %2066 = vmatprep.subr.mxu0 0.0
        %2067 = vmatpush1.msra.mxu0 0.0
        %2068 = vmatprep.subr.mxu0 0.0
        %2069 = vmatpush1.msra.mxu0 0.0
        %2070 = vmatprep.subr.mxu0 0.0
        %2071 = vmatpush1.msra.mxu0 0.0
        %2072 = vmatprep.subr.mxu0 0.0
        %2073 = vmatpush1.msra.mxu0 0.0
        %2074 = vmatprep.subr.mxu0 0.0
        %2075 = vmatpush1.msra.mxu0 0.0
        %2076 = vmatprep.subr.mxu0 0.0
        %2077 = vmatpush1.msra.mxu0 0.0
        %2078 = vmatprep.subr.mxu0 0.0
        %2079 = vmatpush1.msra.mxu0 0.0
        %2080 = vmatprep.subr.mxu0 0.0
        %2081 = vmatpush1.msra.mxu0 0.0
        %2082 = vmatprep.subr.mxu0 0.0
        %2083 = vmatpush1.msra.mxu0 0.0
        %2084 = vmatprep.subr.mxu0 0.0
        %2085 = vmatpush1.msra.mxu0 0.0
        %2086 = vmatprep.subr.mxu0 0.0
        %2087 = vmatpush1.msra.mxu0 0.0
        %2088 = vmatprep.subr.mxu0 0.0
        %2089 = vmatpush1.msra.mxu0 0.0
        %2090 = vmatprep.subr.mxu0 0.0
        %2091 = vmatpush1.msra.mxu0 0.0
        %2092 = vmatprep.subr.mxu0 0.0
        %2093 = vmatpush1.msra.mxu0 0.0
        %2094 = vmatprep.subr.mxu0 0.0
        %2095 = vmatpush1.msra.mxu0 0.0
        %2096 = vmatprep.subr.mxu0 0.0
        %2097 = vmatpush1.msra.mxu0 0.0
        %2098 = vmatprep.subr.mxu0 0.0
        %2099 = vmatpush1.msra.mxu0 0.0
        %2100 = vmatprep.subr.mxu0 0.0
        %2101 = vmatpush1.msra.mxu0 0.0
        %2102 = vmatprep.subr.mxu0 0.0
        %2103 = vmatpush1.msra.mxu0 0.0
        %2104 = vmatprep.subr.mxu0 0.0
        %2105 = vmatpush1.msra.mxu0 0.0
        %2106 = vmatprep.subr.mxu0 0.0
        %2107 = vmatpush1.msra.mxu0 0.0
        %2108 = vmatprep.subr.mxu0 0.0
        %2109 = vmatpush1.msra.mxu0 0.0
        %2110 = vmatprep.subr.mxu0 0.0
        %2111 = vmatpush1.msra.mxu0 0.0
        %2112 = vmatprep.subr.mxu0 0.0
        %2113 = vmatpush1.msra.mxu0 0.0
        %2114 = vmatprep.subr.mxu0 0.0
        %2115 = vmatpush1.msra.mxu0 0.0
        %2116 = vmatprep.mubr.f32.mxu0 0.0
        %2117 = vmatmul.mubr.f32.gmra.mrb[0].mxu0 %v2047
        %v2118 = vpop.f32.mrb[0].mxu0
        %v2119 = vadd.f32 0.0, %v2118
        %v2120 = vpop.f32.mrb[0].mxu0
        %2121 = vmatprep.mubr.f32.mxu0 0.0
        %2122 = vmatmul.mubr.f32.gmra.mrb[0].mxu0 %v2050
        %v2123 = vpop.f32.mrb[0].mxu0
        %v2124 = vadd.f32 0.0, %v2123
        %v2125 = vpop.f32.mrb[0].mxu0
        %2126 = vdwg.mxu0
        %2129 = vrot.lane.b32.xlu0 %v1719, 8
        %v2130 = vpop.permute.xlu0 %2129
        %2131 = vrot.lane.b32.xlu0 %v1724, 8
        %v2132 = vpop.permute.xlu0 %2131
        %2137 = vrot.lane.b32.xlu0 %v1919, 16
        %v2138 = vpop.permute.xlu0 %2137
        %2139 = vrot.lane.b32.xlu0 %v1924, 16
        %v2140 = vpop.permute.xlu0 %2139
        %2145 = vrot.lane.b32.xlu0 %v2119, 24
        %v2146 = vpop.permute.xlu0 %2145
        %2147 = vrot.lane.b32.xlu0 %v2124, 24
        %v2148 = vpop.permute.xlu0 %2147
        %v2151 = vsel %vm306, %v1519, %v2130
        %v2152 = vsel %vm306, %v1524, %v2132
        %v2153 = vsel %vm390, %v2151, %v2138
        %v2154 = vsel %vm390, %v2152, %v2140
        %v2155 = vsel %vm1128, %v2153, %v2146
        %v2156 = vsel %vm1128, %v2154, %v2148
        %v2158 = vsel %vm175, %v2155, 0
        %v2161 = vsel %vm175, %v2156, 0
        %2163 = vmatprep.subr.mxu0 0.0
        %2164 = vmatpush1.msra.mxu0 %v149
        %2165 = vmatprep.subr.mxu0 0.0
        %2166 = vmatpush1.msra.mxu0 %v150
        %2167 = vmatprep.subr.mxu0 0.0
        %2168 = vmatpush1.msra.mxu0 %v151
        %2169 = vmatprep.subr.mxu0 0.0
        %2170 = vmatpush1.msra.mxu0 %v152
        %2171 = vmatprep.subr.mxu0 0.0
        %2172 = vmatpush1.msra.mxu0 0.0
        %2173 = vmatprep.subr.mxu0 0.0
        %2174 = vmatpush1.msra.mxu0 0.0
        %2175 = vmatprep.subr.mxu0 0.0
        %2176 = vmatpush1.msra.mxu0 0.0
        %2177 = vmatprep.subr.mxu0 0.0
        %2178 = vmatpush1.msra.mxu0 0.0
        %2179 = vmatprep.subr.mxu0 0.0
        %2180 = vmatpush1.msra.mxu0 0.0
        %2181 = vmatprep.subr.mxu0 0.0
        %2182 = vmatpush1.msra.mxu0 0.0
        %2183 = vmatprep.subr.mxu0 0.0
        %2184 = vmatpush1.msra.mxu0 0.0
        %2185 = vmatprep.subr.mxu0 0.0
        %2186 = vmatpush1.msra.mxu0 0.0
        %2187 = vmatprep.subr.mxu0 0.0
        %2188 = vmatpush1.msra.mxu0 0.0
        %2189 = vmatprep.subr.mxu0 0.0
        %2190 = vmatpush1.msra.mxu0 0.0
        %2191 = vmatprep.subr.mxu0 0.0
        %2192 = vmatpush1.msra.mxu0 0.0
        %2193 = vmatprep.subr.mxu0 0.0
        %2194 = vmatpush1.msra.mxu0 0.0
        %2195 = vmatprep.subr.mxu0 0.0
        %2196 = vmatpush1.msra.mxu0 0.0
        %2197 = vmatprep.subr.mxu0 0.0
        %2198 = vmatpush1.msra.mxu0 0.0
        %2199 = vmatprep.subr.mxu0 0.0
        %2200 = vmatpush1.msra.mxu0 0.0
        %2201 = vmatprep.subr.mxu0 0.0
        %2202 = vmatpush1.msra.mxu0 0.0
        %2203 = vmatprep.subr.mxu0 0.0
        %2204 = vmatpush1.msra.mxu0 0.0
        %2205 = vmatprep.subr.mxu0 0.0
        %2206 = vmatpush1.msra.mxu0 0.0
        %2207 = vmatprep.subr.mxu0 0.0
        %2208 = vmatpush1.msra.mxu0 0.0
        %2209 = vmatprep.subr.mxu0 0.0
        %2210 = vmatpush1.msra.mxu0 0.0
        %2211 = vmatprep.subr.mxu0 0.0
        %2212 = vmatpush1.msra.mxu0 0.0
        %2213 = vmatprep.subr.mxu0 0.0
        %2214 = vmatpush1.msra.mxu0 0.0
        %2215 = vmatprep.subr.mxu0 0.0
        %2216 = vmatpush1.msra.mxu0 0.0
        %2217 = vmatprep.subr.mxu0 0.0
        %2218 = vmatpush1.msra.mxu0 0.0
        %2219 = vmatprep.subr.mxu0 0.0
        %2220 = vmatpush1.msra.mxu0 0.0
        %2221 = vmatprep.subr.mxu0 0.0
        %2222 = vmatpush1.msra.mxu0 0.0
        %2223 = vmatprep.subr.mxu0 0.0
        %2224 = vmatpush1.msra.mxu0 0.0
        %2225 = vmatprep.subr.mxu0 0.0
        %2226 = vmatpush1.msra.mxu0 0.0
        %2227 = vmatprep.mubr.f32.mxu0 0.0
        %2228 = vmatmul.mubr.f32.gmra.mrb[0].mxu0 %v2158
        %v2229 = vpop.f32.mrb[0].mxu0
        %v2230 = vadd.f32 %v1134, %v2229
        %v2231 = vpop.f32.mrb[0].mxu0
        %2232 = vmatprep.mubr.f32.mxu0 0.0
        %2233 = vmatmul.mubr.f32.gmra.mrb[0].mxu0 %v2161
        %v2234 = vpop.f32.mrb[0].mxu0
        %v2235 = vadd.f32 %v1134, %v2234
        %v2236 = vpop.f32.mrb[0].mxu0
        %2237 = vdwg.mxu0
        %v2238 = vadd.f32 %v1216, %v2230
        %v2239 = vadd.f32 %v1217, %v2235
        %v2240 = vsel %vm175, %v2238, 0.0
        %2241 = vadd.xlane.f32.xlu0 %v2240
        %v2242 = vpop.xlane.xlu0 %2241
        %v2243 = vsel %vm175, %v2239, 0.0
        %2244 = vadd.xlane.f32.xlu0 %v2243
        %v2245 = vpop.xlane.xlu0 %2244
        %v2246 = vmul.f32 %v2242, %v182
        %v2247 = vmul.f32 %v2245, %v182
        %v2248 = vsub.f32 %v2238, %v2246
        %v2249 = vsub.f32 %v2239, %v2247
        %v2250 = vmul.f32 %v2248, %v2248
        %v2251 = vmul.f32 %v2249, %v2249
        %v2252 = vsel %vm175, %v2250, 0.0
        %2253 = vadd.xlane.f32.xlu0 %v2252
        %v2254 = vpop.xlane.xlu0 %2253
        %v2255 = vsel %vm175, %v2251, 0.0
        %2256 = vadd.xlane.f32.xlu0 %v2255
        %v2257 = vpop.xlane.xlu0 %2256
        %v2258 = vmul.f32 %v2254, %v182
        %v2259 = vmul.f32 %v2257, %v182
        %v2260 = vadd.f32 %v2258, 1e-05
        %v2261 = vadd.f32 %v2259, 1e-05
        %v2262 = vrsqrt.pop %v2260
        %v2263 = vrsqrt.pop %v2261
        %v2264 = vmul.f32 %v2248, %v2262
        %v2265 = vmul.f32 %v2249, %v2263
        %v2266 = vmul.f32 %v2264, %v206
        %v2267 = vmul.f32 %v2265, %v206
        %v2268 = vadd.f32 %v2266, %v212
        %v2269 = vadd.f32 %v2267, %v212
        %v2271 = vsel %vm175, %v2268, 0
        %v2274 = vsel %vm175, %v2269, 0
        %2276 = vmatprep.subr.mxu0 0.0
        %2277 = vmatpush1.msra.mxu0 %v145
        %2278 = vmatprep.subr.mxu0 0.0
        %2279 = vmatpush1.msra.mxu0 %v146
        %2280 = vmatprep.subr.mxu0 0.0
        %2281 = vmatpush1.msra.mxu0 %v147
        %2282 = vmatprep.subr.mxu0 0.0
        %2283 = vmatpush1.msra.mxu0 %v148
        %2284 = vmatprep.subr.mxu0 0.0
        %2285 = vmatpush1.msra.mxu0 0.0
        %2286 = vmatprep.subr.mxu0 0.0
        %2287 = vmatpush1.msra.mxu0 0.0
        %2288 = vmatprep.subr.mxu0 0.0
        %2289 = vmatpush1.msra.mxu0 0.0
        %2290 = vmatprep.subr.mxu0 0.0
        %2291 = vmatpush1.msra.mxu0 0.0
        %2292 = vmatprep.subr.mxu0 0.0
        %2293 = vmatpush1.msra.mxu0 0.0
        %2294 = vmatprep.subr.mxu0 0.0
        %2295 = vmatpush1.msra.mxu0 0.0
        %2296 = vmatprep.subr.mxu0 0.0
        %2297 = vmatpush1.msra.mxu0 0.0
        %2298 = vmatprep.subr.mxu0 0.0
        %2299 = vmatpush1.msra.mxu0 0.0
        %2300 = vmatprep.subr.mxu0 0.0
        %2301 = vmatpush1.msra.mxu0 0.0
        %2302 = vmatprep.subr.mxu0 0.0
        %2303 = vmatpush1.msra.mxu0 0.0
        %2304 = vmatprep.subr.mxu0 0.0
        %2305 = vmatpush1.msra.mxu0 0.0
        %2306 = vmatprep.subr.mxu0 0.0
        %2307 = vmatpush1.msra.mxu0 0.0
        %2308 = vmatprep.subr.mxu0 0.0
        %2309 = vmatpush1.msra.mxu0 0.0
        %2310 = vmatprep.subr.mxu0 0.0
        %2311 = vmatpush1.msra.mxu0 0.0
        %2312 = vmatprep.subr.mxu0 0.0
        %2313 = vmatpush1.msra.mxu0 0.0
        %2314 = vmatprep.subr.mxu0 0.0
        %2315 = vmatpush1.msra.mxu0 0.0
        %2316 = vmatprep.subr.mxu0 0.0
        %2317 = vmatpush1.msra.mxu0 0.0
        %2318 = vmatprep.subr.mxu0 0.0
        %2319 = vmatpush1.msra.mxu0 0.0
        %2320 = vmatprep.subr.mxu0 0.0
        %2321 = vmatpush1.msra.mxu0 0.0
        %2322 = vmatprep.subr.mxu0 0.0
        %2323 = vmatpush1.msra.mxu0 0.0
        %2324 = vmatprep.subr.mxu0 0.0
        %2325 = vmatpush1.msra.mxu0 0.0
        %2326 = vmatprep.subr.mxu0 0.0
        %2327 = vmatpush1.msra.mxu0 0.0
        %2328 = vmatprep.subr.mxu0 0.0
        %2329 = vmatpush1.msra.mxu0 0.0
        %2330 = vmatprep.subr.mxu0 0.0
        %2331 = vmatpush1.msra.mxu0 0.0
        %2332 = vmatprep.subr.mxu0 0.0
        %2333 = vmatpush1.msra.mxu0 0.0
        %2334 = vmatprep.subr.mxu0 0.0
        %2335 = vmatpush1.msra.mxu0 0.0
        %2336 = vmatprep.subr.mxu0 0.0
        %2337 = vmatpush1.msra.mxu0 0.0
        %2338 = vmatprep.subr.mxu0 0.0
        %2339 = vmatpush1.msra.mxu0 0.0
        %2340 = vmatprep.mubr.f32.mxu0 0.0
        %2341 = vmatmul.mubr.f32.gmra.mrb[0].mxu0 %v2271
        %v2342 = vpop.f32.mrb[0].mxu0
        %v2343 = vadd.f32 %v218, %v2342
        %v2344 = vpop.f32.mrb[0].mxu0
        %2345 = vmatprep.mubr.f32.mxu0 0.0
        %2346 = vmatmul.mubr.f32.gmra.mrb[0].mxu0 %v2274
        %v2347 = vpop.f32.mrb[0].mxu0
        %v2348 = vadd.f32 %v218, %v2347
        %v2349 = vpop.f32.mrb[0].mxu0
        %2350 = vdwg.mxu0
        %2353 = vrot.lane.b32.xlu0 %v2343, 96
        %v2354 = vpop.permute.xlu0 %2353
        %2355 = vrot.lane.b32.xlu0 %v2348, 96
        %v2356 = vpop.permute.xlu0 %2355
        %v2357 = vsel %vm306, %v2343, 0
        %v2359 = vsel %vm306, %v2348, 0
        %v2361 = vsel %vm306, %v2354, 0
        %v2363 = vsel %vm306, %v2356, 0
        %2365 = vmatprep.subr.mxu0 0.0
        %2366 = vmatpush1.xpose.msra.mxu0 %v2361
        %2367 = vmatprep.subr.mxu0 0.0
        %2368 = vmatpush1.xpose.msra.mxu0 %v2363
        %2369 = vmatprep.subr.mxu0 0.0
        %2370 = vmatpush1.xpose.msra.mxu0 0.0
        %2371 = vmatprep.subr.mxu0 0.0
        %2372 = vmatpush1.xpose.msra.mxu0 0.0
        %2373 = vmatprep.subr.mxu0 0.0
        %2374 = vmatpush1.xpose.msra.mxu0 0.0
        %2375 = vmatprep.subr.mxu0 0.0
        %2376 = vmatpush1.xpose.msra.mxu0 0.0
        %2377 = vmatprep.subr.mxu0 0.0
        %2378 = vmatpush1.xpose.msra.mxu0 0.0
        %2379 = vmatprep.subr.mxu0 0.0
        %2380 = vmatpush1.xpose.msra.mxu0 0.0
        %2381 = vmatprep.subr.mxu0 0.0
        %2382 = vmatpush1.xpose.msra.mxu0 0.0
        %2383 = vmatprep.subr.mxu0 0.0
        %2384 = vmatpush1.xpose.msra.mxu0 0.0
        %2385 = vmatprep.subr.mxu0 0.0
        %2386 = vmatpush1.xpose.msra.mxu0 0.0
        %2387 = vmatprep.subr.mxu0 0.0
        %2388 = vmatpush1.xpose.msra.mxu0 0.0
        %2389 = vmatprep.subr.mxu0 0.0
        %2390 = vmatpush1.xpose.msra.mxu0 0.0
        %2391 = vmatprep.subr.mxu0 0.0
        %2392 = vmatpush1.xpose.msra.mxu0 0.0
        %2393 = vmatprep.subr.mxu0 0.0
        %2394 = vmatpush1.xpose.msra.mxu0 0.0
        %2395 = vmatprep.subr.mxu0 0.0
        %2396 = vmatpush1.xpose.msra.mxu0 0.0
        %2397 = vmatprep.subr.mxu0 0.0
        %2398 = vmatpush1.xpose.msra.mxu0 0.0
        %2399 = vmatprep.subr.mxu0 0.0
        %2400 = vmatpush1.xpose.msra.mxu0 0.0
        %2401 = vmatprep.subr.mxu0 0.0
        %2402 = vmatpush1.xpose.msra.mxu0 0.0
        %2403 = vmatprep.subr.mxu0 0.0
        %2404 = vmatpush1.xpose.msra.mxu0 0.0
        %2405 = vmatprep.subr.mxu0 0.0
        %2406 = vmatpush1.xpose.msra.mxu0 0.0
        %2407 = vmatprep.subr.mxu0 0.0
        %2408 = vmatpush1.xpose.msra.mxu0 0.0
        %2409 = vmatprep.subr.mxu0 0.0
        %2410 = vmatpush1.xpose.msra.mxu0 0.0
        %2411 = vmatprep.subr.mxu0 0.0
        %2412 = vmatpush1.xpose.msra.mxu0 0.0
        %2413 = vmatprep.subr.mxu0 0.0
        %2414 = vmatpush1.xpose.msra.mxu0 0.0
        %2415 = vmatprep.subr.mxu0 0.0
        %2416 = vmatpush1.xpose.msra.mxu0 0.0
        %2417 = vmatprep.subr.mxu0 0.0
        %2418 = vmatpush1.xpose.msra.mxu0 0.0
        %2419 = vmatprep.subr.mxu0 0.0
        %2420 = vmatpush1.xpose.msra.mxu0 0.0
        %2421 = vmatprep.subr.mxu0 0.0
        %2422 = vmatpush1.xpose.msra.mxu0 0.0
        %2423 = vmatprep.subr.mxu0 0.0
        %2424 = vmatpush1.xpose.msra.mxu0 0.0
        %2425 = vmatprep.subr.mxu0 0.0
        %2426 = vmatpush1.xpose.msra.mxu0 0.0
        %2427 = vmatprep.subr.mxu0 0.0
        %2428 = vmatpush1.xpose.msra.mxu0 0.0
        %2429 = vmatprep.mubr.f32.mxu0 0.0
        %2430 = vmatmul.mubr.f32.gmra.mrb[0].mxu0 %v2357
        %v2431 = vpop.f32.mrb[0].mxu0
        %v2432 = vadd.f32 0.0, %v2431
        %v2433 = vpop.f32.mrb[0].mxu0
        %2434 = vmatprep.mubr.f32.mxu0 0.0
        %2435 = vmatmul.mubr.f32.gmra.mrb[0].mxu0 %v2359
        %v2436 = vpop.f32.mrb[0].mxu0
        %v2437 = vadd.f32 0.0, %v2436
        %v2438 = vpop.f32.mrb[0].mxu0
        %2439 = vdwg.mxu0
        %v2440 = vsel %vm390, %v2432, -inf
        %2441 = vmax.xlane.f32.xlu0 %v2440
        %v2442 = vpop.xlane.xlu0 %2441
        %v2443 = vsel %vm390, %v2437, -inf
        %2444 = vmax.xlane.f32.xlu0 %v2443
        %v2445 = vpop.xlane.xlu0 %2444
        %v2446 = vsub.f32 %v2432, %v2442
        %v2447 = vsub.f32 %v2437, %v2445
        %v2448 = vmul.f32 %v2446, 1.442695
        %v2449 = vpow.pop %v2448
        %v2450 = vmul.f32 %v2447, 1.442695
        %v2451 = vpow.pop %v2450
        %v2452 = vsel %vm390, %v2449, 0.0
        %2453 = vadd.xlane.f32.xlu0 %v2452
        %v2454 = vpop.xlane.xlu0 %2453
        %v2455 = vsel %vm390, %v2451, 0.0
        %2456 = vadd.xlane.f32.xlu0 %v2455
        %v2457 = vpop.xlane.xlu0 %2456
        %v2458 = vrcp.pop %v2454
        %v2459 = vrcp.pop %v2457
        %v2460 = vmul.f32 %v2449, %v2458
        %v2461 = vmul.f32 %v2451, %v2459
        %2462 = vrot.lane.b32.xlu0 %v2343, 64
        %v2463 = vpop.permute.xlu0 %2462
        %2464 = vrot.lane.b32.xlu0 %v2348, 64
        %v2465 = vpop.permute.xlu0 %2464
        %v2469 = vsel %vm390, %v2460, 0
        %v2472 = vsel %vm390, %v2461, 0
        %2474 = vmatprep.subr.mxu0 0.0
        %2475 = vmatpush1.msra.mxu0 %v2463
        %2476 = vmatprep.subr.mxu0 0.0
        %2477 = vmatpush1.msra.mxu0 %v2465
        %2478 = vmatprep.subr.mxu0 0.0
        %2479 = vmatpush1.msra.mxu0 0.0
        %2480 = vmatprep.subr.mxu0 0.0
        %2481 = vmatpush1.msra.mxu0 0.0
        %2482 = vmatprep.subr.mxu0 0.0
        %2483 = vmatpush1.msra.mxu0 0.0
        %2484 = vmatprep.subr.mxu0 0.0
        %2485 = vmatpush1.msra.mxu0 0.0
        %2486 = vmatprep.subr.mxu0 0.0
        %2487 = vmatpush1.msra.mxu0 0.0
        %2488 = vmatprep.subr.mxu0 0.0
        %2489 = vmatpush1.msra.mxu0 0.0
        %2490 = vmatprep.subr.mxu0 0.0
        %2491 = vmatpush1.msra.mxu0 0.0
        %2492 = vmatprep.subr.mxu0 0.0
        %2493 = vmatpush1.msra.mxu0 0.0
        %2494 = vmatprep.subr.mxu0 0.0
        %2495 = vmatpush1.msra.mxu0 0.0
        %2496 = vmatprep.subr.mxu0 0.0
        %2497 = vmatpush1.msra.mxu0 0.0
        %2498 = vmatprep.subr.mxu0 0.0
        %2499 = vmatpush1.msra.mxu0 0.0
        %2500 = vmatprep.subr.mxu0 0.0
        %2501 = vmatpush1.msra.mxu0 0.0
        %2502 = vmatprep.subr.mxu0 0.0
        %2503 = vmatpush1.msra.mxu0 0.0
        %2504 = vmatprep.subr.mxu0 0.0
        %2505 = vmatpush1.msra.mxu0 0.0
        %2506 = vmatprep.subr.mxu0 0.0
        %2507 = vmatpush1.msra.mxu0 0.0
        %2508 = vmatprep.subr.mxu0 0.0
        %2509 = vmatpush1.msra.mxu0 0.0
        %2510 = vmatprep.subr.mxu0 0.0
        %2511 = vmatpush1.msra.mxu0 0.0
        %2512 = vmatprep.subr.mxu0 0.0
        %2513 = vmatpush1.msra.mxu0 0.0
        %2514 = vmatprep.subr.mxu0 0.0
        %2515 = vmatpush1.msra.mxu0 0.0
        %2516 = vmatprep.subr.mxu0 0.0
        %2517 = vmatpush1.msra.mxu0 0.0
        %2518 = vmatprep.subr.mxu0 0.0
        %2519 = vmatpush1.msra.mxu0 0.0
        %2520 = vmatprep.subr.mxu0 0.0
        %2521 = vmatpush1.msra.mxu0 0.0
        %2522 = vmatprep.subr.mxu0 0.0
        %2523 = vmatpush1.msra.mxu0 0.0
        %2524 = vmatprep.subr.mxu0 0.0
        %2525 = vmatpush1.msra.mxu0 0.0
        %2526 = vmatprep.subr.mxu0 0.0
        %2527 = vmatpush1.msra.mxu0 0.0
        %2528 = vmatprep.subr.mxu0 0.0
        %2529 = vmatpush1.msra.mxu0 0.0
        %2530 = vmatprep.subr.mxu0 0.0
        %2531 = vmatpush1.msra.mxu0 0.0
        %2532 = vmatprep.subr.mxu0 0.0
        %2533 = vmatpush1.msra.mxu0 0.0
        %2534 = vmatprep.subr.mxu0 0.0
        %2535 = vmatpush1.msra.mxu0 0.0
        %2536 = vmatprep.subr.mxu0 0.0
        %2537 = vmatpush1.msra.mxu0 0.0
        %2538 = vmatprep.mubr.f32.mxu0 0.0
        %2539 = vmatmul.mubr.f32.gmra.mrb[0].mxu0 %v2469
        %v2540 = vpop.f32.mrb[0].mxu0
        %v2541 = vadd.f32 0.0, %v2540
        %v2542 = vpop.f32.mrb[0].mxu0
        %2543 = vmatprep.mubr.f32.mxu0 0.0
        %2544 = vmatmul.mubr.f32.gmra.mrb[0].mxu0 %v2472
        %v2545 = vpop.f32.mrb[0].mxu0
        %v2546 = vadd.f32 0.0, %v2545
        %v2547 = vpop.f32.mrb[0].mxu0
        %2548 = vdwg.mxu0
        %2549 = vrot.lane.b32.xlu0 %v2343, 120
        %v2550 = vpop.permute.xlu0 %2549
        %2551 = vrot.lane.b32.xlu0 %v2348, 120
        %v2552 = vpop.permute.xlu0 %2551
        %2553 = vrot.lane.b32.xlu0 %v2343, 88
        %v2554 = vpop.permute.xlu0 %2553
        %2555 = vrot.lane.b32.xlu0 %v2348, 88
        %v2556 = vpop.permute.xlu0 %2555
        %v2557 = vsel %vm306, %v2550, 0
        %v2559 = vsel %vm306, %v2552, 0
        %v2561 = vsel %vm306, %v2554, 0
        %v2563 = vsel %vm306, %v2556, 0
        %2565 = vmatprep.subr.mxu0 0.0
        %2566 = vmatpush1.xpose.msra.mxu0 %v2561
        %2567 = vmatprep.subr.mxu0 0.0
        %2568 = vmatpush1.xpose.msra.mxu0 %v2563
        %2569 = vmatprep.subr.mxu0 0.0
        %2570 = vmatpush1.xpose.msra.mxu0 0.0
        %2571 = vmatprep.subr.mxu0 0.0
        %2572 = vmatpush1.xpose.msra.mxu0 0.0
        %2573 = vmatprep.subr.mxu0 0.0
        %2574 = vmatpush1.xpose.msra.mxu0 0.0
        %2575 = vmatprep.subr.mxu0 0.0
        %2576 = vmatpush1.xpose.msra.mxu0 0.0
        %2577 = vmatprep.subr.mxu0 0.0
        %2578 = vmatpush1.xpose.msra.mxu0 0.0
        %2579 = vmatprep.subr.mxu0 0.0
        %2580 = vmatpush1.xpose.msra.mxu0 0.0
        %2581 = vmatprep.subr.mxu0 0.0
        %2582 = vmatpush1.xpose.msra.mxu0 0.0
        %2583 = vmatprep.subr.mxu0 0.0
        %2584 = vmatpush1.xpose.msra.mxu0 0.0
        %2585 = vmatprep.subr.mxu0 0.0
        %2586 = vmatpush1.xpose.msra.mxu0 0.0
        %2587 = vmatprep.subr.mxu0 0.0
        %2588 = vmatpush1.xpose.msra.mxu0 0.0
        %2589 = vmatprep.subr.mxu0 0.0
        %2590 = vmatpush1.xpose.msra.mxu0 0.0
        %2591 = vmatprep.subr.mxu0 0.0
        %2592 = vmatpush1.xpose.msra.mxu0 0.0
        %2593 = vmatprep.subr.mxu0 0.0
        %2594 = vmatpush1.xpose.msra.mxu0 0.0
        %2595 = vmatprep.subr.mxu0 0.0
        %2596 = vmatpush1.xpose.msra.mxu0 0.0
        %2597 = vmatprep.subr.mxu0 0.0
        %2598 = vmatpush1.xpose.msra.mxu0 0.0
        %2599 = vmatprep.subr.mxu0 0.0
        %2600 = vmatpush1.xpose.msra.mxu0 0.0
        %2601 = vmatprep.subr.mxu0 0.0
        %2602 = vmatpush1.xpose.msra.mxu0 0.0
        %2603 = vmatprep.subr.mxu0 0.0
        %2604 = vmatpush1.xpose.msra.mxu0 0.0
        %2605 = vmatprep.subr.mxu0 0.0
        %2606 = vmatpush1.xpose.msra.mxu0 0.0
        %2607 = vmatprep.subr.mxu0 0.0
        %2608 = vmatpush1.xpose.msra.mxu0 0.0
        %2609 = vmatprep.subr.mxu0 0.0
        %2610 = vmatpush1.xpose.msra.mxu0 0.0
        %2611 = vmatprep.subr.mxu0 0.0
        %2612 = vmatpush1.xpose.msra.mxu0 0.0
        %2613 = vmatprep.subr.mxu0 0.0
        %2614 = vmatpush1.xpose.msra.mxu0 0.0
        %2615 = vmatprep.subr.mxu0 0.0
        %2616 = vmatpush1.xpose.msra.mxu0 0.0
        %2617 = vmatprep.subr.mxu0 0.0
        %2618 = vmatpush1.xpose.msra.mxu0 0.0
        %2619 = vmatprep.subr.mxu0 0.0
        %2620 = vmatpush1.xpose.msra.mxu0 0.0
        %2621 = vmatprep.subr.mxu0 0.0
        %2622 = vmatpush1.xpose.msra.mxu0 0.0
        %2623 = vmatprep.subr.mxu0 0.0
        %2624 = vmatpush1.xpose.msra.mxu0 0.0
        %2625 = vmatprep.subr.mxu0 0.0
        %2626 = vmatpush1.xpose.msra.mxu0 0.0
        %2627 = vmatprep.subr.mxu0 0.0
        %2628 = vmatpush1.xpose.msra.mxu0 0.0
        %2629 = vmatprep.mubr.f32.mxu0 0.0
        %2630 = vmatmul.mubr.f32.gmra.mrb[0].mxu0 %v2557
        %v2631 = vpop.f32.mrb[0].mxu0
        %v2632 = vadd.f32 0.0, %v2631
        %v2633 = vpop.f32.mrb[0].mxu0
        %2634 = vmatprep.mubr.f32.mxu0 0.0
        %2635 = vmatmul.mubr.f32.gmra.mrb[0].mxu0 %v2559
        %v2636 = vpop.f32.mrb[0].mxu0
        %v2637 = vadd.f32 0.0, %v2636
        %v2638 = vpop.f32.mrb[0].mxu0
        %2639 = vdwg.mxu0
        %v2640 = vsel %vm390, %v2632, -inf
        %2641 = vmax.xlane.f32.xlu0 %v2640
        %v2642 = vpop.xlane.xlu0 %2641
        %v2643 = vsel %vm390, %v2637, -inf
        %2644 = vmax.xlane.f32.xlu0 %v2643
        %v2645 = vpop.xlane.xlu0 %2644
        %v2646 = vsub.f32 %v2632, %v2642
        %v2647 = vsub.f32 %v2637, %v2645
        %v2648 = vmul.f32 %v2646, 1.442695
        %v2649 = vpow.pop %v2648
        %v2650 = vmul.f32 %v2647, 1.442695
        %v2651 = vpow.pop %v2650
        %v2652 = vsel %vm390, %v2649, 0.0
        %2653 = vadd.xlane.f32.xlu0 %v2652
        %v2654 = vpop.xlane.xlu0 %2653
        %v2655 = vsel %vm390, %v2651, 0.0
        %2656 = vadd.xlane.f32.xlu0 %v2655
        %v2657 = vpop.xlane.xlu0 %2656
        %v2658 = vrcp.pop %v2654
        %v2659 = vrcp.pop %v2657
        %v2660 = vmul.f32 %v2649, %v2658
        %v2661 = vmul.f32 %v2651, %v2659
        %2662 = vrot.lane.b32.xlu0 %v2343, 56
        %v2663 = vpop.permute.xlu0 %2662
        %2664 = vrot.lane.b32.xlu0 %v2348, 56
        %v2665 = vpop.permute.xlu0 %2664
        %v2669 = vsel %vm390, %v2660, 0
        %v2672 = vsel %vm390, %v2661, 0
        %2674 = vmatprep.subr.mxu0 0.0
        %2675 = vmatpush1.msra.mxu0 %v2663
        %2676 = vmatprep.subr.mxu0 0.0
        %2677 = vmatpush1.msra.mxu0 %v2665
        %2678 = vmatprep.subr.mxu0 0.0
        %2679 = vmatpush1.msra.mxu0 0.0
        %2680 = vmatprep.subr.mxu0 0.0
        %2681 = vmatpush1.msra.mxu0 0.0
        %2682 = vmatprep.subr.mxu0 0.0
        %2683 = vmatpush1.msra.mxu0 0.0
        %2684 = vmatprep.subr.mxu0 0.0
        %2685 = vmatpush1.msra.mxu0 0.0
        %2686 = vmatprep.subr.mxu0 0.0
        %2687 = vmatpush1.msra.mxu0 0.0
        %2688 = vmatprep.subr.mxu0 0.0
        %2689 = vmatpush1.msra.mxu0 0.0
        %2690 = vmatprep.subr.mxu0 0.0
        %2691 = vmatpush1.msra.mxu0 0.0
        %2692 = vmatprep.subr.mxu0 0.0
        %2693 = vmatpush1.msra.mxu0 0.0
        %2694 = vmatprep.subr.mxu0 0.0
        %2695 = vmatpush1.msra.mxu0 0.0
        %2696 = vmatprep.subr.mxu0 0.0
        %2697 = vmatpush1.msra.mxu0 0.0
        %2698 = vmatprep.subr.mxu0 0.0
        %2699 = vmatpush1.msra.mxu0 0.0
        %2700 = vmatprep.subr.mxu0 0.0
        %2701 = vmatpush1.msra.mxu0 0.0
        %2702 = vmatprep.subr.mxu0 0.0
        %2703 = vmatpush1.msra.mxu0 0.0
        %2704 = vmatprep.subr.mxu0 0.0
        %2705 = vmatpush1.msra.mxu0 0.0
        %2706 = vmatprep.subr.mxu0 0.0
        %2707 = vmatpush1.msra.mxu0 0.0
        %2708 = vmatprep.subr.mxu0 0.0
        %2709 = vmatpush1.msra.mxu0 0.0
        %2710 = vmatprep.subr.mxu0 0.0
        %2711 = vmatpush1.msra.mxu0 0.0
        %2712 = vmatprep.subr.mxu0 0.0
        %2713 = vmatpush1.msra.mxu0 0.0
        %2714 = vmatprep.subr.mxu0 0.0
        %2715 = vmatpush1.msra.mxu0 0.0
        %2716 = vmatprep.subr.mxu0 0.0
        %2717 = vmatpush1.msra.mxu0 0.0
        %2718 = vmatprep.subr.mxu0 0.0
        %2719 = vmatpush1.msra.mxu0 0.0
        %2720 = vmatprep.subr.mxu0 0.0
        %2721 = vmatpush1.msra.mxu0 0.0
        %2722 = vmatprep.subr.mxu0 0.0
        %2723 = vmatpush1.msra.mxu0 0.0
        %2724 = vmatprep.subr.mxu0 0.0
        %2725 = vmatpush1.msra.mxu0 0.0
        %2726 = vmatprep.subr.mxu0 0.0
        %2727 = vmatpush1.msra.mxu0 0.0
        %2728 = vmatprep.subr.mxu0 0.0
        %2729 = vmatpush1.msra.mxu0 0.0
        %2730 = vmatprep.subr.mxu0 0.0
        %2731 = vmatpush1.msra.mxu0 0.0
        %2732 = vmatprep.subr.mxu0 0.0
        %2733 = vmatpush1.msra.mxu0 0.0
        %2734 = vmatprep.subr.mxu0 0.0
        %2735 = vmatpush1.msra.mxu0 0.0
        %2736 = vmatprep.subr.mxu0 0.0
        %2737 = vmatpush1.msra.mxu0 0.0
        %2738 = vmatprep.mubr.f32.mxu0 0.0
        %2739 = vmatmul.mubr.f32.gmra.mrb[0].mxu0 %v2669
        %v2740 = vpop.f32.mrb[0].mxu0
        %v2741 = vadd.f32 0.0, %v2740
        %v2742 = vpop.f32.mrb[0].mxu0
        %2743 = vmatprep.mubr.f32.mxu0 0.0
        %2744 = vmatmul.mubr.f32.gmra.mrb[0].mxu0 %v2672
        %v2745 = vpop.f32.mrb[0].mxu0
        %v2746 = vadd.f32 0.0, %v2745
        %v2747 = vpop.f32.mrb[0].mxu0
        %2748 = vdwg.mxu0
        %2749 = vrot.lane.b32.xlu0 %v2343, 112
        %v2750 = vpop.permute.xlu0 %2749
        %2751 = vrot.lane.b32.xlu0 %v2348, 112
        %v2752 = vpop.permute.xlu0 %2751
        %2753 = vrot.lane.b32.xlu0 %v2343, 80
        %v2754 = vpop.permute.xlu0 %2753
        %2755 = vrot.lane.b32.xlu0 %v2348, 80
        %v2756 = vpop.permute.xlu0 %2755
        %v2757 = vsel %vm306, %v2750, 0
        %v2759 = vsel %vm306, %v2752, 0
        %v2761 = vsel %vm306, %v2754, 0
        %v2763 = vsel %vm306, %v2756, 0
        %2765 = vmatprep.subr.mxu0 0.0
        %2766 = vmatpush1.xpose.msra.mxu0 %v2761
        %2767 = vmatprep.subr.mxu0 0.0
        %2768 = vmatpush1.xpose.msra.mxu0 %v2763
        %2769 = vmatprep.subr.mxu0 0.0
        %2770 = vmatpush1.xpose.msra.mxu0 0.0
        %2771 = vmatprep.subr.mxu0 0.0
        %2772 = vmatpush1.xpose.msra.mxu0 0.0
        %2773 = vmatprep.subr.mxu0 0.0
        %2774 = vmatpush1.xpose.msra.mxu0 0.0
        %2775 = vmatprep.subr.mxu0 0.0
        %2776 = vmatpush1.xpose.msra.mxu0 0.0
        %2777 = vmatprep.subr.mxu0 0.0
        %2778 = vmatpush1.xpose.msra.mxu0 0.0
        %2779 = vmatprep.subr.mxu0 0.0
        %2780 = vmatpush1.xpose.msra.mxu0 0.0
        %2781 = vmatprep.subr.mxu0 0.0
        %2782 = vmatpush1.xpose.msra.mxu0 0.0
        %2783 = vmatprep.subr.mxu0 0.0
        %2784 = vmatpush1.xpose.msra.mxu0 0.0
        %2785 = vmatprep.subr.mxu0 0.0
        %2786 = vmatpush1.xpose.msra.mxu0 0.0
        %2787 = vmatprep.subr.mxu0 0.0
        %2788 = vmatpush1.xpose.msra.mxu0 0.0
        %2789 = vmatprep.subr.mxu0 0.0
        %2790 = vmatpush1.xpose.msra.mxu0 0.0
        %2791 = vmatprep.subr.mxu0 0.0
        %2792 = vmatpush1.xpose.msra.mxu0 0.0
        %2793 = vmatprep.subr.mxu0 0.0
        %2794 = vmatpush1.xpose.msra.mxu0 0.0
        %2795 = vmatprep.subr.mxu0 0.0
        %2796 = vmatpush1.xpose.msra.mxu0 0.0
        %2797 = vmatprep.subr.mxu0 0.0
        %2798 = vmatpush1.xpose.msra.mxu0 0.0
        %2799 = vmatprep.subr.mxu0 0.0
        %2800 = vmatpush1.xpose.msra.mxu0 0.0
        %2801 = vmatprep.subr.mxu0 0.0
        %2802 = vmatpush1.xpose.msra.mxu0 0.0
        %2803 = vmatprep.subr.mxu0 0.0
        %2804 = vmatpush1.xpose.msra.mxu0 0.0
        %2805 = vmatprep.subr.mxu0 0.0
        %2806 = vmatpush1.xpose.msra.mxu0 0.0
        %2807 = vmatprep.subr.mxu0 0.0
        %2808 = vmatpush1.xpose.msra.mxu0 0.0
        %2809 = vmatprep.subr.mxu0 0.0
        %2810 = vmatpush1.xpose.msra.mxu0 0.0
        %2811 = vmatprep.subr.mxu0 0.0
        %2812 = vmatpush1.xpose.msra.mxu0 0.0
        %2813 = vmatprep.subr.mxu0 0.0
        %2814 = vmatpush1.xpose.msra.mxu0 0.0
        %2815 = vmatprep.subr.mxu0 0.0
        %2816 = vmatpush1.xpose.msra.mxu0 0.0
        %2817 = vmatprep.subr.mxu0 0.0
        %2818 = vmatpush1.xpose.msra.mxu0 0.0
        %2819 = vmatprep.subr.mxu0 0.0
        %2820 = vmatpush1.xpose.msra.mxu0 0.0
        %2821 = vmatprep.subr.mxu0 0.0
        %2822 = vmatpush1.xpose.msra.mxu0 0.0
        %2823 = vmatprep.subr.mxu0 0.0
        %2824 = vmatpush1.xpose.msra.mxu0 0.0
        %2825 = vmatprep.subr.mxu0 0.0
        %2826 = vmatpush1.xpose.msra.mxu0 0.0
        %2827 = vmatprep.subr.mxu0 0.0
        %2828 = vmatpush1.xpose.msra.mxu0 0.0
        %2829 = vmatprep.mubr.f32.mxu0 0.0
        %2830 = vmatmul.mubr.f32.gmra.mrb[0].mxu0 %v2757
        %v2831 = vpop.f32.mrb[0].mxu0
        %v2832 = vadd.f32 0.0, %v2831
        %v2833 = vpop.f32.mrb[0].mxu0
        %2834 = vmatprep.mubr.f32.mxu0 0.0
        %2835 = vmatmul.mubr.f32.gmra.mrb[0].mxu0 %v2759
        %v2836 = vpop.f32.mrb[0].mxu0
        %v2837 = vadd.f32 0.0, %v2836
        %v2838 = vpop.f32.mrb[0].mxu0
        %2839 = vdwg.mxu0
        %v2840 = vsel %vm390, %v2832, -inf
        %2841 = vmax.xlane.f32.xlu0 %v2840
        %v2842 = vpop.xlane.xlu0 %2841
        %v2843 = vsel %vm390, %v2837, -inf
        %2844 = vmax.xlane.f32.xlu0 %v2843
        %v2845 = vpop.xlane.xlu0 %2844
        %v2846 = vsub.f32 %v2832, %v2842
        %v2847 = vsub.f32 %v2837, %v2845
        %v2848 = vmul.f32 %v2846, 1.442695
        %v2849 = vpow.pop %v2848
        %v2850 = vmul.f32 %v2847, 1.442695
        %v2851 = vpow.pop %v2850
        %v2852 = vsel %vm390, %v2849, 0.0
        %2853 = vadd.xlane.f32.xlu0 %v2852
        %v2854 = vpop.xlane.xlu0 %2853
        %v2855 = vsel %vm390, %v2851, 0.0
        %2856 = vadd.xlane.f32.xlu0 %v2855
        %v2857 = vpop.xlane.xlu0 %2856
        %v2858 = vrcp.pop %v2854
        %v2859 = vrcp.pop %v2857
        %v2860 = vmul.f32 %v2849, %v2858
        %v2861 = vmul.f32 %v2851, %v2859
        %2862 = vrot.lane.b32.xlu0 %v2343, 48
        %v2863 = vpop.permute.xlu0 %2862
        %2864 = vrot.lane.b32.xlu0 %v2348, 48
        %v2865 = vpop.permute.xlu0 %2864
        %v2869 = vsel %vm390, %v2860, 0
        %v2872 = vsel %vm390, %v2861, 0
        %2874 = vmatprep.subr.mxu0 0.0
        %2875 = vmatpush1.msra.mxu0 %v2863
        %2876 = vmatprep.subr.mxu0 0.0
        %2877 = vmatpush1.msra.mxu0 %v2865
        %2878 = vmatprep.subr.mxu0 0.0
        %2879 = vmatpush1.msra.mxu0 0.0
        %2880 = vmatprep.subr.mxu0 0.0
        %2881 = vmatpush1.msra.mxu0 0.0
        %2882 = vmatprep.subr.mxu0 0.0
        %2883 = vmatpush1.msra.mxu0 0.0
        %2884 = vmatprep.subr.mxu0 0.0
        %2885 = vmatpush1.msra.mxu0 0.0
        %2886 = vmatprep.subr.mxu0 0.0
        %2887 = vmatpush1.msra.mxu0 0.0
        %2888 = vmatprep.subr.mxu0 0.0
        %2889 = vmatpush1.msra.mxu0 0.0
        %2890 = vmatprep.subr.mxu0 0.0
        %2891 = vmatpush1.msra.mxu0 0.0
        %2892 = vmatprep.subr.mxu0 0.0
        %2893 = vmatpush1.msra.mxu0 0.0
        %2894 = vmatprep.subr.mxu0 0.0
        %2895 = vmatpush1.msra.mxu0 0.0
        %2896 = vmatprep.subr.mxu0 0.0
        %2897 = vmatpush1.msra.mxu0 0.0
        %2898 = vmatprep.subr.mxu0 0.0
        %2899 = vmatpush1.msra.mxu0 0.0
        %2900 = vmatprep.subr.mxu0 0.0
        %2901 = vmatpush1.msra.mxu0 0.0
        %2902 = vmatprep.subr.mxu0 0.0
        %2903 = vmatpush1.msra.mxu0 0.0
        %2904 = vmatprep.subr.mxu0 0.0
        %2905 = vmatpush1.msra.mxu0 0.0
        %2906 = vmatprep.subr.mxu0 0.0
        %2907 = vmatpush1.msra.mxu0 0.0
        %2908 = vmatprep.subr.mxu0 0.0
        %2909 = vmatpush1.msra.mxu0 0.0
        %2910 = vmatprep.subr.mxu0 0.0
        %2911 = vmatpush1.msra.mxu0 0.0
        %2912 = vmatprep.subr.mxu0 0.0
        %2913 = vmatpush1.msra.mxu0 0.0
        %2914 = vmatprep.subr.mxu0 0.0
        %2915 = vmatpush1.msra.mxu0 0.0
        %2916 = vmatprep.subr.mxu0 0.0
        %2917 = vmatpush1.msra.mxu0 0.0
        %2918 = vmatprep.subr.mxu0 0.0
        %2919 = vmatpush1.msra.mxu0 0.0
        %2920 = vmatprep.subr.mxu0 0.0
        %2921 = vmatpush1.msra.mxu0 0.0
        %2922 = vmatprep.subr.mxu0 0.0
        %2923 = vmatpush1.msra.mxu0 0.0
        %2924 = vmatprep.subr.mxu0 0.0
        %2925 = vmatpush1.msra.mxu0 0.0
        %2926 = vmatprep.subr.mxu0 0.0
        %2927 = vmatpush1.msra.mxu0 0.0
        %2928 = vmatprep.subr.mxu0 0.0
        %2929 = vmatpush1.msra.mxu0 0.0
        %2930 = vmatprep.subr.mxu0 0.0
        %2931 = vmatpush1.msra.mxu0 0.0
        %2932 = vmatprep.subr.mxu0 0.0
        %2933 = vmatpush1.msra.mxu0 0.0
        %2934 = vmatprep.subr.mxu0 0.0
        %2935 = vmatpush1.msra.mxu0 0.0
        %2936 = vmatprep.subr.mxu0 0.0
        %2937 = vmatpush1.msra.mxu0 0.0
        %2938 = vmatprep.mubr.f32.mxu0 0.0
        %2939 = vmatmul.mubr.f32.gmra.mrb[0].mxu0 %v2869
        %v2940 = vpop.f32.mrb[0].mxu0
        %v2941 = vadd.f32 0.0, %v2940
        %v2942 = vpop.f32.mrb[0].mxu0
        %2943 = vmatprep.mubr.f32.mxu0 0.0
        %2944 = vmatmul.mubr.f32.gmra.mrb[0].mxu0 %v2872
        %v2945 = vpop.f32.mrb[0].mxu0
        %v2946 = vadd.f32 0.0, %v2945
        %v2947 = vpop.f32.mrb[0].mxu0
        %2948 = vdwg.mxu0
        %2949 = vrot.lane.b32.xlu0 %v2343, 104
        %v2950 = vpop.permute.xlu0 %2949
        %2951 = vrot.lane.b32.xlu0 %v2348, 104
        %v2952 = vpop.permute.xlu0 %2951
        %2953 = vrot.lane.b32.xlu0 %v2343, 72
        %v2954 = vpop.permute.xlu0 %2953
        %2955 = vrot.lane.b32.xlu0 %v2348, 72
        %v2956 = vpop.permute.xlu0 %2955
        %v2957 = vsel %vm306, %v2950, 0
        %v2959 = vsel %vm306, %v2952, 0
        %v2961 = vsel %vm306, %v2954, 0
        %v2963 = vsel %vm306, %v2956, 0
        %2965 = vmatprep.subr.mxu0 0.0
        %2966 = vmatpush1.xpose.msra.mxu0 %v2961
        %2967 = vmatprep.subr.mxu0 0.0
        %2968 = vmatpush1.xpose.msra.mxu0 %v2963
        %2969 = vmatprep.subr.mxu0 0.0
        %2970 = vmatpush1.xpose.msra.mxu0 0.0
        %2971 = vmatprep.subr.mxu0 0.0
        %2972 = vmatpush1.xpose.msra.mxu0 0.0
        %2973 = vmatprep.subr.mxu0 0.0
        %2974 = vmatpush1.xpose.msra.mxu0 0.0
        %2975 = vmatprep.subr.mxu0 0.0
        %2976 = vmatpush1.xpose.msra.mxu0 0.0
        %2977 = vmatprep.subr.mxu0 0.0
        %2978 = vmatpush1.xpose.msra.mxu0 0.0
        %2979 = vmatprep.subr.mxu0 0.0
        %2980 = vmatpush1.xpose.msra.mxu0 0.0
        %2981 = vmatprep.subr.mxu0 0.0
        %2982 = vmatpush1.xpose.msra.mxu0 0.0
        %2983 = vmatprep.subr.mxu0 0.0
        %2984 = vmatpush1.xpose.msra.mxu0 0.0
        %2985 = vmatprep.subr.mxu0 0.0
        %2986 = vmatpush1.xpose.msra.mxu0 0.0
        %2987 = vmatprep.subr.mxu0 0.0
        %2988 = vmatpush1.xpose.msra.mxu0 0.0
        %2989 = vmatprep.subr.mxu0 0.0
        %2990 = vmatpush1.xpose.msra.mxu0 0.0
        %2991 = vmatprep.subr.mxu0 0.0
        %2992 = vmatpush1.xpose.msra.mxu0 0.0
        %2993 = vmatprep.subr.mxu0 0.0
        %2994 = vmatpush1.xpose.msra.mxu0 0.0
        %2995 = vmatprep.subr.mxu0 0.0
        %2996 = vmatpush1.xpose.msra.mxu0 0.0
        %2997 = vmatprep.subr.mxu0 0.0
        %2998 = vmatpush1.xpose.msra.mxu0 0.0
        %2999 = vmatprep.subr.mxu0 0.0
        %3000 = vmatpush1.xpose.msra.mxu0 0.0
        %3001 = vmatprep.subr.mxu0 0.0
        %3002 = vmatpush1.xpose.msra.mxu0 0.0
        %3003 = vmatprep.subr.mxu0 0.0
        %3004 = vmatpush1.xpose.msra.mxu0 0.0
        %3005 = vmatprep.subr.mxu0 0.0
        %3006 = vmatpush1.xpose.msra.mxu0 0.0
        %3007 = vmatprep.subr.mxu0 0.0
        %3008 = vmatpush1.xpose.msra.mxu0 0.0
        %3009 = vmatprep.subr.mxu0 0.0
        %3010 = vmatpush1.xpose.msra.mxu0 0.0
        %3011 = vmatprep.subr.mxu0 0.0
        %3012 = vmatpush1.xpose.msra.mxu0 0.0
        %3013 = vmatprep.subr.mxu0 0.0
        %3014 = vmatpush1.xpose.msra.mxu0 0.0
        %3015 = vmatprep.subr.mxu0 0.0
        %3016 = vmatpush1.xpose.msra.mxu0 0.0
        %3017 = vmatprep.subr.mxu0 0.0
        %3018 = vmatpush1.xpose.msra.mxu0 0.0
        %3019 = vmatprep.subr.mxu0 0.0
        %3020 = vmatpush1.xpose.msra.mxu0 0.0
        %3021 = vmatprep.subr.mxu0 0.0
        %3022 = vmatpush1.xpose.msra.mxu0 0.0
        %3023 = vmatprep.subr.mxu0 0.0
        %3024 = vmatpush1.xpose.msra.mxu0 0.0
        %3025 = vmatprep.subr.mxu0 0.0
        %3026 = vmatpush1.xpose.msra.mxu0 0.0
        %3027 = vmatprep.subr.mxu0 0.0
        %3028 = vmatpush1.xpose.msra.mxu0 0.0
        %3029 = vmatprep.mubr.f32.mxu0 0.0
        %3030 = vmatmul.mubr.f32.gmra.mrb[0].mxu0 %v2957
        %v3031 = vpop.f32.mrb[0].mxu0
        %v3032 = vadd.f32 0.0, %v3031
        %v3033 = vpop.f32.mrb[0].mxu0
        %3034 = vmatprep.mubr.f32.mxu0 0.0
        %3035 = vmatmul.mubr.f32.gmra.mrb[0].mxu0 %v2959
        %v3036 = vpop.f32.mrb[0].mxu0
        %v3037 = vadd.f32 0.0, %v3036
        %v3038 = vpop.f32.mrb[0].mxu0
        %3039 = vdwg.mxu0
        %v3040 = vsel %vm390, %v3032, -inf
        %3041 = vmax.xlane.f32.xlu0 %v3040
        %v3042 = vpop.xlane.xlu0 %3041
        %v3043 = vsel %vm390, %v3037, -inf
        %3044 = vmax.xlane.f32.xlu0 %v3043
        %v3045 = vpop.xlane.xlu0 %3044
        %v3046 = vsub.f32 %v3032, %v3042
        %v3047 = vsub.f32 %v3037, %v3045
        %v3048 = vmul.f32 %v3046, 1.442695
        %v3049 = vpow.pop %v3048
        %v3050 = vmul.f32 %v3047, 1.442695
        %v3051 = vpow.pop %v3050
        %v3052 = vsel %vm390, %v3049, 0.0
        %3053 = vadd.xlane.f32.xlu0 %v3052
        %v3054 = vpop.xlane.xlu0 %3053
        %v3055 = vsel %vm390, %v3051, 0.0
        %3056 = vadd.xlane.f32.xlu0 %v3055
        %v3057 = vpop.xlane.xlu0 %3056
        %v3058 = vrcp.pop %v3054
        %v3059 = vrcp.pop %v3057
        %v3060 = vmul.f32 %v3049, %v3058
        %v3061 = vmul.f32 %v3051, %v3059
        %3062 = vrot.lane.b32.xlu0 %v2343, 40
        %v3063 = vpop.permute.xlu0 %3062
        %3064 = vrot.lane.b32.xlu0 %v2348, 40
        %v3065 = vpop.permute.xlu0 %3064
        %v3069 = vsel %vm390, %v3060, 0
        %v3072 = vsel %vm390, %v3061, 0
        %3074 = vmatprep.subr.mxu0 0.0
        %3075 = vmatpush1.msra.mxu0 %v3063
        %3076 = vmatprep.subr.mxu0 0.0
        %3077 = vmatpush1.msra.mxu0 %v3065
        %3078 = vmatprep.subr.mxu0 0.0
        %3079 = vmatpush1.msra.mxu0 0.0
        %3080 = vmatprep.subr.mxu0 0.0
        %3081 = vmatpush1.msra.mxu0 0.0
        %3082 = vmatprep.subr.mxu0 0.0
        %3083 = vmatpush1.msra.mxu0 0.0
        %3084 = vmatprep.subr.mxu0 0.0
        %3085 = vmatpush1.msra.mxu0 0.0
        %3086 = vmatprep.subr.mxu0 0.0
        %3087 = vmatpush1.msra.mxu0 0.0
        %3088 = vmatprep.subr.mxu0 0.0
        %3089 = vmatpush1.msra.mxu0 0.0
        %3090 = vmatprep.subr.mxu0 0.0
        %3091 = vmatpush1.msra.mxu0 0.0
        %3092 = vmatprep.subr.mxu0 0.0
        %3093 = vmatpush1.msra.mxu0 0.0
        %3094 = vmatprep.subr.mxu0 0.0
        %3095 = vmatpush1.msra.mxu0 0.0
        %3096 = vmatprep.subr.mxu0 0.0
        %3097 = vmatpush1.msra.mxu0 0.0
        %3098 = vmatprep.subr.mxu0 0.0
        %3099 = vmatpush1.msra.mxu0 0.0
        %3100 = vmatprep.subr.mxu0 0.0
        %3101 = vmatpush1.msra.mxu0 0.0
        %3102 = vmatprep.subr.mxu0 0.0
        %3103 = vmatpush1.msra.mxu0 0.0
        %3104 = vmatprep.subr.mxu0 0.0
        %3105 = vmatpush1.msra.mxu0 0.0
        %3106 = vmatprep.subr.mxu0 0.0
        %3107 = vmatpush1.msra.mxu0 0.0
        %3108 = vmatprep.subr.mxu0 0.0
        %3109 = vmatpush1.msra.mxu0 0.0
        %3110 = vmatprep.subr.mxu0 0.0
        %3111 = vmatpush1.msra.mxu0 0.0
        %3112 = vmatprep.subr.mxu0 0.0
        %3113 = vmatpush1.msra.mxu0 0.0
        %3114 = vmatprep.subr.mxu0 0.0
        %3115 = vmatpush1.msra.mxu0 0.0
        %3116 = vmatprep.subr.mxu0 0.0
        %3117 = vmatpush1.msra.mxu0 0.0
        %3118 = vmatprep.subr.mxu0 0.0
        %3119 = vmatpush1.msra.mxu0 0.0
        %3120 = vmatprep.subr.mxu0 0.0
        %3121 = vmatpush1.msra.mxu0 0.0
        %3122 = vmatprep.subr.mxu0 0.0
        %3123 = vmatpush1.msra.mxu0 0.0
        %3124 = vmatprep.subr.mxu0 0.0
        %3125 = vmatpush1.msra.mxu0 0.0
        %3126 = vmatprep.subr.mxu0 0.0
        %3127 = vmatpush1.msra.mxu0 0.0
        %3128 = vmatprep.subr.mxu0 0.0
        %3129 = vmatpush1.msra.mxu0 0.0
        %3130 = vmatprep.subr.mxu0 0.0
        %3131 = vmatpush1.msra.mxu0 0.0
        %3132 = vmatprep.subr.mxu0 0.0
        %3133 = vmatpush1.msra.mxu0 0.0
        %3134 = vmatprep.subr.mxu0 0.0
        %3135 = vmatpush1.msra.mxu0 0.0
        %3136 = vmatprep.subr.mxu0 0.0
        %3137 = vmatpush1.msra.mxu0 0.0
        %3138 = vmatprep.mubr.f32.mxu0 0.0
        %3139 = vmatmul.mubr.f32.gmra.mrb[0].mxu0 %v3069
        %v3140 = vpop.f32.mrb[0].mxu0
        %v3141 = vadd.f32 0.0, %v3140
        %v3142 = vpop.f32.mrb[0].mxu0
        %3143 = vmatprep.mubr.f32.mxu0 0.0
        %3144 = vmatmul.mubr.f32.gmra.mrb[0].mxu0 %v3072
        %v3145 = vpop.f32.mrb[0].mxu0
        %v3146 = vadd.f32 0.0, %v3145
        %v3147 = vpop.f32.mrb[0].mxu0
        %3148 = vdwg.mxu0
        %3151 = vrot.lane.b32.xlu0 %v2741, 8
        %v3152 = vpop.permute.xlu0 %3151
        %3153 = vrot.lane.b32.xlu0 %v2746, 8
        %v3154 = vpop.permute.xlu0 %3153
        %3159 = vrot.lane.b32.xlu0 %v2941, 16
        %v3160 = vpop.permute.xlu0 %3159
        %3161 = vrot.lane.b32.xlu0 %v2946, 16
        %v3162 = vpop.permute.xlu0 %3161
        %3167 = vrot.lane.b32.xlu0 %v3141, 24
        %v3168 = vpop.permute.xlu0 %3167
        %3169 = vrot.lane.b32.xlu0 %v3146, 24
        %v3170 = vpop.permute.xlu0 %3169
        %v3173 = vsel %vm306, %v2541, %v3152
        %v3174 = vsel %vm306, %v2546, %v3154
        %v3175 = vsel %vm390, %v3173, %v3160
        %v3176 = vsel %vm390, %v3174, %v3162
        %v3177 = vsel %vm1128, %v3175, %v3168
        %v3178 = vsel %vm1128, %v3176, %v3170
        %v3180 = vsel %vm175, %v3177, 0
        %v3183 = vsel %vm175, %v3178, 0
        %3185 = vmatprep.subr.mxu0 0.0
        %3186 = vmatpush1.msra.mxu0 %v149
        %3187 = vmatprep.subr.mxu0 0.0
        %3188 = vmatpush1.msra.mxu0 %v150
        %3189 = vmatprep.subr.mxu0 0.0
        %3190 = vmatpush1.msra.mxu0 %v151
        %3191 = vmatprep.subr.mxu0 0.0
        %3192 = vmatpush1.msra.mxu0 %v152
        %3193 = vmatprep.subr.mxu0 0.0
        %3194 = vmatpush1.msra.mxu0 0.0
        %3195 = vmatprep.subr.mxu0 0.0
        %3196 = vmatpush1.msra.mxu0 0.0
        %3197 = vmatprep.subr.mxu0 0.0
        %3198 = vmatpush1.msra.mxu0 0.0
        %3199 = vmatprep.subr.mxu0 0.0
        %3200 = vmatpush1.msra.mxu0 0.0
        %3201 = vmatprep.subr.mxu0 0.0
        %3202 = vmatpush1.msra.mxu0 0.0
        %3203 = vmatprep.subr.mxu0 0.0
        %3204 = vmatpush1.msra.mxu0 0.0
        %3205 = vmatprep.subr.mxu0 0.0
        %3206 = vmatpush1.msra.mxu0 0.0
        %3207 = vmatprep.subr.mxu0 0.0
        %3208 = vmatpush1.msra.mxu0 0.0
        %3209 = vmatprep.subr.mxu0 0.0
        %3210 = vmatpush1.msra.mxu0 0.0
        %3211 = vmatprep.subr.mxu0 0.0
        %3212 = vmatpush1.msra.mxu0 0.0
        %3213 = vmatprep.subr.mxu0 0.0
        %3214 = vmatpush1.msra.mxu0 0.0
        %3215 = vmatprep.subr.mxu0 0.0
        %3216 = vmatpush1.msra.mxu0 0.0
        %3217 = vmatprep.subr.mxu0 0.0
        %3218 = vmatpush1.msra.mxu0 0.0
        %3219 = vmatprep.subr.mxu0 0.0
        %3220 = vmatpush1.msra.mxu0 0.0
        %3221 = vmatprep.subr.mxu0 0.0
        %3222 = vmatpush1.msra.mxu0 0.0
        %3223 = vmatprep.subr.mxu0 0.0
        %3224 = vmatpush1.msra.mxu0 0.0
        %3225 = vmatprep.subr.mxu0 0.0
        %3226 = vmatpush1.msra.mxu0 0.0
        %3227 = vmatprep.subr.mxu0 0.0
        %3228 = vmatpush1.msra.mxu0 0.0
        %3229 = vmatprep.subr.mxu0 0.0
        %3230 = vmatpush1.msra.mxu0 0.0
        %3231 = vmatprep.subr.mxu0 0.0
        %3232 = vmatpush1.msra.mxu0 0.0
        %3233 = vmatprep.subr.mxu0 0.0
        %3234 = vmatpush1.msra.mxu0 0.0
        %3235 = vmatprep.subr.mxu0 0.0
        %3236 = vmatpush1.msra.mxu0 0.0
        %3237 = vmatprep.subr.mxu0 0.0
        %3238 = vmatpush1.msra.mxu0 0.0
        %3239 = vmatprep.subr.mxu0 0.0
        %3240 = vmatpush1.msra.mxu0 0.0
        %3241 = vmatprep.subr.mxu0 0.0
        %3242 = vmatpush1.msra.mxu0 0.0
        %3243 = vmatprep.subr.mxu0 0.0
        %3244 = vmatpush1.msra.mxu0 0.0
        %3245 = vmatprep.subr.mxu0 0.0
        %3246 = vmatpush1.msra.mxu0 0.0
        %3247 = vmatprep.subr.mxu0 0.0
        %3248 = vmatpush1.msra.mxu0 0.0
        %3249 = vmatprep.mubr.f32.mxu0 0.0
        %3250 = vmatmul.mubr.f32.gmra.mrb[0].mxu0 %v3180
        %v3251 = vpop.f32.mrb[0].mxu0
        %v3252 = vadd.f32 %v1134, %v3251
        %v3253 = vpop.f32.mrb[0].mxu0
        %3254 = vmatprep.mubr.f32.mxu0 0.0
        %3255 = vmatmul.mubr.f32.gmra.mrb[0].mxu0 %v3183
        %v3256 = vpop.f32.mrb[0].mxu0
        %v3257 = vadd.f32 %v1134, %v3256
        %v3258 = vpop.f32.mrb[0].mxu0
        %3259 = vdwg.mxu0
        %v3260 = vadd.f32 %v2238, %v3252
        %v3261 = vadd.f32 %v2239, %v3257
        %v3262 = vsel %vm175, %v3260, 0.0
        %3263 = vadd.xlane.f32.xlu0 %v3262
        %v3264 = vpop.xlane.xlu0 %3263
        %v3265 = vsel %vm175, %v3261, 0.0
        %3266 = vadd.xlane.f32.xlu0 %v3265
        %v3267 = vpop.xlane.xlu0 %3266
        %v3268 = vmul.f32 %v3264, %v182
        %v3269 = vmul.f32 %v3267, %v182
        %v3270 = vsub.f32 %v3260, %v3268
        %v3271 = vsub.f32 %v3261, %v3269
        %v3272 = vmul.f32 %v3270, %v3270
        %v3273 = vmul.f32 %v3271, %v3271
        %v3274 = vsel %vm175, %v3272, 0.0
        %3275 = vadd.xlane.f32.xlu0 %v3274
        %v3276 = vpop.xlane.xlu0 %3275
        %v3277 = vsel %vm175, %v3273, 0.0
        %3278 = vadd.xlane.f32.xlu0 %v3277
        %v3279 = vpop.xlane.xlu0 %3278
        %v3280 = vmul.f32 %v3276, %v182
        %v3281 = vmul.f32 %v3279, %v182
        %v3282 = vadd.f32 %v3280, 1e-05
        %v3283 = vadd.f32 %v3281, 1e-05
        %v3284 = vrsqrt.pop %v3282
        %v3285 = vrsqrt.pop %v3283
        %v3286 = vmul.f32 %v3270, %v3284
        %v3287 = vmul.f32 %v3271, %v3285
        %v3288 = vlaneseq
        %v3289 = vshrl.u32 %v3288, 7
        %v3290 = vsub.s32 0, %v3289
        %v3291 = vrot.slane %v169, %v3290
        %v3292 = vmul.f32 %v3286, %v3291
        %v3293 = vmul.f32 %v3287, %v3291
        %v3294 = vlaneseq
        %v3295 = vshrl.u32 %v3294, 7
        %v3296 = vsub.s32 0, %v3295
        %v3297 = vrot.slane %v170, %v3296
        %v3298 = vadd.f32 %v3292, %v3297
        %v3299 = vadd.f32 %v3293, %v3297
        %v3300 = vlaneseq
        %v3301 = vshrl.u32 %v3300, 7
        %v3302 = vsub.s32 0, %v3301
        %v3303 = vrot.slane %v171, %v3302
        %v3305 = vsel %vm175, %v3298, 0
        %v3308 = vsel %vm175, %v3299, 0
        %3310 = vmatprep.subr.mxu0 0.0
        %3311 = vmatpush1.msra.mxu0 %v153
        %3312 = vmatprep.subr.mxu0 0.0
        %3313 = vmatpush1.msra.mxu0 %v154
        %3314 = vmatprep.subr.mxu0 0.0
        %3315 = vmatpush1.msra.mxu0 %v155
        %3316 = vmatprep.subr.mxu0 0.0
        %3317 = vmatpush1.msra.mxu0 %v156
        %3318 = vmatprep.subr.mxu0 0.0
        %3319 = vmatpush1.msra.mxu0 0.0
        %3320 = vmatprep.subr.mxu0 0.0
        %3321 = vmatpush1.msra.mxu0 0.0
        %3322 = vmatprep.subr.mxu0 0.0
        %3323 = vmatpush1.msra.mxu0 0.0
        %3324 = vmatprep.subr.mxu0 0.0
        %3325 = vmatpush1.msra.mxu0 0.0
        %3326 = vmatprep.subr.mxu0 0.0
        %3327 = vmatpush1.msra.mxu0 0.0
        %3328 = vmatprep.subr.mxu0 0.0
        %3329 = vmatpush1.msra.mxu0 0.0
        %3330 = vmatprep.subr.mxu0 0.0
        %3331 = vmatpush1.msra.mxu0 0.0
        %3332 = vmatprep.subr.mxu0 0.0
        %3333 = vmatpush1.msra.mxu0 0.0
        %3334 = vmatprep.subr.mxu0 0.0
        %3335 = vmatpush1.msra.mxu0 0.0
        %3336 = vmatprep.subr.mxu0 0.0
        %3337 = vmatpush1.msra.mxu0 0.0
        %3338 = vmatprep.subr.mxu0 0.0
        %3339 = vmatpush1.msra.mxu0 0.0
        %3340 = vmatprep.subr.mxu0 0.0
        %3341 = vmatpush1.msra.mxu0 0.0
        %3342 = vmatprep.subr.mxu0 0.0
        %3343 = vmatpush1.msra.mxu0 0.0
        %3344 = vmatprep.subr.mxu0 0.0
        %3345 = vmatpush1.msra.mxu0 0.0
        %3346 = vmatprep.subr.mxu0 0.0
        %3347 = vmatpush1.msra.mxu0 0.0
        %3348 = vmatprep.subr.mxu0 0.0
        %3349 = vmatpush1.msra.mxu0 0.0
        %3350 = vmatprep.subr.mxu0 0.0
        %3351 = vmatpush1.msra.mxu0 0.0
        %3352 = vmatprep.subr.mxu0 0.0
        %3353 = vmatpush1.msra.mxu0 0.0
        %3354 = vmatprep.subr.mxu0 0.0
        %3355 = vmatpush1.msra.mxu0 0.0
        %3356 = vmatprep.subr.mxu0 0.0
        %3357 = vmatpush1.msra.mxu0 0.0
        %3358 = vmatprep.subr.mxu0 0.0
        %3359 = vmatpush1.msra.mxu0 0.0
        %3360 = vmatprep.subr.mxu0 0.0
        %3361 = vmatpush1.msra.mxu0 0.0
        %3362 = vmatprep.subr.mxu0 0.0
        %3363 = vmatpush1.msra.mxu0 0.0
        %3364 = vmatprep.subr.mxu0 0.0
        %3365 = vmatpush1.msra.mxu0 0.0
        %3366 = vmatprep.subr.mxu0 0.0
        %3367 = vmatpush1.msra.mxu0 0.0
        %3368 = vmatprep.subr.mxu0 0.0
        %3369 = vmatpush1.msra.mxu0 0.0
        %3370 = vmatprep.subr.mxu0 0.0
        %3371 = vmatpush1.msra.mxu0 0.0
        %3372 = vmatprep.subr.mxu0 0.0
        %3373 = vmatpush1.msra.mxu0 0.0
        %3374 = vmatprep.mubr.f32.mxu0 0.0
        %3375 = vmatmul.mubr.f32.gmra.mrb[0].mxu0 %v3305
        %v3376 = vpop.f32.mrb[0].mxu0
        %v3377 = vadd.f32 %v3303, %v3376
        %v3378 = vpop.f32.mrb[0].mxu0
        %3379 = vmatprep.mubr.f32.mxu0 0.0
        %3380 = vmatmul.mubr.f32.gmra.mrb[0].mxu0 %v3308
        %v3381 = vpop.f32.mrb[0].mxu0
        %v3382 = vadd.f32 %v3303, %v3381
        %v3383 = vpop.f32.mrb[0].mxu0
        %3384 = vdwg.mxu0
        %v3385 = vmul.f32 %v3377, 0.5
        %v3386 = vmul.f32 %v3382, 0.5
        %v3387 = vmul.f32 %v3377, 0.044715
        %v3388 = vmul.f32 %v3382, 0.044715
        %v3389 = vmul.f32 %v3387, %v3377
        %v3390 = vmul.f32 %v3388, %v3382
        %v3391 = vmul.f32 %v3389, %v3377
        %v3392 = vmul.f32 %v3390, %v3382
        %v3393 = vadd.f32 %v3377, %v3391
        %v3394 = vadd.f32 %v3382, %v3392
        %v3395 = vmul.f32 %v3393, 0.7978846
        %v3396 = vmul.f32 %v3394, 0.7978846
        %v3397 = vtanh.pop %v3395
        %v3398 = vtanh.pop %v3396
        %v3399 = vadd.f32 %v3397, 1.0
        %v3400 = vadd.f32 %v3398, 1.0
        %v3401 = vmul.f32 %v3385, %v3399
        %v3402 = vmul.f32 %v3386, %v3400
        %v3403 = vlaneseq
        %v3404 = vshrl.u32 %v3403, 7
        %v3405 = vsub.s32 0, %v3404
        %v3406 = vrot.slane %v172, %v3405
        %vm3407 = vcmask 523264
        %v3409 = vsel %vm3407, %v3401, 0
        %v3412 = vsel %vm3407, %v3402, 0
        %3414 = vmatprep.subr.mxu0 0.0
        %3415 = vmatpush1.msra.mxu0 %v157
        %3416 = vmatprep.subr.mxu0 0.0
        %3417 = vmatpush1.msra.mxu0 %v158
        %3418 = vmatprep.subr.mxu0 0.0
        %3419 = vmatpush1.msra.mxu0 %v159
        %3420 = vmatprep.subr.mxu0 0.0
        %3421 = vmatpush1.msra.mxu0 %v160
        %3422 = vmatprep.subr.mxu0 0.0
        %3423 = vmatpush1.msra.mxu0 %v161
        %3424 = vmatprep.subr.mxu0 0.0
        %3425 = vmatpush1.msra.mxu0 %v162
        %3426 = vmatprep.subr.mxu0 0.0
        %3427 = vmatpush1.msra.mxu0 %v163
        %3428 = vmatprep.subr.mxu0 0.0
        %3429 = vmatpush1.msra.mxu0 %v164
        %3430 = vmatprep.subr.mxu0 0.0
        %3431 = vmatpush1.msra.mxu0 0.0
        %3432 = vmatprep.subr.mxu0 0.0
        %3433 = vmatpush1.msra.mxu0 0.0
        %3434 = vmatprep.subr.mxu0 0.0
        %3435 = vmatpush1.msra.mxu0 0.0
        %3436 = vmatprep.subr.mxu0 0.0
        %3437 = vmatpush1.msra.mxu0 0.0
        %3438 = vmatprep.subr.mxu0 0.0
        %3439 = vmatpush1.msra.mxu0 0.0
        %3440 = vmatprep.subr.mxu0 0.0
        %3441 = vmatpush1.msra.mxu0 0.0
        %3442 = vmatprep.subr.mxu0 0.0
        %3443 = vmatpush1.msra.mxu0 0.0
        %3444 = vmatprep.subr.mxu0 0.0
        %3445 = vmatpush1.msra.mxu0 0.0
        %3446 = vmatprep.subr.mxu0 0.0
        %3447 = vmatpush1.msra.mxu0 0.0
        %3448 = vmatprep.subr.mxu0 0.0
        %3449 = vmatpush1.msra.mxu0 0.0
        %3450 = vmatprep.subr.mxu0 0.0
        %3451 = vmatpush1.msra.mxu0 0.0
        %3452 = vmatprep.subr.mxu0 0.0
        %3453 = vmatpush1.msra.mxu0 0.0
        %3454 = vmatprep.subr.mxu0 0.0
        %3455 = vmatpush1.msra.mxu0 0.0
        %3456 = vmatprep.subr.mxu0 0.0
        %3457 = vmatpush1.msra.mxu0 0.0
        %3458 = vmatprep.subr.mxu0 0.0
        %3459 = vmatpush1.msra.mxu0 0.0
        %3460 = vmatprep.subr.mxu0 0.0
        %3461 = vmatpush1.msra.mxu0 0.0
        %3462 = vmatprep.subr.mxu0 0.0
        %3463 = vmatpush1.msra.mxu0 0.0
        %3464 = vmatprep.subr.mxu0 0.0
        %3465 = vmatpush1.msra.mxu0 0.0
        %3466 = vmatprep.subr.mxu0 0.0
        %3467 = vmatpush1.msra.mxu0 0.0
        %3468 = vmatprep.subr.mxu0 0.0
        %3469 = vmatpush1.msra.mxu0 0.0
        %3470 = vmatprep.subr.mxu0 0.0
        %3471 = vmatpush1.msra.mxu0 0.0
        %3472 = vmatprep.subr.mxu0 0.0
        %3473 = vmatpush1.msra.mxu0 0.0
        %3474 = vmatprep.subr.mxu0 0.0
        %3475 = vmatpush1.msra.mxu0 0.0
        %3476 = vmatprep.subr.mxu0 0.0
        %3477 = vmatpush1.msra.mxu0 0.0
        %3478 = vmatprep.mubr.f32.mxu0 0.0
        %3479 = vmatmul.mubr.f32.gmra.mrb[0].mxu0 %v3409
        %v3480 = vpop.f32.mrb[0].mxu0
        %v3481 = vadd.f32 %v3406, %v3480
        %v3482 = vpop.f32.mrb[0].mxu0
        %3483 = vmatprep.mubr.f32.mxu0 0.0
        %3484 = vmatmul.mubr.f32.gmra.mrb[0].mxu0 %v3412
        %v3485 = vpop.f32.mrb[0].mxu0
        %v3486 = vadd.f32 %v3406, %v3485
        %v3487 = vpop.f32.mrb[0].mxu0
        %3488 = vdwg.mxu0
        %v3489 = vadd.f32 %v3260, %v3481
        %v3490 = vadd.f32 %v3261, %v3486
        %3491 = vst.msk [vmem:[%s137] sm:$0xff] %vm175, %v3489
        %3492 = vst.msk [vmem:[%s137 + $0x8] sm:$0xff] %vm175, %v3490
        %s3493 = sand.u32 %s71, 1
        %s3494 = scalar_lea.sflag [#allocation3], %s3493
        %s3495 = sand.u32 %s71, 1
        %s3496 = smul.addr %s3495, 16
        %s3497 = scalar_lea.vmem [#allocation2], %s3496
        // Predicated region
        $region29: #{transformer_block_forward.1} parent=27 // pred_check
          %p3498 = pneg %p81
        $region30: #{transformer_block_forward.1} parent=27 // pred_check_branch
          %3500 = sbr.rel (%p3498) target = $region32
        $region31: #{transformer_block_forward.1} parent=27 // pred_region
          %s3501 = smul.u32 2, %s16
          %s3503 = ssub.s32 256, 256
          %3504 = vsyncadd %s3494, %s3503
          %s3505 = smul.addr %s3501, 128
          %s3506 = scalar_lea.hbm %s2, %s3505
          %s3507 = sshll.u32 %s3497, 4
          %s3508 = int_to_ptr.vmem [resolvable:$true] %s3507
          %3513 = dma.vmem_to_hbm [thread:$0]  %s3508, 256, %s3506, %s3494, 128, 128, 8
        $region32: #{transformer_block_forward.1} parent=27 // pred_fallthru
          _
      $region28: #{transformer_block_forward.1} parent=5 // pred_fallthru
        _
      %p3514 = scmp.le.s32.totalorder 2, %s11
      // Predicated region
      $region33: #{transformer_block_forward.1} parent=5 // pred_check
        %p3515 = pneg %p3514
      $region34: #{transformer_block_forward.1} parent=5 // pred_check_branch
        %3517 = sbr.rel (%p3515) target = $region36
      $region35: #{transformer_block_forward.1} parent=5 // pred_region
        %s3518 = ssub.s32 %s11, 2
        // Predicated region
        $region37: #{transformer_block_forward.1} parent=35 // pred_check
          %p3519 = pneg %p87
        $region38: #{transformer_block_forward.1} parent=35 // pred_check_branch
          %3521 = sbr.rel (%p3519) target = $region40
        $region39: #{transformer_block_forward.1} parent=35 // pred_region
          %s3522 = sand.u32 %s72, 1
          %s3523 = scalar_lea.sflag [#allocation3], %s3522
          %s3524 = sand.u32 %s72, 1
          %s3525 = smul.addr %s3524, 16
          %s3526 = scalar_lea.vmem [#allocation2], %s3525
          %3527 = dma.done %s3523, 256
        $region40: #{transformer_block_forward.1} parent=35 // pred_fallthru
          _
      $region36: #{transformer_block_forward.1} parent=5 // pred_fallthru
        _
    $region6: #{transformer_block_forward.1} parent=1 // loop_footer
      %s15 = sadd.s32 1, %s11
    $region7: #{transformer_block_forward.1} parent=1 // loop_footer_branch
      %10 = sbr.rel target = $region3
    $region8: #{transformer_block_forward.1} parent=1 // loop_exit
      _
    %3528 = vsyncpa [#allocation3], 1
    %s3529 = scalar_lea.sflag [#allocation3], 1
    %3530 = vsyncpa %s3529, 1

</llo_original>
